<compile_context>
chip_gen: v7x
topology: tpu7x:2x2x1
jax: 0.10.0
libtpu: 0.0.40
codegen_flags: <defaults>
</compile_context>

<pallas_src>
import numpy as np
import jax
import jax.numpy as jnp
from jax import lax
from jax.experimental import pallas as pl
from jax.experimental.pallas import tpu as pltpu


# ---------------------------------------------------------------------------
# Pallas kernel: one batch element per grid step, NHWC, all convs on the MXU.
# ---------------------------------------------------------------------------
def _resblock_kernel(x_ref,
                     w1_ref, b1_ref, w2_ref, b2_ref, w3_ref, b3_ref,
                     w4_ref, b4_ref, w5_ref, b5_ref,
                     s1_ref, t1_ref, s2_ref, t2_ref,
                     s3_ref, t3_ref, s4_ref, t4_ref,
                     pool_ref,
                     resB_ref, resA_ref):
    _, H, W, Cin = x_ref.shape
    Cout = w1_ref.shape[1]
    HW = H * W

    def leaky(v):                                # LeakyReLU(negative_slope=0.01)
        return jnp.maximum(v, 0.01 * v)

    def pad_hw(t, p):                            # zero-pad spatial dims of (H,W,C)
        Ht, Wt, Ct = t.shape
        zr = jnp.zeros((p, Wt, Ct), t.dtype)
        t = jnp.concatenate([zr, t, zr], axis=0)
        zc = jnp.zeros((Ht + 2 * p, p, Ct), t.dtype)
        return jnp.concatenate([zc, t, zc], axis=1)

    def conv(t_hwc, w_ref, b_ref, k, dil, pad):
        """'SAME'-style conv: im2col + a single MXU matmul -> (H*W, Cout)."""
        Ct = t_hwc.shape[-1]
        tp = pad_hw(t_hwc, pad)
        taps = []
        for dy in range(k):
            for dx in range(k):
                taps.append(tp[dy * dil:dy * dil + H, dx * dil:dx * dil + W, :])
        cols = jnp.concatenate(taps, axis=-1).reshape(HW, k * k * Ct)
        return (jnp.dot(cols, w_ref[...], preferred_element_type=jnp.float32)
                + b_ref[...])

    x = x_ref[0]                                              # (H, W, Cin)

    # shortcut = LeakyReLU(conv1(x))                          1x1
    shortcut = leaky(jnp.dot(x.reshape(HW, Cin), w1_ref[...],
                             preferred_element_type=jnp.float32) + b1_ref[...])

    # resA1 = bn1(LeakyReLU(conv2(x)))                        3x3, pad 1
    resA1 = leaky(conv(x, w2_ref, b2_ref, 3, 1, 1)) * s1_ref[...] + t1_ref[...]

    # resA2 = bn2(LeakyReLU(conv3(resA1)))                    3x3, dilation 2, pad 2
    resA2 = (leaky(conv(resA1.reshape(H, W, Cout), w3_ref, b3_ref, 3, 2, 2))
             * s2_ref[...] + t2_ref[...])

    # resA3 = bn3(LeakyReLU(conv4(resA2)))                    2x2, dilation 2, pad 1
    resA3 = (leaky(conv(resA2.reshape(H, W, Cout), w4_ref, b4_ref, 2, 2, 1))
             * s3_ref[...] + t3_ref[...])

    # resA = shortcut + bn4(LeakyReLU(conv5(concat)))         1x1 over channel concat
    cat = jnp.concatenate([resA1, resA2, resA3], axis=-1)     # (H*W, 3*Cout)
    resA = (leaky(jnp.dot(cat, w5_ref[...], preferred_element_type=jnp.float32)
                  + b5_ref[...]) * s4_ref[...] + t4_ref[...])
    resA = resA + shortcut                                    # (H*W, Cout)
    resA_ref[0] = resA.reshape(H, W, Cout)

    # resB = AvgPool2d(3x3, stride 2, pad 1, count_include_pad=True)(resA)
    # expressed as one (Hp*Wp, H*W) pooling-matrix matmul on the MXU.
    # TODO(synk): Dropout2d is inference-mode identity here (no RNG channel mask).
    Hp, Wp = resB_ref.shape[1], resB_ref.shape[2]
    resB = jnp.dot(pool_ref[...], resA, preferred_element_type=jnp.float32)
    resB_ref[0] = resB.reshape(Hp, Wp, Cout)


# ---------------------------------------------------------------------------
# Wrapper: layout plumbing (NCHW <-> NHWC), weight matrification, BN folding.
# ---------------------------------------------------------------------------
def _conv_mat(w_oihw):
    # OIHW -> (kh*kw*I, O), row order matches im2col tap order (dy, dx, ci).
    o, i, kh, kw = w_oihw.shape
    return jnp.transpose(w_oihw, (2, 3, 1, 0)).reshape(kh * kw * i, o)


def _bn_fold(gamma, beta, mean, var, eps=1e-5):
    s = gamma / jnp.sqrt(var + eps)
    return s.reshape(1, -1), (beta - mean * s).reshape(1, -1)


def _avgpool_matrix(H, W, k=3, stride=2, pad=1):
    Hp = (H + 2 * pad - k) // stride + 1
    Wp = (W + 2 * pad - k) // stride + 1
    P = np.zeros((Hp * Wp, H * W), np.float32)
    inv = 1.0 / (k * k)                          # count_include_pad=True
    for ph in range(Hp):
        for pw in range(Wp):
            for i in range(k):
                for j in range(k):
                    h = ph * stride - pad + i
                    w = pw * stride - pad + j
                    if 0 <= h < H and 0 <= w < W:
                        P[ph * Wp + pw, h * W + w] = inv
    return P, Hp, Wp


def _const_index_map(nd):
    return lambda n: (0,) * nd


def res_block(x_nchw, params):
    """SalsaNext ResBlock forward (pooling=True, inference). Returns (resB, resA) NCHW."""
    N, Cin, H, W = x_nchw.shape
    Cout = params["b1"].shape[0]

    x = jnp.transpose(x_nchw, (0, 2, 3, 1))                   # NHWC: C on lanes

    w1 = _conv_mat(params["w1"]); w2 = _conv_mat(params["w2"])
    w3 = _conv_mat(params["w3"]); w4 = _conv_mat(params["w4"])
    w5 = _conv_mat(params["w5"])
    bvec = lambda v: v.reshape(1, -1)
    s1, t1 = _bn_fold(*params["bn1"]); s2, t2 = _bn_fold(*params["bn2"])
    s3, t3 = _bn_fold(*params["bn3"]); s4, t4 = _bn_fold(*params["bn4"])

    pool_np, Hp, Wp = _avgpool_matrix(H, W)
    pool = jnp.asarray(pool_np)

    args = (x,
            w1, bvec(params["b1"]), w2, bvec(params["b2"]),
            w3, bvec(params["b3"]), w4, bvec(params["b4"]),
            w5, bvec(params["b5"]),
            s1, t1, s2, t2, s3, t3, s4, t4, pool)

    in_specs = [pl.BlockSpec((1, H, W, Cin), lambda n: (n, 0, 0, 0))]
    in_specs += [pl.BlockSpec(a.shape, _const_index_map(a.ndim)) for a in args[1:]]

    out_shape = (jax.ShapeDtypeStruct((N, Hp, Wp, Cout), jnp.float32),   # resB
                 jax.ShapeDtypeStruct((N, H, W, Cout), jnp.float32))     # resA
    out_specs = (pl.BlockSpec((1, Hp, Wp, Cout), lambda n: (n, 0, 0, 0)),
                 pl.BlockSpec((1, H, W, Cout), lambda n: (n, 0, 0, 0)))

    conv_flops = 2 * H * W * Cout * (Cin + 9 * Cin + 9 * Cout + 4 * Cout + 3 * Cout)
    pool_flops = 2 * Hp * Wp * H * W * Cout
    flops = N * (conv_flops + pool_flops)
    bytes_accessed = 4 * (int(x.size)
                          + sum(int(np.prod(a.shape)) for a in args[1:])
                          + N * H * W * Cout + N * Hp * Wp * Cout)

    resB, resA = pl.pallas_call(
        _resblock_kernel,
        grid=(N,),
        in_specs=in_specs,
        out_specs=out_specs,
        out_shape=out_shape,
        compiler_params=pltpu.CompilerParams(
            dimension_semantics=("parallel",)),                # 2nd TC on v7x
        cost_estimate=pl.CostEstimate(flops=int(flops), transcendentals=0,
                                      bytes_accessed=int(bytes_accessed)),
    )(*args)

    return (jnp.transpose(resB, (0, 3, 1, 2)),
            jnp.transpose(resA, (0, 3, 1, 2)))


# ---------------------------------------------------------------------------
# Parameters + pure-JAX reference (NCHW, lax convolutions) for validation.
# ---------------------------------------------------------------------------
def init_params(key, in_filters, out_filters):
    ks = jax.random.split(key, 14)
    conv = lambda k, o, i, kh, kw: (0.1 * jax.random.normal(k, (o, i, kh, kw))
                                    ).astype(jnp.float32)
    vec = lambda k, c: (0.05 * jax.random.normal(k, (c,))).astype(jnp.float32)

    def bn(k, c):
        k1, k2, k3, k4 = jax.random.split(k, 4)
        gamma = (1.0 + 0.1 * jax.random.normal(k1, (c,))).astype(jnp.float32)
        beta = (0.1 * jax.random.normal(k2, (c,))).astype(jnp.float32)
        mean = (0.1 * jax.random.normal(k3, (c,))).astype(jnp.float32)
        var = (0.5 + 0.2 * jax.random.uniform(k4, (c,))).astype(jnp.float32)
        return (gamma, beta, mean, var)

    return dict(
        w1=conv(ks[0], out_filters, in_filters, 1, 1), b1=vec(ks[1], out_filters),
        w2=conv(ks[2], out_filters, in_filters, 3, 3), b2=vec(ks[3], out_filters),
        w3=conv(ks[4], out_filters, out_filters, 3, 3), b3=vec(ks[5], out_filters),
        w4=conv(ks[6], out_filters, out_filters, 2, 2), b4=vec(ks[7], out_filters),
        w5=conv(ks[8], out_filters, 3 * out_filters, 1, 1), b5=vec(ks[9], out_filters),
        bn1=bn(ks[10], out_filters), bn2=bn(ks[11], out_filters),
        bn3=bn(ks[12], out_filters), bn4=bn(ks[13], out_filters),
    )


def _reference(x, p):
    prec = lax.Precision.HIGHEST

    def conv(v, w, bias, pad=0, dil=1):
        y = lax.conv_general_dilated(v, w, (1, 1), ((pad, pad), (pad, pad)),
                                     rhs_dilation=(dil, dil),
                                     dimension_numbers=("NCHW", "OIHW", "NCHW"),
                                     precision=prec)
        return y + bias.reshape(1, -1, 1, 1)

    leaky = lambda v: jnp.where(v >= 0, v, 0.01 * v)

    def bn(v, stats, eps=1e-5):
        g, bta, m, var = (a.reshape(1, -1, 1, 1) for a in stats)
        return (v - m) / jnp.sqrt(var + eps) * g + bta

    shortcut = leaky(conv(x, p["w1"], p["b1"]))
    resA1 = bn(leaky(conv(x, p["w2"], p["b2"], pad=1)), p["bn1"])
    resA2 = bn(leaky(conv(resA1, p["w3"], p["b3"], pad=2, dil=2)), p["bn2"])
    resA3 = bn(leaky(conv(resA2, p["w4"], p["b4"], pad=1, dil=2)), p["bn3"])
    cat = jnp.concatenate([resA1, resA2, resA3], axis=1)
    resA = bn(leaky(conv(cat, p["w5"], p["b5"])), p["bn4"]) + shortcut
    resB = lax.reduce_window(resA, 0.0, lax.add, (1, 1, 3, 3), (1, 1, 2, 2),
                             ((0, 0), (0, 0), (1, 1), (1, 1))) / 9.0
    return resB, resA


# ---------------------------------------------------------------------------
if __name__ == "__main__":
    key = jax.random.PRNGKey(0)
    N, Cin, Cout, H, W = 2, 4, 8, 16, 16
    kx, kp = jax.random.split(key)

    x = jax.random.normal(kx, (N, Cin, H, W), jnp.float32)
    params = init_params(kp, Cin, Cout)

    resB, resA = res_block(x, params)
    resB = jax.block_until_ready(resB)
    resA = jax.block_until_ready(resA)

    refB, refA = _reference(x, params)
    assert resA.shape == (N, Cout, H, W)
    assert resB.shape == (N, Cout, 8, 8)
    np.testing.assert_allclose(np.asarray(resA), np.asarray(refA), rtol=2e-3, atol=2e-3)
    np.testing.assert_allclose(np.asarray(resB), np.asarray(refB), rtol=2e-3, atol=2e-3)
    print("KERNEL_OK")
</pallas_src>

<mosaic_0001>
module attributes {stable_mosaic.version = 11 : i64} {
  func.func @_resblock_kernel(%arg0: i32, %arg1: memref<1x16x16x4xf32, #tpu.memory_space<vmem>>, %arg2: memref<4x8xf32, #tpu.memory_space<vmem>>, %arg3: memref<1x8xf32, #tpu.memory_space<vmem>>, %arg4: memref<36x8xf32, #tpu.memory_space<vmem>>, %arg5: memref<1x8xf32, #tpu.memory_space<vmem>>, %arg6: memref<72x8xf32, #tpu.memory_space<vmem>>, %arg7: memref<1x8xf32, #tpu.memory_space<vmem>>, %arg8: memref<32x8xf32, #tpu.memory_space<vmem>>, %arg9: memref<1x8xf32, #tpu.memory_space<vmem>>, %arg10: memref<24x8xf32, #tpu.memory_space<vmem>>, %arg11: memref<1x8xf32, #tpu.memory_space<vmem>>, %arg12: memref<1x8xf32, #tpu.memory_space<vmem>>, %arg13: memref<1x8xf32, #tpu.memory_space<vmem>>, %arg14: memref<1x8xf32, #tpu.memory_space<vmem>>, %arg15: memref<1x8xf32, #tpu.memory_space<vmem>>, %arg16: memref<1x8xf32, #tpu.memory_space<vmem>>, %arg17: memref<1x8xf32, #tpu.memory_space<vmem>>, %arg18: memref<1x8xf32, #tpu.memory_space<vmem>>, %arg19: memref<1x8xf32, #tpu.memory_space<vmem>>, %arg20: memref<64x256xf32, #tpu.memory_space<vmem>>, %arg21: memref<1x8x8x8xf32, #tpu.memory_space<vmem>>, %arg22: memref<1x16x16x8xf32, #tpu.memory_space<vmem>>) attributes {dimension_semantics = [#tpu.dimension_semantics<parallel>], iteration_bounds = array<i64: 2>, scalar_prefetch = 0 : i64, scratch_operands = 0 : i64, tpu.core_type = #tpu.core_type<tc>, window_params = [{transform_indices = @transform_0, window_bounds = array<i64: 1, 16, 16, 4>}, {pipeline_mode = #tpu.pipeline_mode<synchronous>, transform_indices = @transform_1, window_bounds = array<i64: 4, 8>}, {pipeline_mode = #tpu.pipeline_mode<synchronous>, transform_indices = @transform_2, window_bounds = array<i64: 1, 8>}, {pipeline_mode = #tpu.pipeline_mode<synchronous>, transform_indices = @transform_3, window_bounds = array<i64: 36, 8>}, {pipeline_mode = #tpu.pipeline_mode<synchronous>, transform_indices = @transform_4, window_bounds = array<i64: 1, 8>}, {pipeline_mode = #tpu.pipeline_mode<synchronous>, transform_indices = @transform_5, window_bounds = array<i64: 72, 8>}, {pipeline_mode = #tpu.pipeline_mode<synchronous>, transform_indices = @transform_6, window_bounds = array<i64: 1, 8>}, {pipeline_mode = #tpu.pipeline_mode<synchronous>, transform_indices = @transform_7, window_bounds = array<i64: 32, 8>}, {pipeline_mode = #tpu.pipeline_mode<synchronous>, transform_indices = @transform_8, window_bounds = array<i64: 1, 8>}, {pipeline_mode = #tpu.pipeline_mode<synchronous>, transform_indices = @transform_9, window_bounds = array<i64: 24, 8>}, {pipeline_mode = #tpu.pipeline_mode<synchronous>, transform_indices = @transform_10, window_bounds = array<i64: 1, 8>}, {pipeline_mode = #tpu.pipeline_mode<synchronous>, transform_indices = @transform_11, window_bounds = array<i64: 1, 8>}, {pipeline_mode = #tpu.pipeline_mode<synchronous>, transform_indices = @transform_12, window_bounds = array<i64: 1, 8>}, {pipeline_mode = #tpu.pipeline_mode<synchronous>, transform_indices = @transform_13, window_bounds = array<i64: 1, 8>}, {pipeline_mode = #tpu.pipeline_mode<synchronous>, transform_indices = @transform_14, window_bounds = array<i64: 1, 8>}, {pipeline_mode = #tpu.pipeline_mode<synchronous>, transform_indices = @transform_15, window_bounds = array<i64: 1, 8>}, {pipeline_mode = #tpu.pipeline_mode<synchronous>, transform_indices = @transform_16, window_bounds = array<i64: 1, 8>}, {pipeline_mode = #tpu.pipeline_mode<synchronous>, transform_indices = @transform_17, window_bounds = array<i64: 1, 8>}, {pipeline_mode = #tpu.pipeline_mode<synchronous>, transform_indices = @transform_18, window_bounds = array<i64: 1, 8>}, {pipeline_mode = #tpu.pipeline_mode<synchronous>, transform_indices = @transform_19, window_bounds = array<i64: 64, 256>}, {transform_indices = @transform_20, window_bounds = array<i64: 1, 8, 8, 8>}, {transform_indices = @transform_21, window_bounds = array<i64: 1, 16, 16, 8>}]} {
    %c0 = arith.constant 0 : index
    %c0_0 = arith.constant 0 : index
    %c0_1 = arith.constant 0 : index
    %c0_2 = arith.constant 0 : index
    %0 = vector.load %arg1[%c0, %c0_0, %c0_1, %c0_2] : memref<1x16x16x4xf32, #tpu.memory_space<vmem>>, vector<1x16x16x4xf32>
    %1 = vector.shape_cast %0 : vector<1x16x16x4xf32> to vector<16x16x4xf32>
    %2 = vector.shape_cast %1 : vector<16x16x4xf32> to vector<256x4xf32>
    %c0_3 = arith.constant 0 : index
    %c0_4 = arith.constant 0 : index
    %3 = vector.load %arg2[%c0_3, %c0_4] : memref<4x8xf32, #tpu.memory_space<vmem>>, vector<4x8xf32>
    %cst = arith.constant dense<0.000000e+00> : vector<256x8xf32>
    %4 = tpu.matmul %2, %3, %cst {dimension_numbers = #tpu.dot_dimension_numbers<[1], [0], [0], [1], [0, 0, 1, 1], [], []>} : vector<256x4xf32>, vector<4x8xf32>, vector<256x8xf32> -> vector<256x8xf32>
    %c0_5 = arith.constant 0 : index
    %c0_6 = arith.constant 0 : index
    %5 = vector.load %arg3[%c0_5, %c0_6] : memref<1x8xf32, #tpu.memory_space<vmem>>, vector<1x8xf32>
    %6 = vector.broadcast %5 : vector<1x8xf32> to vector<256x8xf32>
    %7 = arith.addf %4, %6 : vector<256x8xf32>
    %cst_7 = arith.constant 0.00999999977 : f32
    %8 = vector.broadcast %cst_7 : f32 to vector<256x8xf32>
    %9 = arith.mulf %8, %7 : vector<256x8xf32>
    %10 = arith.maximumf %7, %9 : vector<256x8xf32>
    %cst_8 = arith.constant 0.000000e+00 : f32
    %11 = vector.broadcast %cst_8 : f32 to vector<1x16x4xf32>
    %12 = tpu.concatenate %11, %1, %11 in 0 : vector<1x16x4xf32>, vector<16x16x4xf32>, vector<1x16x4xf32> -> vector<18x16x4xf32>
    %cst_9 = arith.constant 0.000000e+00 : f32
    %13 = vector.broadcast %cst_9 : f32 to vector<18x1x4xf32>
    %14 = tpu.concatenate %13, %12, %13 in 1 : vector<18x1x4xf32>, vector<18x16x4xf32>, vector<18x1x4xf32> -> vector<18x18x4xf32>
    %15 = vector.extract_strided_slice %14 {offsets = [0, 0, 0], sizes = [16, 16, 4], strides = [1, 1, 1]} : vector<18x18x4xf32> to vector<16x16x4xf32>
    %16 = vector.extract_strided_slice %14 {offsets = [0, 1, 0], sizes = [16, 16, 4], strides = [1, 1, 1]} : vector<18x18x4xf32> to vector<16x16x4xf32>
    %17 = vector.extract_strided_slice %14 {offsets = [0, 2, 0], sizes = [16, 16, 4], strides = [1, 1, 1]} : vector<18x18x4xf32> to vector<16x16x4xf32>
    %18 = vector.extract_strided_slice %14 {offsets = [1, 0, 0], sizes = [16, 16, 4], strides = [1, 1, 1]} : vector<18x18x4xf32> to vector<16x16x4xf32>
    %19 = vector.extract_strided_slice %14 {offsets = [1, 1, 0], sizes = [16, 16, 4], strides = [1, 1, 1]} : vector<18x18x4xf32> to vector<16x16x4xf32>
    %20 = vector.extract_strided_slice %14 {offsets = [1, 2, 0], sizes = [16, 16, 4], strides = [1, 1, 1]} : vector<18x18x4xf32> to vector<16x16x4xf32>
    %21 = vector.extract_strided_slice %14 {offsets = [2, 0, 0], sizes = [16, 16, 4], strides = [1, 1, 1]} : vector<18x18x4xf32> to vector<16x16x4xf32>
    %22 = vector.extract_strided_slice %14 {offsets = [2, 1, 0], sizes = [16, 16, 4], strides = [1, 1, 1]} : vector<18x18x4xf32> to vector<16x16x4xf32>
    %23 = vector.extract_strided_slice %14 {offsets = [2, 2, 0], sizes = [16, 16, 4], strides = [1, 1, 1]} : vector<18x18x4xf32> to vector<16x16x4xf32>
    %24 = tpu.concatenate %15, %16, %17, %18, %19, %20, %21, %22, %23 in 2 : vector<16x16x4xf32>, vector<16x16x4xf32>, vector<16x16x4xf32>, vector<16x16x4xf32>, vector<16x16x4xf32>, vector<16x16x4xf32>, vector<16x16x4xf32>, vector<16x16x4xf32>, vector<16x16x4xf32> -> vector<16x16x36xf32>
    %25 = vector.shape_cast %24 : vector<16x16x36xf32> to vector<256x36xf32>
    %c0_10 = arith.constant 0 : index
    %c0_11 = arith.constant 0 : index
    %26 = vector.load %arg4[%c0_10, %c0_11] : memref<36x8xf32, #tpu.memory_space<vmem>>, vector<36x8xf32>
    %cst_12 = arith.constant dense<0.000000e+00> : vector<256x8xf32>
    %27 = tpu.matmul %25, %26, %cst_12 {dimension_numbers = #tpu.dot_dimension_numbers<[1], [0], [0], [1], [0, 0, 1, 1], [], []>} : vector<256x36xf32>, vector<36x8xf32>, vector<256x8xf32> -> vector<256x8xf32>
    %c0_13 = arith.constant 0 : index
    %c0_14 = arith.constant 0 : index
    %28 = vector.load %arg5[%c0_13, %c0_14] : memref<1x8xf32, #tpu.memory_space<vmem>>, vector<1x8xf32>
    %29 = vector.broadcast %28 : vector<1x8xf32> to vector<256x8xf32>
    %30 = arith.addf %27, %29 : vector<256x8xf32>
    %cst_15 = arith.constant 0.00999999977 : f32
    %31 = vector.broadcast %cst_15 : f32 to vector<256x8xf32>
    %32 = arith.mulf %31, %30 : vector<256x8xf32>
    %33 = arith.maximumf %30, %32 : vector<256x8xf32>
    %c0_16 = arith.constant 0 : index
    %c0_17 = arith.constant 0 : index
    %34 = vector.load %arg12[%c0_16, %c0_17] : memref<1x8xf32, #tpu.memory_space<vmem>>, vector<1x8xf32>
    %35 = vector.broadcast %34 : vector<1x8xf32> to vector<256x8xf32>
    %36 = arith.mulf %33, %35 : vector<256x8xf32>
    %c0_18 = arith.constant 0 : index
    %c0_19 = arith.constant 0 : index
    %37 = vector.load %arg13[%c0_18, %c0_19] : memref<1x8xf32, #tpu.memory_space<vmem>>, vector<1x8xf32>
    %38 = vector.broadcast %37 : vector<1x8xf32> to vector<256x8xf32>
    %39 = arith.addf %36, %38 : vector<256x8xf32>
    %40 = vector.shape_cast %39 : vector<256x8xf32> to vector<16x16x8xf32>
    %cst_20 = arith.constant 0.000000e+00 : f32
    %41 = vector.broadcast %cst_20 : f32 to vector<2x16x8xf32>
    %42 = tpu.concatenate %41, %40, %41 in 0 : vector<2x16x8xf32>, vector<16x16x8xf32>, vector<2x16x8xf32> -> vector<20x16x8xf32>
    %cst_21 = arith.constant 0.000000e+00 : f32
    %43 = vector.broadcast %cst_21 : f32 to vector<20x2x8xf32>
    %44 = tpu.concatenate %43, %42, %43 in 1 : vector<20x2x8xf32>, vector<20x16x8xf32>, vector<20x2x8xf32> -> vector<20x20x8xf32>
    %45 = vector.extract_strided_slice %44 {offsets = [0, 0, 0], sizes = [16, 16, 8], strides = [1, 1, 1]} : vector<20x20x8xf32> to vector<16x16x8xf32>
    %46 = vector.extract_strided_slice %44 {offsets = [0, 2, 0], sizes = [16, 16, 8], strides = [1, 1, 1]} : vector<20x20x8xf32> to vector<16x16x8xf32>
    %47 = vector.extract_strided_slice %44 {offsets = [0, 4, 0], sizes = [16, 16, 8], strides = [1, 1, 1]} : vector<20x20x8xf32> to vector<16x16x8xf32>
    %48 = vector.extract_strided_slice %44 {offsets = [2, 0, 0], sizes = [16, 16, 8], strides = [1, 1, 1]} : vector<20x20x8xf32> to vector<16x16x8xf32>
    %49 = vector.extract_strided_slice %44 {offsets = [2, 2, 0], sizes = [16, 16, 8], strides = [1, 1, 1]} : vector<20x20x8xf32> to vector<16x16x8xf32>
    %50 = vector.extract_strided_slice %44 {offsets = [2, 4, 0], sizes = [16, 16, 8], strides = [1, 1, 1]} : vector<20x20x8xf32> to vector<16x16x8xf32>
    %51 = vector.extract_strided_slice %44 {offsets = [4, 0, 0], sizes = [16, 16, 8], strides = [1, 1, 1]} : vector<20x20x8xf32> to vector<16x16x8xf32>
    %52 = vector.extract_strided_slice %44 {offsets = [4, 2, 0], sizes = [16, 16, 8], strides = [1, 1, 1]} : vector<20x20x8xf32> to vector<16x16x8xf32>
    %53 = vector.extract_strided_slice %44 {offsets = [4, 4, 0], sizes = [16, 16, 8], strides = [1, 1, 1]} : vector<20x20x8xf32> to vector<16x16x8xf32>
    %54 = tpu.concatenate %45, %46, %47, %48, %49, %50, %51, %52, %53 in 2 : vector<16x16x8xf32>, vector<16x16x8xf32>, vector<16x16x8xf32>, vector<16x16x8xf32>, vector<16x16x8xf32>, vector<16x16x8xf32>, vector<16x16x8xf32>, vector<16x16x8xf32>, vector<16x16x8xf32> -> vector<16x16x72xf32>
    %55 = vector.shape_cast %54 : vector<16x16x72xf32> to vector<256x72xf32>
    %c0_22 = arith.constant 0 : index
    %c0_23 = arith.constant 0 : index
    %56 = vector.load %arg6[%c0_22, %c0_23] : memref<72x8xf32, #tpu.memory_space<vmem>>, vector<72x8xf32>
    %cst_24 = arith.constant dense<0.000000e+00> : vector<256x8xf32>
    %57 = tpu.matmul %55, %56, %cst_24 {dimension_numbers = #tpu.dot_dimension_numbers<[1], [0], [0], [1], [0, 0, 1, 1], [], []>} : vector<256x72xf32>, vector<72x8xf32>, vector<256x8xf32> -> vector<256x8xf32>
    %c0_25 = arith.constant 0 : index
    %c0_26 = arith.constant 0 : index
    %58 = vector.load %arg7[%c0_25, %c0_26] : memref<1x8xf32, #tpu.memory_space<vmem>>, vector<1x8xf32>
    %59 = vector.broadcast %58 : vector<1x8xf32> to vector<256x8xf32>
    %60 = arith.addf %57, %59 : vector<256x8xf32>
    %cst_27 = arith.constant 0.00999999977 : f32
    %61 = vector.broadcast %cst_27 : f32 to vector<256x8xf32>
    %62 = arith.mulf %61, %60 : vector<256x8xf32>
    %63 = arith.maximumf %60, %62 : vector<256x8xf32>
    %c0_28 = arith.constant 0 : index
    %c0_29 = arith.constant 0 : index
    %64 = vector.load %arg14[%c0_28, %c0_29] : memref<1x8xf32, #tpu.memory_space<vmem>>, vector<1x8xf32>
    %65 = vector.broadcast %64 : vector<1x8xf32> to vector<256x8xf32>
    %66 = arith.mulf %63, %65 : vector<256x8xf32>
    %c0_30 = arith.constant 0 : index
    %c0_31 = arith.constant 0 : index
    %67 = vector.load %arg15[%c0_30, %c0_31] : memref<1x8xf32, #tpu.memory_space<vmem>>, vector<1x8xf32>
    %68 = vector.broadcast %67 : vector<1x8xf32> to vector<256x8xf32>
    %69 = arith.addf %66, %68 : vector<256x8xf32>
    %70 = vector.shape_cast %69 : vector<256x8xf32> to vector<16x16x8xf32>
    %cst_32 = arith.constant 0.000000e+00 : f32
    %71 = vector.broadcast %cst_32 : f32 to vector<1x16x8xf32>
    %72 = tpu.concatenate %71, %70, %71 in 0 : vector<1x16x8xf32>, vector<16x16x8xf32>, vector<1x16x8xf32> -> vector<18x16x8xf32>
    %cst_33 = arith.constant 0.000000e+00 : f32
    %73 = vector.broadcast %cst_33 : f32 to vector<18x1x8xf32>
    %74 = tpu.concatenate %73, %72, %73 in 1 : vector<18x1x8xf32>, vector<18x16x8xf32>, vector<18x1x8xf32> -> vector<18x18x8xf32>
    %75 = vector.extract_strided_slice %74 {offsets = [0, 0, 0], sizes = [16, 16, 8], strides = [1, 1, 1]} : vector<18x18x8xf32> to vector<16x16x8xf32>
    %76 = vector.extract_strided_slice %74 {offsets = [0, 2, 0], sizes = [16, 16, 8], strides = [1, 1, 1]} : vector<18x18x8xf32> to vector<16x16x8xf32>
    %77 = vector.extract_strided_slice %74 {offsets = [2, 0, 0], sizes = [16, 16, 8], strides = [1, 1, 1]} : vector<18x18x8xf32> to vector<16x16x8xf32>
    %78 = vector.extract_strided_slice %74 {offsets = [2, 2, 0], sizes = [16, 16, 8], strides = [1, 1, 1]} : vector<18x18x8xf32> to vector<16x16x8xf32>
    %79 = tpu.concatenate %75, %76, %77, %78 in 2 : vector<16x16x8xf32>, vector<16x16x8xf32>, vector<16x16x8xf32>, vector<16x16x8xf32> -> vector<16x16x32xf32>
    %80 = vector.shape_cast %79 : vector<16x16x32xf32> to vector<256x32xf32>
    %c0_34 = arith.constant 0 : index
    %c0_35 = arith.constant 0 : index
    %81 = vector.load %arg8[%c0_34, %c0_35] : memref<32x8xf32, #tpu.memory_space<vmem>>, vector<32x8xf32>
    %cst_36 = arith.constant dense<0.000000e+00> : vector<256x8xf32>
    %82 = tpu.matmul %80, %81, %cst_36 {dimension_numbers = #tpu.dot_dimension_numbers<[1], [0], [0], [1], [0, 0, 1, 1], [], []>} : vector<256x32xf32>, vector<32x8xf32>, vector<256x8xf32> -> vector<256x8xf32>
    %c0_37 = arith.constant 0 : index
    %c0_38 = arith.constant 0 : index
    %83 = vector.load %arg9[%c0_37, %c0_38] : memref<1x8xf32, #tpu.memory_space<vmem>>, vector<1x8xf32>
    %84 = vector.broadcast %83 : vector<1x8xf32> to vector<256x8xf32>
    %85 = arith.addf %82, %84 : vector<256x8xf32>
    %cst_39 = arith.constant 0.00999999977 : f32
    %86 = vector.broadcast %cst_39 : f32 to vector<256x8xf32>
    %87 = arith.mulf %86, %85 : vector<256x8xf32>
    %88 = arith.maximumf %85, %87 : vector<256x8xf32>
    %c0_40 = arith.constant 0 : index
    %c0_41 = arith.constant 0 : index
    %89 = vector.load %arg16[%c0_40, %c0_41] : memref<1x8xf32, #tpu.memory_space<vmem>>, vector<1x8xf32>
    %90 = vector.broadcast %89 : vector<1x8xf32> to vector<256x8xf32>
    %91 = arith.mulf %88, %90 : vector<256x8xf32>
    %c0_42 = arith.constant 0 : index
    %c0_43 = arith.constant 0 : index
    %92 = vector.load %arg17[%c0_42, %c0_43] : memref<1x8xf32, #tpu.memory_space<vmem>>, vector<1x8xf32>
    %93 = vector.broadcast %92 : vector<1x8xf32> to vector<256x8xf32>
    %94 = arith.addf %91, %93 : vector<256x8xf32>
    %95 = tpu.concatenate %39, %69, %94 in 1 : vector<256x8xf32>, vector<256x8xf32>, vector<256x8xf32> -> vector<256x24xf32>
    %c0_44 = arith.constant 0 : index
    %c0_45 = arith.constant 0 : index
    %96 = vector.load %arg10[%c0_44, %c0_45] : memref<24x8xf32, #tpu.memory_space<vmem>>, vector<24x8xf32>
    %cst_46 = arith.constant dense<0.000000e+00> : vector<256x8xf32>
    %97 = tpu.matmul %95, %96, %cst_46 {dimension_numbers = #tpu.dot_dimension_numbers<[1], [0], [0], [1], [0, 0, 1, 1], [], []>} : vector<256x24xf32>, vector<24x8xf32>, vector<256x8xf32> -> vector<256x8xf32>
    %c0_47 = arith.constant 0 : index
    %c0_48 = arith.constant 0 : index
    %98 = vector.load %arg11[%c0_47, %c0_48] : memref<1x8xf32, #tpu.memory_space<vmem>>, vector<1x8xf32>
    %99 = vector.broadcast %98 : vector<1x8xf32> to vector<256x8xf32>
    %100 = arith.addf %97, %99 : vector<256x8xf32>
    %cst_49 = arith.constant 0.00999999977 : f32
    %101 = vector.broadcast %cst_49 : f32 to vector<256x8xf32>
    %102 = arith.mulf %101, %100 : vector<256x8xf32>
    %103 = arith.maximumf %100, %102 : vector<256x8xf32>
    %c0_50 = arith.constant 0 : index
    %c0_51 = arith.constant 0 : index
    %104 = vector.load %arg18[%c0_50, %c0_51] : memref<1x8xf32, #tpu.memory_space<vmem>>, vector<1x8xf32>
    %105 = vector.broadcast %104 : vector<1x8xf32> to vector<256x8xf32>
    %106 = arith.mulf %103, %105 : vector<256x8xf32>
    %c0_52 = arith.constant 0 : index
    %c0_53 = arith.constant 0 : index
    %107 = vector.load %arg19[%c0_52, %c0_53] : memref<1x8xf32, #tpu.memory_space<vmem>>, vector<1x8xf32>
    %108 = vector.broadcast %107 : vector<1x8xf32> to vector<256x8xf32>
    %109 = arith.addf %106, %108 : vector<256x8xf32>
    %110 = arith.addf %109, %10 : vector<256x8xf32>
    %111 = vector.shape_cast %110 : vector<256x8xf32> to vector<16x16x8xf32>
    %c0_54 = arith.constant 0 : index
    %c0_55 = arith.constant 0 : index
    %c0_56 = arith.constant 0 : index
    %c0_57 = arith.constant 0 : index
    %112 = vector.load %arg22[%c0_54, %c0_55, %c0_56, %c0_57] : memref<1x16x16x8xf32, #tpu.memory_space<vmem>>, vector<1x16x16x8xf32>
    %113 = vector.shape_cast %112 : vector<1x16x16x8xf32> to vector<16x16x8xf32>
    %114 = vector.shape_cast %111 : vector<16x16x8xf32> to vector<1x16x16x8xf32>
    tpu.vector_store %arg22[%c0_54, %c0_55, %c0_56, %c0_57], %114 {strides = array<i32>} : memref<1x16x16x8xf32, #tpu.memory_space<vmem>>, vector<1x16x16x8xf32>,
    %c0_58 = arith.constant 0 : index
    %c0_59 = arith.constant 0 : index
    %115 = vector.load %arg20[%c0_58, %c0_59] : memref<64x256xf32, #tpu.memory_space<vmem>>, vector<64x256xf32>
    %cst_60 = arith.constant dense<0.000000e+00> : vector<64x8xf32>
    %116 = tpu.matmul %115, %110, %cst_60 {dimension_numbers = #tpu.dot_dimension_numbers<[1], [0], [0], [1], [0, 0, 1, 1], [], []>} : vector<64x256xf32>, vector<256x8xf32>, vector<64x8xf32> -> vector<64x8xf32>
    %117 = vector.shape_cast %116 : vector<64x8xf32> to vector<8x8x8xf32>
    %c0_61 = arith.constant 0 : index
    %c0_62 = arith.constant 0 : index
    %c0_63 = arith.constant 0 : index
    %c0_64 = arith.constant 0 : index
    %118 = vector.load %arg21[%c0_61, %c0_62, %c0_63, %c0_64] : memref<1x8x8x8xf32, #tpu.memory_space<vmem>>, vector<1x8x8x8xf32>
    %119 = vector.shape_cast %118 : vector<1x8x8x8xf32> to vector<8x8x8xf32>
    %120 = vector.shape_cast %117 : vector<8x8x8xf32> to vector<1x8x8x8xf32>
    tpu.vector_store %arg21[%c0_61, %c0_62, %c0_63, %c0_64], %120 {strides = array<i32>} : memref<1x8x8x8xf32, #tpu.memory_space<vmem>>, vector<1x8x8x8xf32>,
    return
  }
  func.func @transform_0(%arg0: i32) -> (i32, i32, i32, i32) {
    %c0_i32 = arith.constant 0 : i32
    %c0_i32_0 = arith.constant 0 : i32
    %c0_i32_1 = arith.constant 0 : i32
    %c0_i32_2 = arith.constant 0 : i32
    return %arg0, %c0_i32, %c0_i32_0, %c0_i32_1 : i32, i32, i32, i32
  }
  func.func @transform_1(%arg0: i32) -> (i32, i32) {
    %c0_i32 = arith.constant 0 : i32
    %c0_i32_0 = arith.constant 0 : i32
    %c0_i32_1 = arith.constant 0 : i32
    return %c0_i32, %c0_i32_0 : i32, i32
  }
  func.func @transform_2(%arg0: i32) -> (i32, i32) {
    %c0_i32 = arith.constant 0 : i32
    %c0_i32_0 = arith.constant 0 : i32
    %c0_i32_1 = arith.constant 0 : i32
    return %c0_i32, %c0_i32_0 : i32, i32
  }
  func.func @transform_3(%arg0: i32) -> (i32, i32) {
    %c0_i32 = arith.constant 0 : i32
    %c0_i32_0 = arith.constant 0 : i32
    %c0_i32_1 = arith.constant 0 : i32
    return %c0_i32, %c0_i32_0 : i32, i32
  }
  func.func @transform_4(%arg0: i32) -> (i32, i32) {
    %c0_i32 = arith.constant 0 : i32
    %c0_i32_0 = arith.constant 0 : i32
    %c0_i32_1 = arith.constant 0 : i32
    return %c0_i32, %c0_i32_0 : i32, i32
  }
  func.func @transform_5(%arg0: i32) -> (i32, i32) {
    %c0_i32 = arith.constant 0 : i32
    %c0_i32_0 = arith.constant 0 : i32
    %c0_i32_1 = arith.constant 0 : i32
    return %c0_i32, %c0_i32_0 : i32, i32
  }
  func.func @transform_6(%arg0: i32) -> (i32, i32) {
    %c0_i32 = arith.constant 0 : i32
    %c0_i32_0 = arith.constant 0 : i32
    %c0_i32_1 = arith.constant 0 : i32
    return %c0_i32, %c0_i32_0 : i32, i32
  }
  func.func @transform_7(%arg0: i32) -> (i32, i32) {
    %c0_i32 = arith.constant 0 : i32
    %c0_i32_0 = arith.constant 0 : i32
    %c0_i32_1 = arith.constant 0 : i32
    return %c0_i32, %c0_i32_0 : i32, i32
  }
  func.func @transform_8(%arg0: i32) -> (i32, i32) {
    %c0_i32 = arith.constant 0 : i32
    %c0_i32_0 = arith.constant 0 : i32
    %c0_i32_1 = arith.constant 0 : i32
    return %c0_i32, %c0_i32_0 : i32, i32
  }
  func.func @transform_9(%arg0: i32) -> (i32, i32) {
    %c0_i32 = arith.constant 0 : i32
    %c0_i32_0 = arith.constant 0 : i32
    %c0_i32_1 = arith.constant 0 : i32
    return %c0_i32, %c0_i32_0 : i32, i32
  }
  func.func @transform_10(%arg0: i32) -> (i32, i32) {
    %c0_i32 = arith.constant 0 : i32
    %c0_i32_0 = arith.constant 0 : i32
    %c0_i32_1 = arith.constant 0 : i32
    return %c0_i32, %c0_i32_0 : i32, i32
  }
  func.func @transform_11(%arg0: i32) -> (i32, i32) {
    %c0_i32 = arith.constant 0 : i32
    %c0_i32_0 = arith.constant 0 : i32
    %c0_i32_1 = arith.constant 0 : i32
    return %c0_i32, %c0_i32_0 : i32, i32
  }
  func.func @transform_12(%arg0: i32) -> (i32, i32) {
    %c0_i32 = arith.constant 0 : i32
    %c0_i32_0 = arith.constant 0 : i32
    %c0_i32_1 = arith.constant 0 : i32
    return %c0_i32, %c0_i32_0 : i32, i32
  }
  func.func @transform_13(%arg0: i32) -> (i32, i32) {
    %c0_i32 = arith.constant 0 : i32
    %c0_i32_0 = arith.constant 0 : i32
    %c0_i32_1 = arith.constant 0 : i32
    return %c0_i32, %c0_i32_0 : i32, i32
  }
  func.func @transform_14(%arg0: i32) -> (i32, i32) {
    %c0_i32 = arith.constant 0 : i32
    %c0_i32_0 = arith.constant 0 : i32
    %c0_i32_1 = arith.constant 0 : i32
    return %c0_i32, %c0_i32_0 : i32, i32
  }
  func.func @transform_15(%arg0: i32) -> (i32, i32) {
    %c0_i32 = arith.constant 0 : i32
    %c0_i32_0 = arith.constant 0 : i32
    %c0_i32_1 = arith.constant 0 : i32
    return %c0_i32, %c0_i32_0 : i32, i32
  }
  func.func @transform_16(%arg0: i32) -> (i32, i32) {
    %c0_i32 = arith.constant 0 : i32
    %c0_i32_0 = arith.constant 0 : i32
    %c0_i32_1 = arith.constant 0 : i32
    return %c0_i32, %c0_i32_0 : i32, i32
  }
  func.func @transform_17(%arg0: i32) -> (i32, i32) {
    %c0_i32 = arith.constant 0 : i32
    %c0_i32_0 = arith.constant 0 : i32
    %c0_i32_1 = arith.constant 0 : i32
    return %c0_i32, %c0_i32_0 : i32, i32
  }
  func.func @transform_18(%arg0: i32) -> (i32, i32) {
    %c0_i32 = arith.constant 0 : i32
    %c0_i32_0 = arith.constant 0 : i32
    %c0_i32_1 = arith.constant 0 : i32
    return %c0_i32, %c0_i32_0 : i32, i32
  }
  func.func @transform_19(%arg0: i32) -> (i32, i32) {
    %c0_i32 = arith.constant 0 : i32
    %c0_i32_0 = arith.constant 0 : i32
    %c0_i32_1 = arith.constant 0 : i32
    return %c0_i32, %c0_i32_0 : i32, i32
  }
  func.func @transform_20(%arg0: i32) -> (i32, i32, i32, i32) {
    %c0_i32 = arith.constant 0 : i32
    %c0_i32_0 = arith.constant 0 : i32
    %c0_i32_1 = arith.constant 0 : i32
    %c0_i32_2 = arith.constant 0 : i32
    return %arg0, %c0_i32, %c0_i32_0, %c0_i32_1 : i32, i32, i32, i32
  }
  func.func @transform_21(%arg0: i32) -> (i32, i32, i32, i32) {
    %c0_i32 = arith.constant 0 : i32
    %c0_i32_0 = arith.constant 0 : i32
    %c0_i32_1 = arith.constant 0 : i32
    %c0_i32_2 = arith.constant 0 : i32
    return %arg0, %c0_i32, %c0_i32_0, %c0_i32_1 : i32, i32, i32, i32
  }
}

</mosaic_0001>

<llo_original>
// kernel: tpu_custom_call.1
$region0: #{tpu_custom_call.1}
  #allocation0 [shape = 'u32[]', space=smem, size = 0x4, offset = 0x4, fixed_abs, tag = 'smem constant byte address 0x4 - core index']
  #allocation1 [shape = 'u32[144,128]{1,0:T(1,128)}', space=vmem, size = 0x12000, scoped, tag = 'internal scratch']
  %s0 = inlined_call_operand.vmem [shape: f32[2,16,16,4], index: 0, kind: input, shape index: {}]
  %s1 = inlined_call_operand.vmem [shape: f32[4,8], index: 1, kind: input, shape index: {}]
  %s2 = inlined_call_operand.vmem [shape: f32[1,8], index: 2, kind: input, shape index: {}]
  %s3 = inlined_call_operand.vmem [shape: f32[36,8], index: 3, kind: input, shape index: {}]
  %s4 = inlined_call_operand.vmem [shape: f32[1,8], index: 4, kind: input, shape index: {}]
  %s5 = inlined_call_operand.vmem [shape: f32[72,8], index: 5, kind: input, shape index: {}]
  %s6 = inlined_call_operand.vmem [shape: f32[1,8], index: 6, kind: input, shape index: {}]
  %s7 = inlined_call_operand.vmem [shape: f32[32,8], index: 7, kind: input, shape index: {}]
  %s8 = inlined_call_operand.vmem [shape: f32[1,8], index: 8, kind: input, shape index: {}]
  %s9 = inlined_call_operand.vmem [shape: f32[24,8], index: 9, kind: input, shape index: {}]
  %s10 = inlined_call_operand.vmem [shape: f32[1,8], index: 10, kind: input, shape index: {}]
  %s11 = inlined_call_operand.vmem [shape: f32[1,8], index: 11, kind: input, shape index: {}]
  %s12 = inlined_call_operand.vmem [shape: f32[1,8], index: 12, kind: input, shape index: {}]
  %s13 = inlined_call_operand.vmem [shape: f32[1,8], index: 13, kind: input, shape index: {}]
  %s14 = inlined_call_operand.vmem [shape: f32[1,8], index: 14, kind: input, shape index: {}]
  %s15 = inlined_call_operand.vmem [shape: f32[1,8], index: 15, kind: input, shape index: {}]
  %s16 = inlined_call_operand.vmem [shape: f32[1,8], index: 16, kind: input, shape index: {}]
  %s17 = inlined_call_operand.vmem [shape: f32[1,8], index: 17, kind: input, shape index: {}]
  %s18 = inlined_call_operand.vmem [shape: f32[1,8], index: 18, kind: input, shape index: {}]
  %s19 = inlined_call_operand.vmem [shape: f32[64,256], index: 19, kind: input, shape index: {}]
  %s20 = inlined_call_operand.hbm [shape: f32[2,8,8,8], index: 20, kind: output, shape index: {0}]
  %s21 = inlined_call_operand.vmem [shape: f32[2,16,16,8], index: 21, kind: output, shape index: {1}]
  %22 = xla_tuple %s20, %s21
  %s23 = sld [smem:[#allocation0]]
  $region121: #{tpu_custom_call.1} parent=0
    _
  %s25 = ssub.s32 1, %s23
  %s26 = scalar_select 0, %s25, %s23
  $region1: #{tpu_custom_call.1} parent=0
    #allocation2 [shape = 'u8[65536]{0}', space=vmem, size = 0x10000, scoped, tag = 'output window, operand 0']
    #allocation3 [shape = 's32[2]{0}', space=sflag, size = 0x8, scoped, tag = 'scoped memory for tpu_custom_call.1']
    %27 = vsyncpa [#allocation3], 0
    %s28 = scalar_lea.sflag [#allocation3], 1
    %29 = vsyncpa %s28, 0
    loop: start=0, step=1, limit=4
    $region2: #{tpu_custom_call.1} parent=1 // loop_pre_header
      _
    $region3: #{tpu_custom_call.1} parent=1 // loop_header
      %s31 = sphi 0, %s35
      %p32 = scmp.ge.s32.totalorder %s31, 4
      %s41 = sphi 0, %s43
      %s44 = sphi 0, %s41
      %s45 = sphi 0, %s44
      %s61 = sphi 0, %s45
      %s65 = sphi 0, %s65
      %s67 = sphi 0, %s65
      %s68 = sphi 0, %s67
      %s82 = sphi 0, %s68
      %s86 = sphi 0, %s86
      %s88 = sphi 0, %s86
      %s89 = sphi 0, %s88
      %s103 = sphi 0, %s89
      %s107 = sphi 0, %s107
      %s109 = sphi 0, %s107
      %s110 = sphi 0, %s109
      %s124 = sphi 0, %s110
      %s128 = sphi 0, %s128
      %s130 = sphi 0, %s128
      %s131 = sphi 0, %s130
      %s145 = sphi 0, %s131
      %s149 = sphi 0, %s149
      %s151 = sphi 0, %s149
      %s152 = sphi 0, %s151
      %s166 = sphi 0, %s152
      %s170 = sphi 0, %s170
      %s172 = sphi 0, %s170
      %s173 = sphi 0, %s172
      %s187 = sphi 0, %s173
      %s191 = sphi 0, %s191
      %s193 = sphi 0, %s191
      %s194 = sphi 0, %s193
      %s208 = sphi 0, %s194
      %s212 = sphi 0, %s212
      %s214 = sphi 0, %s212
      %s215 = sphi 0, %s214
      %s229 = sphi 0, %s215
      %s233 = sphi 0, %s233
      %s235 = sphi 0, %s233
      %s236 = sphi 0, %s235
      %s250 = sphi 0, %s236
      %s254 = sphi 0, %s254
      %s256 = sphi 0, %s254
      %s257 = sphi 0, %s256
      %s271 = sphi 0, %s257
      %s275 = sphi 0, %s275
      %s277 = sphi 0, %s275
      %s278 = sphi 0, %s277
      %s292 = sphi 0, %s278
      %s296 = sphi 0, %s296
      %s298 = sphi 0, %s296
      %s299 = sphi 0, %s298
      %s313 = sphi 0, %s299
      %s317 = sphi 0, %s317
      %s319 = sphi 0, %s317
      %s320 = sphi 0, %s319
      %s334 = sphi 0, %s320
      %s338 = sphi 0, %s338
      %s340 = sphi 0, %s338
      %s341 = sphi 0, %s340
      %s355 = sphi 0, %s341
      %s359 = sphi 0, %s359
      %s361 = sphi 0, %s359
      %s362 = sphi 0, %s361
      %s376 = sphi 0, %s362
      %s380 = sphi 0, %s380
      %s382 = sphi 0, %s380
      %s383 = sphi 0, %s382
      %s397 = sphi 0, %s383
      %s401 = sphi 0, %s401
      %s403 = sphi 0, %s401
      %s404 = sphi 0, %s403
      %s418 = sphi 0, %s404
      %s422 = sphi 0, %s422
      %s424 = sphi 0, %s422
      %s425 = sphi 0, %s424
      %s439 = sphi 0, %s425
      %s443 = sphi 0, %s443
      %s445 = sphi 0, %s443
      %s446 = sphi 0, %s445
      %s460 = sphi 0, %s446
      %s466 = sphi 0, %s468
      %s469 = sphi 0, %s466
      %s470 = sphi 0, %s469
      %s486 = sphi 0, %s470
      %s492 = sphi 0, %s494
      %s495 = sphi 0, %s492
      %s496 = sphi 0, %s495
      %s512 = sphi 0, %s496
    $region4: #{tpu_custom_call.1} parent=1 // loop_header_branch
      %34 = sbr.rel (%p32) target = $region8
    $region5: #{tpu_custom_call.1} parent=1 // loop_body
      %s36 = ssub.s32 %s31, 1
      %s37 = ssub.s32 %s31, 2
      %s38 = sadd.s32 %s31, 1
      %s39 = ssub.s32 %s31, %s38
      %p40 = scmp.eq.s32.totalorder %s39, 0
      %s42 = sadd.s32 %s41, 1
      %s43 = scalar_select %p40, %s41, %s42
      %p46 = pneg %p40
      %p47 = scmp.eq.s32.totalorder %s31, 1
      %p48 = por %p46, %p47
      %p49 = scmp.ne.s32.totalorder %s41, %s44
      %p50 = scmp.eq.s32.totalorder %s31, 0
      %p51 = por %p49, %p50
      %p52 = scmp.ne.s32.totalorder %s41, %s44
      %p53 = scmp.eq.s32.totalorder %s36, 1
      %p54 = por %p52, %p53
      %p55 = scmp.ne.s32.totalorder %s44, %s45
      %p56 = scmp.eq.s32.totalorder %s36, 0
      %p57 = por %p55, %p56
      %p58 = scmp.ne.s32.totalorder %s44, %s45
      %p59 = scmp.eq.s32.totalorder %s37, 1
      %p60 = por %p58, %p59
      %p62 = scmp.ne.s32.totalorder %s45, %s61
      %p63 = scmp.eq.s32.totalorder %s37, 0
      %p64 = por %p62, %p63
      %s66 = sadd.s32 %s65, 1
      %p69 = scmp.eq.s32.totalorder %s31, 1
      %p70 = scmp.ne.s32.totalorder %s65, %s67
      %p71 = scmp.eq.s32.totalorder %s31, 0
      %p72 = por %p70, %p71
      %p73 = scmp.ne.s32.totalorder %s65, %s67
      %p74 = scmp.eq.s32.totalorder %s36, 1
      %p75 = por %p73, %p74
      %p76 = scmp.ne.s32.totalorder %s67, %s68
      %p77 = scmp.eq.s32.totalorder %s36, 0
      %p78 = por %p76, %p77
      %p79 = scmp.ne.s32.totalorder %s67, %s68
      %p80 = scmp.eq.s32.totalorder %s37, 1
      %p81 = por %p79, %p80
      %p83 = scmp.ne.s32.totalorder %s68, %s82
      %p84 = scmp.eq.s32.totalorder %s37, 0
      %p85 = por %p83, %p84
      %s87 = sadd.s32 %s86, 1
      %p90 = scmp.eq.s32.totalorder %s31, 1
      %p91 = scmp.ne.s32.totalorder %s86, %s88
      %p92 = scmp.eq.s32.totalorder %s31, 0
      %p93 = por %p91, %p92
      %p94 = scmp.ne.s32.totalorder %s86, %s88
      %p95 = scmp.eq.s32.totalorder %s36, 1
      %p96 = por %p94, %p95
      %p97 = scmp.ne.s32.totalorder %s88, %s89
      %p98 = scmp.eq.s32.totalorder %s36, 0
      %p99 = por %p97, %p98
      %p100 = scmp.ne.s32.totalorder %s88, %s89
      %p101 = scmp.eq.s32.totalorder %s37, 1
      %p102 = por %p100, %p101
      %p104 = scmp.ne.s32.totalorder %s89, %s103
      %p105 = scmp.eq.s32.totalorder %s37, 0
      %p106 = por %p104, %p105
      %s108 = sadd.s32 %s107, 1
      %p111 = scmp.eq.s32.totalorder %s31, 1
      %p112 = scmp.ne.s32.totalorder %s107, %s109
      %p113 = scmp.eq.s32.totalorder %s31, 0
      %p114 = por %p112, %p113
      %p115 = scmp.ne.s32.totalorder %s107, %s109
      %p116 = scmp.eq.s32.totalorder %s36, 1
      %p117 = por %p115, %p116
      %p118 = scmp.ne.s32.totalorder %s109, %s110
      %p119 = scmp.eq.s32.totalorder %s36, 0
      %p120 = por %p118, %p119
      %p121 = scmp.ne.s32.totalorder %s109, %s110
      %p122 = scmp.eq.s32.totalorder %s37, 1
      %p123 = por %p121, %p122
      %p125 = scmp.ne.s32.totalorder %s110, %s124
      %p126 = scmp.eq.s32.totalorder %s37, 0
      %p127 = por %p125, %p126
      %s129 = sadd.s32 %s128, 1
      %p132 = scmp.eq.s32.totalorder %s31, 1
      %p133 = scmp.ne.s32.totalorder %s128, %s130
      %p134 = scmp.eq.s32.totalorder %s31, 0
      %p135 = por %p133, %p134
      %p136 = scmp.ne.s32.totalorder %s128, %s130
      %p137 = scmp.eq.s32.totalorder %s36, 1
      %p138 = por %p136, %p137
      %p139 = scmp.ne.s32.totalorder %s130, %s131
      %p140 = scmp.eq.s32.totalorder %s36, 0
      %p141 = por %p139, %p140
      %p142 = scmp.ne.s32.totalorder %s130, %s131
      %p143 = scmp.eq.s32.totalorder %s37, 1
      %p144 = por %p142, %p143
      %p146 = scmp.ne.s32.totalorder %s131, %s145
      %p147 = scmp.eq.s32.totalorder %s37, 0
      %p148 = por %p146, %p147
      %s150 = sadd.s32 %s149, 1
      %p153 = scmp.eq.s32.totalorder %s31, 1
      %p154 = scmp.ne.s32.totalorder %s149, %s151
      %p155 = scmp.eq.s32.totalorder %s31, 0
      %p156 = por %p154, %p155
      %p157 = scmp.ne.s32.totalorder %s149, %s151
      %p158 = scmp.eq.s32.totalorder %s36, 1
      %p159 = por %p157, %p158
      %p160 = scmp.ne.s32.totalorder %s151, %s152
      %p161 = scmp.eq.s32.totalorder %s36, 0
      %p162 = por %p160, %p161
      %p163 = scmp.ne.s32.totalorder %s151, %s152
      %p164 = scmp.eq.s32.totalorder %s37, 1
      %p165 = por %p163, %p164
      %p167 = scmp.ne.s32.totalorder %s152, %s166
      %p168 = scmp.eq.s32.totalorder %s37, 0
      %p169 = por %p167, %p168
      %s171 = sadd.s32 %s170, 1
      %p174 = scmp.eq.s32.totalorder %s31, 1
      %p175 = scmp.ne.s32.totalorder %s170, %s172
      %p176 = scmp.eq.s32.totalorder %s31, 0
      %p177 = por %p175, %p176
      %p178 = scmp.ne.s32.totalorder %s170, %s172
      %p179 = scmp.eq.s32.totalorder %s36, 1
      %p180 = por %p178, %p179
      %p181 = scmp.ne.s32.totalorder %s172, %s173
      %p182 = scmp.eq.s32.totalorder %s36, 0
      %p183 = por %p181, %p182
      %p184 = scmp.ne.s32.totalorder %s172, %s173
      %p185 = scmp.eq.s32.totalorder %s37, 1
      %p186 = por %p184, %p185
      %p188 = scmp.ne.s32.totalorder %s173, %s187
      %p189 = scmp.eq.s32.totalorder %s37, 0
      %p190 = por %p188, %p189
      %s192 = sadd.s32 %s191, 1
      %p195 = scmp.eq.s32.totalorder %s31, 1
      %p196 = scmp.ne.s32.totalorder %s191, %s193
      %p197 = scmp.eq.s32.totalorder %s31, 0
      %p198 = por %p196, %p197
      %p199 = scmp.ne.s32.totalorder %s191, %s193
      %p200 = scmp.eq.s32.totalorder %s36, 1
      %p201 = por %p199, %p200
      %p202 = scmp.ne.s32.totalorder %s193, %s194
      %p203 = scmp.eq.s32.totalorder %s36, 0
      %p204 = por %p202, %p203
      %p205 = scmp.ne.s32.totalorder %s193, %s194
      %p206 = scmp.eq.s32.totalorder %s37, 1
      %p207 = por %p205, %p206
      %p209 = scmp.ne.s32.totalorder %s194, %s208
      %p210 = scmp.eq.s32.totalorder %s37, 0
      %p211 = por %p209, %p210
      %s213 = sadd.s32 %s212, 1
      %p216 = scmp.eq.s32.totalorder %s31, 1
      %p217 = scmp.ne.s32.totalorder %s212, %s214
      %p218 = scmp.eq.s32.totalorder %s31, 0
      %p219 = por %p217, %p218
      %p220 = scmp.ne.s32.totalorder %s212, %s214
      %p221 = scmp.eq.s32.totalorder %s36, 1
      %p222 = por %p220, %p221
      %p223 = scmp.ne.s32.totalorder %s214, %s215
      %p224 = scmp.eq.s32.totalorder %s36, 0
      %p225 = por %p223, %p224
      %p226 = scmp.ne.s32.totalorder %s214, %s215
      %p227 = scmp.eq.s32.totalorder %s37, 1
      %p228 = por %p226, %p227
      %p230 = scmp.ne.s32.totalorder %s215, %s229
      %p231 = scmp.eq.s32.totalorder %s37, 0
      %p232 = por %p230, %p231
      %s234 = sadd.s32 %s233, 1
      %p237 = scmp.eq.s32.totalorder %s31, 1
      %p238 = scmp.ne.s32.totalorder %s233, %s235
      %p239 = scmp.eq.s32.totalorder %s31, 0
      %p240 = por %p238, %p239
      %p241 = scmp.ne.s32.totalorder %s233, %s235
      %p242 = scmp.eq.s32.totalorder %s36, 1
      %p243 = por %p241, %p242
      %p244 = scmp.ne.s32.totalorder %s235, %s236
      %p245 = scmp.eq.s32.totalorder %s36, 0
      %p246 = por %p244, %p245
      %p247 = scmp.ne.s32.totalorder %s235, %s236
      %p248 = scmp.eq.s32.totalorder %s37, 1
      %p249 = por %p247, %p248
      %p251 = scmp.ne.s32.totalorder %s236, %s250
      %p252 = scmp.eq.s32.totalorder %s37, 0
      %p253 = por %p251, %p252
      %s255 = sadd.s32 %s254, 1
      %p258 = scmp.eq.s32.totalorder %s31, 1
      %p259 = scmp.ne.s32.totalorder %s254, %s256
      %p260 = scmp.eq.s32.totalorder %s31, 0
      %p261 = por %p259, %p260
      %p262 = scmp.ne.s32.totalorder %s254, %s256
      %p263 = scmp.eq.s32.totalorder %s36, 1
      %p264 = por %p262, %p263
      %p265 = scmp.ne.s32.totalorder %s256, %s257
      %p266 = scmp.eq.s32.totalorder %s36, 0
      %p267 = por %p265, %p266
      %p268 = scmp.ne.s32.totalorder %s256, %s257
      %p269 = scmp.eq.s32.totalorder %s37, 1
      %p270 = por %p268, %p269
      %p272 = scmp.ne.s32.totalorder %s257, %s271
      %p273 = scmp.eq.s32.totalorder %s37, 0
      %p274 = por %p272, %p273
      %s276 = sadd.s32 %s275, 1
      %p279 = scmp.eq.s32.totalorder %s31, 1
      %p280 = scmp.ne.s32.totalorder %s275, %s277
      %p281 = scmp.eq.s32.totalorder %s31, 0
      %p282 = por %p280, %p281
      %p283 = scmp.ne.s32.totalorder %s275, %s277
      %p284 = scmp.eq.s32.totalorder %s36, 1
      %p285 = por %p283, %p284
      %p286 = scmp.ne.s32.totalorder %s277, %s278
      %p287 = scmp.eq.s32.totalorder %s36, 0
      %p288 = por %p286, %p287
      %p289 = scmp.ne.s32.totalorder %s277, %s278
      %p290 = scmp.eq.s32.totalorder %s37, 1
      %p291 = por %p289, %p290
      %p293 = scmp.ne.s32.totalorder %s278, %s292
      %p294 = scmp.eq.s32.totalorder %s37, 0
      %p295 = por %p293, %p294
      %s297 = sadd.s32 %s296, 1
      %p300 = scmp.eq.s32.totalorder %s31, 1
      %p301 = scmp.ne.s32.totalorder %s296, %s298
      %p302 = scmp.eq.s32.totalorder %s31, 0
      %p303 = por %p301, %p302
      %p304 = scmp.ne.s32.totalorder %s296, %s298
      %p305 = scmp.eq.s32.totalorder %s36, 1
      %p306 = por %p304, %p305
      %p307 = scmp.ne.s32.totalorder %s298, %s299
      %p308 = scmp.eq.s32.totalorder %s36, 0
      %p309 = por %p307, %p308
      %p310 = scmp.ne.s32.totalorder %s298, %s299
      %p311 = scmp.eq.s32.totalorder %s37, 1
      %p312 = por %p310, %p311
      %p314 = scmp.ne.s32.totalorder %s299, %s313
      %p315 = scmp.eq.s32.totalorder %s37, 0
      %p316 = por %p314, %p315
      %s318 = sadd.s32 %s317, 1
      %p321 = scmp.eq.s32.totalorder %s31, 1
      %p322 = scmp.ne.s32.totalorder %s317, %s319
      %p323 = scmp.eq.s32.totalorder %s31, 0
      %p324 = por %p322, %p323
      %p325 = scmp.ne.s32.totalorder %s317, %s319
      %p326 = scmp.eq.s32.totalorder %s36, 1
      %p327 = por %p325, %p326
      %p328 = scmp.ne.s32.totalorder %s319, %s320
      %p329 = scmp.eq.s32.totalorder %s36, 0
      %p330 = por %p328, %p329
      %p331 = scmp.ne.s32.totalorder %s319, %s320
      %p332 = scmp.eq.s32.totalorder %s37, 1
      %p333 = por %p331, %p332
      %p335 = scmp.ne.s32.totalorder %s320, %s334
      %p336 = scmp.eq.s32.totalorder %s37, 0
      %p337 = por %p335, %p336
      %s339 = sadd.s32 %s338, 1
      %p342 = scmp.eq.s32.totalorder %s31, 1
      %p343 = scmp.ne.s32.totalorder %s338, %s340
      %p344 = scmp.eq.s32.totalorder %s31, 0
      %p345 = por %p343, %p344
      %p346 = scmp.ne.s32.totalorder %s338, %s340
      %p347 = scmp.eq.s32.totalorder %s36, 1
      %p348 = por %p346, %p347
      %p349 = scmp.ne.s32.totalorder %s340, %s341
      %p350 = scmp.eq.s32.totalorder %s36, 0
      %p351 = por %p349, %p350
      %p352 = scmp.ne.s32.totalorder %s340, %s341
      %p353 = scmp.eq.s32.totalorder %s37, 1
      %p354 = por %p352, %p353
      %p356 = scmp.ne.s32.totalorder %s341, %s355
      %p357 = scmp.eq.s32.totalorder %s37, 0
      %p358 = por %p356, %p357
      %s360 = sadd.s32 %s359, 1
      %p363 = scmp.eq.s32.totalorder %s31, 1
      %p364 = scmp.ne.s32.totalorder %s359, %s361
      %p365 = scmp.eq.s32.totalorder %s31, 0
      %p366 = por %p364, %p365
      %p367 = scmp.ne.s32.totalorder %s359, %s361
      %p368 = scmp.eq.s32.totalorder %s36, 1
      %p369 = por %p367, %p368
      %p370 = scmp.ne.s32.totalorder %s361, %s362
      %p371 = scmp.eq.s32.totalorder %s36, 0
      %p372 = por %p370, %p371
      %p373 = scmp.ne.s32.totalorder %s361, %s362
      %p374 = scmp.eq.s32.totalorder %s37, 1
      %p375 = por %p373, %p374
      %p377 = scmp.ne.s32.totalorder %s362, %s376
      %p378 = scmp.eq.s32.totalorder %s37, 0
      %p379 = por %p377, %p378
      %s381 = sadd.s32 %s380, 1
      %p384 = scmp.eq.s32.totalorder %s31, 1
      %p385 = scmp.ne.s32.totalorder %s380, %s382
      %p386 = scmp.eq.s32.totalorder %s31, 0
      %p387 = por %p385, %p386
      %p388 = scmp.ne.s32.totalorder %s380, %s382
      %p389 = scmp.eq.s32.totalorder %s36, 1
      %p390 = por %p388, %p389
      %p391 = scmp.ne.s32.totalorder %s382, %s383
      %p392 = scmp.eq.s32.totalorder %s36, 0
      %p393 = por %p391, %p392
      %p394 = scmp.ne.s32.totalorder %s382, %s383
      %p395 = scmp.eq.s32.totalorder %s37, 1
      %p396 = por %p394, %p395
      %p398 = scmp.ne.s32.totalorder %s383, %s397
      %p399 = scmp.eq.s32.totalorder %s37, 0
      %p400 = por %p398, %p399
      %s402 = sadd.s32 %s401, 1
      %p405 = scmp.eq.s32.totalorder %s31, 1
      %p406 = scmp.ne.s32.totalorder %s401, %s403
      %p407 = scmp.eq.s32.totalorder %s31, 0
      %p408 = por %p406, %p407
      %p409 = scmp.ne.s32.totalorder %s401, %s403
      %p410 = scmp.eq.s32.totalorder %s36, 1
      %p411 = por %p409, %p410
      %p412 = scmp.ne.s32.totalorder %s403, %s404
      %p413 = scmp.eq.s32.totalorder %s36, 0
      %p414 = por %p412, %p413
      %p415 = scmp.ne.s32.totalorder %s403, %s404
      %p416 = scmp.eq.s32.totalorder %s37, 1
      %p417 = por %p415, %p416
      %p419 = scmp.ne.s32.totalorder %s404, %s418
      %p420 = scmp.eq.s32.totalorder %s37, 0
      %p421 = por %p419, %p420
      %s423 = sadd.s32 %s422, 1
      %p426 = scmp.eq.s32.totalorder %s31, 1
      %p427 = scmp.ne.s32.totalorder %s422, %s424
      %p428 = scmp.eq.s32.totalorder %s31, 0
      %p429 = por %p427, %p428
      %p430 = scmp.ne.s32.totalorder %s422, %s424
      %p431 = scmp.eq.s32.totalorder %s36, 1
      %p432 = por %p430, %p431
      %p433 = scmp.ne.s32.totalorder %s424, %s425
      %p434 = scmp.eq.s32.totalorder %s36, 0
      %p435 = por %p433, %p434
      %p436 = scmp.ne.s32.totalorder %s424, %s425
      %p437 = scmp.eq.s32.totalorder %s37, 1
      %p438 = por %p436, %p437
      %p440 = scmp.ne.s32.totalorder %s425, %s439
      %p441 = scmp.eq.s32.totalorder %s37, 0
      %p442 = por %p440, %p441
      %s444 = sadd.s32 %s443, 1
      %p447 = scmp.eq.s32.totalorder %s31, 1
      %p448 = scmp.ne.s32.totalorder %s443, %s445
      %p449 = scmp.eq.s32.totalorder %s31, 0
      %p450 = por %p448, %p449
      %p451 = scmp.ne.s32.totalorder %s443, %s445
      %p452 = scmp.eq.s32.totalorder %s36, 1
      %p453 = por %p451, %p452
      %p454 = scmp.ne.s32.totalorder %s445, %s446
      %p455 = scmp.eq.s32.totalorder %s36, 0
      %p456 = por %p454, %p455
      %p457 = scmp.ne.s32.totalorder %s445, %s446
      %p458 = scmp.eq.s32.totalorder %s37, 1
      %p459 = por %p457, %p458
      %p461 = scmp.ne.s32.totalorder %s446, %s460
      %p462 = scmp.eq.s32.totalorder %s37, 0
      %p463 = por %p461, %p462
      %s464 = ssub.s32 %s31, %s38
      %p465 = scmp.eq.s32.totalorder %s464, 0
      %s467 = sadd.s32 %s466, 1
      %s468 = scalar_select %p465, %s466, %s467
      %p471 = pneg %p465
      %p472 = scmp.eq.s32.totalorder %s31, 1
      %p473 = por %p471, %p472
      %p474 = scmp.ne.s32.totalorder %s466, %s469
      %p475 = scmp.eq.s32.totalorder %s31, 0
      %p476 = por %p474, %p475
      %p477 = scmp.ne.s32.totalorder %s466, %s469
      %p478 = scmp.eq.s32.totalorder %s36, 1
      %p479 = por %p477, %p478
      %p480 = scmp.ne.s32.totalorder %s469, %s470
      %p481 = scmp.eq.s32.totalorder %s36, 0
      %p482 = por %p480, %p481
      %p483 = scmp.ne.s32.totalorder %s469, %s470
      %p484 = scmp.eq.s32.totalorder %s37, 1
      %p485 = por %p483, %p484
      %p487 = scmp.ne.s32.totalorder %s470, %s486
      %p488 = scmp.eq.s32.totalorder %s37, 0
      %p489 = por %p487, %p488
      %s490 = ssub.s32 %s31, %s38
      %p491 = scmp.eq.s32.totalorder %s490, 0
      %s493 = sadd.s32 %s492, 1
      %s494 = scalar_select %p491, %s492, %s493
      %p497 = pneg %p491
      %p498 = scmp.eq.s32.totalorder %s31, 1
      %p499 = por %p497, %p498
      %p500 = scmp.ne.s32.totalorder %s492, %s495
      %p501 = scmp.eq.s32.totalorder %s31, 0
      %p502 = por %p500, %p501
      %p503 = scmp.ne.s32.totalorder %s492, %s495
      %p504 = scmp.eq.s32.totalorder %s36, 1
      %p505 = por %p503, %p504
      %p506 = scmp.ne.s32.totalorder %s495, %s496
      %p507 = scmp.eq.s32.totalorder %s36, 0
      %p508 = por %p506, %p507
      %p509 = scmp.ne.s32.totalorder %s495, %s496
      %p510 = scmp.eq.s32.totalorder %s37, 1
      %p511 = por %p509, %p510
      %p513 = scmp.ne.s32.totalorder %s496, %s512
      %p514 = scmp.eq.s32.totalorder %s37, 0
      %p515 = por %p513, %p514
      %p516 = scmp.le.s32.totalorder 1, %s31
      %p517 = scmp.lt.s32.totalorder %s31, 3
      %p518 = pnand %p516, %p517
      %p519 = pneg %p518
      // Predicated region
      $region9: #{tpu_custom_call.1} parent=5 // pred_check
        _
      $region10: #{tpu_custom_call.1} parent=5 // pred_check_branch
        %521 = sbr.rel (%p518) target = $region12
      $region11: #{tpu_custom_call.1} parent=5 // pred_region
        %s522 = ssub.s32 %s31, 1
        // Predicated region
        $region13: #{tpu_custom_call.1} parent=11 // pred_check
          %p523 = pneg %p78
        $region14: #{tpu_custom_call.1} parent=11 // pred_check_branch
          %525 = sbr.rel (%p523) target = $region16
        $region15: #{tpu_custom_call.1} parent=11 // pred_region
          _
        $region16: #{tpu_custom_call.1} parent=11 // pred_fallthru
          _
        // Predicated region
        $region17: #{tpu_custom_call.1} parent=11 // pred_check
          %p526 = pneg %p99
        $region18: #{tpu_custom_call.1} parent=11 // pred_check_branch
          %528 = sbr.rel (%p526) target = $region20
        $region19: #{tpu_custom_call.1} parent=11 // pred_region
          _
        $region20: #{tpu_custom_call.1} parent=11 // pred_fallthru
          _
        // Predicated region
        $region21: #{tpu_custom_call.1} parent=11 // pred_check
          %p529 = pneg %p120
        $region22: #{tpu_custom_call.1} parent=11 // pred_check_branch
          %531 = sbr.rel (%p529) target = $region24
        $region23: #{tpu_custom_call.1} parent=11 // pred_region
          _
        $region24: #{tpu_custom_call.1} parent=11 // pred_fallthru
          _
        // Predicated region
        $region25: #{tpu_custom_call.1} parent=11 // pred_check
          %p532 = pneg %p141
        $region26: #{tpu_custom_call.1} parent=11 // pred_check_branch
          %534 = sbr.rel (%p532) target = $region28
        $region27: #{tpu_custom_call.1} parent=11 // pred_region
          _
        $region28: #{tpu_custom_call.1} parent=11 // pred_fallthru
          _
        // Predicated region
        $region29: #{tpu_custom_call.1} parent=11 // pred_check
          %p535 = pneg %p162
        $region30: #{tpu_custom_call.1} parent=11 // pred_check_branch
          %537 = sbr.rel (%p535) target = $region32
        $region31: #{tpu_custom_call.1} parent=11 // pred_region
          _
        $region32: #{tpu_custom_call.1} parent=11 // pred_fallthru
          _
        // Predicated region
        $region33: #{tpu_custom_call.1} parent=11 // pred_check
          %p538 = pneg %p183
        $region34: #{tpu_custom_call.1} parent=11 // pred_check_branch
          %540 = sbr.rel (%p538) target = $region36
        $region35: #{tpu_custom_call.1} parent=11 // pred_region
          _
        $region36: #{tpu_custom_call.1} parent=11 // pred_fallthru
          _
        // Predicated region
        $region37: #{tpu_custom_call.1} parent=11 // pred_check
          %p541 = pneg %p204
        $region38: #{tpu_custom_call.1} parent=11 // pred_check_branch
          %543 = sbr.rel (%p541) target = $region40
        $region39: #{tpu_custom_call.1} parent=11 // pred_region
          _
        $region40: #{tpu_custom_call.1} parent=11 // pred_fallthru
          _
        // Predicated region
        $region41: #{tpu_custom_call.1} parent=11 // pred_check
          %p544 = pneg %p225
        $region42: #{tpu_custom_call.1} parent=11 // pred_check_branch
          %546 = sbr.rel (%p544) target = $region44
        $region43: #{tpu_custom_call.1} parent=11 // pred_region
          _
        $region44: #{tpu_custom_call.1} parent=11 // pred_fallthru
          _
        // Predicated region
        $region45: #{tpu_custom_call.1} parent=11 // pred_check
          %p547 = pneg %p246
        $region46: #{tpu_custom_call.1} parent=11 // pred_check_branch
          %549 = sbr.rel (%p547) target = $region48
        $region47: #{tpu_custom_call.1} parent=11 // pred_region
          _
        $region48: #{tpu_custom_call.1} parent=11 // pred_fallthru
          _
        // Predicated region
        $region49: #{tpu_custom_call.1} parent=11 // pred_check
          %p550 = pneg %p267
        $region50: #{tpu_custom_call.1} parent=11 // pred_check_branch
          %552 = sbr.rel (%p550) target = $region52
        $region51: #{tpu_custom_call.1} parent=11 // pred_region
          _
        $region52: #{tpu_custom_call.1} parent=11 // pred_fallthru
          _
        // Predicated region
        $region53: #{tpu_custom_call.1} parent=11 // pred_check
          %p553 = pneg %p288
        $region54: #{tpu_custom_call.1} parent=11 // pred_check_branch
          %555 = sbr.rel (%p553) target = $region56
        $region55: #{tpu_custom_call.1} parent=11 // pred_region
          _
        $region56: #{tpu_custom_call.1} parent=11 // pred_fallthru
          _
        // Predicated region
        $region57: #{tpu_custom_call.1} parent=11 // pred_check
          %p556 = pneg %p309
        $region58: #{tpu_custom_call.1} parent=11 // pred_check_branch
          %558 = sbr.rel (%p556) target = $region60
        $region59: #{tpu_custom_call.1} parent=11 // pred_region
          _
        $region60: #{tpu_custom_call.1} parent=11 // pred_fallthru
          _
        // Predicated region
        $region61: #{tpu_custom_call.1} parent=11 // pred_check
          %p559 = pneg %p330
        $region62: #{tpu_custom_call.1} parent=11 // pred_check_branch
          %561 = sbr.rel (%p559) target = $region64
        $region63: #{tpu_custom_call.1} parent=11 // pred_region
          _
        $region64: #{tpu_custom_call.1} parent=11 // pred_fallthru
          _
        // Predicated region
        $region65: #{tpu_custom_call.1} parent=11 // pred_check
          %p562 = pneg %p351
        $region66: #{tpu_custom_call.1} parent=11 // pred_check_branch
          %564 = sbr.rel (%p562) target = $region68
        $region67: #{tpu_custom_call.1} parent=11 // pred_region
          _
        $region68: #{tpu_custom_call.1} parent=11 // pred_fallthru
          _
        // Predicated region
        $region69: #{tpu_custom_call.1} parent=11 // pred_check
          %p565 = pneg %p372
        $region70: #{tpu_custom_call.1} parent=11 // pred_check_branch
          %567 = sbr.rel (%p565) target = $region72
        $region71: #{tpu_custom_call.1} parent=11 // pred_region
          _
        $region72: #{tpu_custom_call.1} parent=11 // pred_fallthru
          _
        // Predicated region
        $region73: #{tpu_custom_call.1} parent=11 // pred_check
          %p568 = pneg %p393
        $region74: #{tpu_custom_call.1} parent=11 // pred_check_branch
          %570 = sbr.rel (%p568) target = $region76
        $region75: #{tpu_custom_call.1} parent=11 // pred_region
          _
        $region76: #{tpu_custom_call.1} parent=11 // pred_fallthru
          _
        // Predicated region
        $region77: #{tpu_custom_call.1} parent=11 // pred_check
          %p571 = pneg %p414
        $region78: #{tpu_custom_call.1} parent=11 // pred_check_branch
          %573 = sbr.rel (%p571) target = $region80
        $region79: #{tpu_custom_call.1} parent=11 // pred_region
          _
        $region80: #{tpu_custom_call.1} parent=11 // pred_fallthru
          _
        // Predicated region
        $region81: #{tpu_custom_call.1} parent=11 // pred_check
          %p574 = pneg %p435
        $region82: #{tpu_custom_call.1} parent=11 // pred_check_branch
          %576 = sbr.rel (%p574) target = $region84
        $region83: #{tpu_custom_call.1} parent=11 // pred_region
          _
        $region84: #{tpu_custom_call.1} parent=11 // pred_fallthru
          _
        // Predicated region
        $region85: #{tpu_custom_call.1} parent=11 // pred_check
          %p577 = pneg %p456
        $region86: #{tpu_custom_call.1} parent=11 // pred_check_branch
          %579 = sbr.rel (%p577) target = $region88
        $region87: #{tpu_custom_call.1} parent=11 // pred_region
          _
        $region88: #{tpu_custom_call.1} parent=11 // pred_fallthru
          _
      $region12: #{tpu_custom_call.1} parent=5 // pred_fallthru
        _
      %p580 = scmp.lt.s32.totalorder %s31, 2
      // Predicated region
      $region89: #{tpu_custom_call.1} parent=5 // pred_check
        %p581 = pneg %p580
      $region90: #{tpu_custom_call.1} parent=5 // pred_check_branch
        %583 = sbr.rel (%p581) target = $region92
      $region91: #{tpu_custom_call.1} parent=5 // pred_region
        // Predicated region
        $region93: #{tpu_custom_call.1} parent=91 // pred_check
          %p584 = pneg %p51
        $region94: #{tpu_custom_call.1} parent=91 // pred_check_branch
          %586 = sbr.rel (%p584) target = $region96
        $region95: #{tpu_custom_call.1} parent=91 // pred_region
          %p587 = scmp.lt.s32.totalorder %s31, 1
          %s588 = scalar_select %p587, %s31, 1
          %s589 = smul.addr %s588, 32
          %s590 = smul.addr %s589, 8
          %s591 = scalar_lea.vmem %s0, %s590
        $region96: #{tpu_custom_call.1} parent=91 // pred_fallthru
          _
      $region92: #{tpu_custom_call.1} parent=5 // pred_fallthru
        _
      %p592 = scmp.le.s32.totalorder 1, %s31
      %p593 = scmp.lt.s32.totalorder %s31, 3
      %p594 = pnand %p592, %p593
      %p595 = pneg %p594
      // Predicated region
      $region97: #{tpu_custom_call.1} parent=5 // pred_check
        _
      $region98: #{tpu_custom_call.1} parent=5 // pred_check_branch
        %597 = sbr.rel (%p594) target = $region100
      $region99: #{tpu_custom_call.1} parent=5 // pred_region
        %s598 = ssub.s32 %s31, 1
        %p599 = scmp.lt.s32.totalorder %s36, 1
        %s600 = scalar_select %p599, %s36, 1
        %s601 = smul.addr %s600, 32
        %s602 = smul.addr %s601, 8
        %s603 = scalar_lea.vmem %s0, %s602
        %p604 = pneg %p57
        %p605 = pneg %p54
        %p606 = pneg %p78
        %p607 = pneg %p75
        %p608 = pneg %p99
        %p609 = pneg %p96
        %p610 = pneg %p120
        %p611 = pneg %p117
        %p612 = pneg %p141
        %p613 = pneg %p138
        %p614 = pneg %p162
        %p615 = pneg %p159
        %p616 = pneg %p183
        %p617 = pneg %p180
        %p618 = pneg %p204
        %p619 = pneg %p201
        %p620 = pneg %p225
        %p621 = pneg %p222
        %p622 = pneg %p246
        %p623 = pneg %p243
        %p624 = pneg %p267
        %p625 = pneg %p264
        %p626 = pneg %p288
        %p627 = pneg %p285
        %p628 = pneg %p309
        %p629 = pneg %p306
        %p630 = pneg %p330
        %p631 = pneg %p327
        %p632 = pneg %p351
        %p633 = pneg %p348
        %p634 = pneg %p372
        %p635 = pneg %p369
        %p636 = pneg %p393
        %p637 = pneg %p390
        %p638 = pneg %p414
        %p639 = pneg %p411
        %p640 = pneg %p435
        %p641 = pneg %p432
        %p642 = pneg %p456
        %p643 = pneg %p453
        %p644 = pneg %p482
        %p645 = pneg %p479
        %s646 = sand.u32 %s469, 1
        %s647 = scalar_lea.sflag [#allocation3], %s646
        %s648 = sand.u32 %s469, 1
        %s649 = smul.addr %s648, 64
        %s650 = scalar_lea.vmem [#allocation2], %s649
        %p651 = pneg %p508
        %p652 = pneg %p505
        %p653 = scmp.lt.s32.totalorder %s36, 1
        %s654 = scalar_select %p653, %s36, 1
        %s655 = smul.addr %s654, 32
        %s656 = smul.addr %s655, 8
        %s657 = scalar_lea.vmem %s21, %s656
        %p658 = scmp.lt.s32.totalorder %s36, 1
        %s659 = scalar_select %p658, %s36, 1
        %s660 = smul.addr %s659, 32
        %s661 = smul.addr %s660, 8
        %s662 = scalar_lea.vmem %s0, %s661
        %p663 = scmp.lt.s32.totalorder %s36, 1
        %s664 = scalar_select %p663, %s36, 1
        %s665 = smul.addr %s664, 32
        %s666 = smul.addr %s665, 8
        %s667 = scalar_lea.vmem %s21, %s666
        %v668 = vld [vmem:[%s662] sm:$0xff]
        %v669 = vld [vmem:[%s662 + $0x8] sm:$0xff]
        %v670 = vld [vmem:[%s662 + $0x10] sm:$0xff]
        %v671 = vld [vmem:[%s662 + $0x18] sm:$0xff]
        %v672 = vld [vmem:[%s662 + $0x20] sm:$0xff]
        %v673 = vld [vmem:[%s662 + $0x28] sm:$0xff]
        %v674 = vld [vmem:[%s662 + $0x30] sm:$0xff]
        %v675 = vld [vmem:[%s662 + $0x38] sm:$0xff]
        %v676 = vld [vmem:[%s662 + $0x40] sm:$0xff]
        %v677 = vld [vmem:[%s662 + $0x48] sm:$0xff]
        %v678 = vld [vmem:[%s662 + $0x50] sm:$0xff]
        %v679 = vld [vmem:[%s662 + $0x58] sm:$0xff]
        %v680 = vld [vmem:[%s662 + $0x60] sm:$0xff]
        %v681 = vld [vmem:[%s662 + $0x68] sm:$0xff]
        %v682 = vld [vmem:[%s662 + $0x70] sm:$0xff]
        %v683 = vld [vmem:[%s662 + $0x78] sm:$0xff]
        %v684 = vld [vmem:[%s662 + $0x80] sm:$0xff]
        %v685 = vld [vmem:[%s662 + $0x88] sm:$0xff]
        %v686 = vld [vmem:[%s662 + $0x90] sm:$0xff]
        %v687 = vld [vmem:[%s662 + $0x98] sm:$0xff]
        %v688 = vld [vmem:[%s662 + $0xa0] sm:$0xff]
        %v689 = vld [vmem:[%s662 + $0xa8] sm:$0xff]
        %v690 = vld [vmem:[%s662 + $0xb0] sm:$0xff]
        %v691 = vld [vmem:[%s662 + $0xb8] sm:$0xff]
        %v692 = vld [vmem:[%s662 + $0xc0] sm:$0xff]
        %v693 = vld [vmem:[%s662 + $0xc8] sm:$0xff]
        %v694 = vld [vmem:[%s662 + $0xd0] sm:$0xff]
        %v695 = vld [vmem:[%s662 + $0xd8] sm:$0xff]
        %v696 = vld [vmem:[%s662 + $0xe0] sm:$0xff]
        %v697 = vld [vmem:[%s662 + $0xe8] sm:$0xff]
        %v698 = vld [vmem:[%s662 + $0xf0] sm:$0xff]
        %v699 = vld [vmem:[%s662 + $0xf8] sm:$0xff]
        %v700 = vld [vmem:[%s1] sm:$0xf]
        %v701 = vld [vmem:[%s2] sm:$0x1]
        %v703 = vlaneseq
        %v704 = vshrl.u32 %v703, 7
        %v705 = vsub.s32 0, %v704
        %v706 = vrot.slane %v701, %v705
        %vm708 = vcmask 31744
        %v710 = vsel %vm708, %v668, 0
        %v713 = vsel %vm708, %v669, 0
        %v716 = vsel %vm708, %v670, 0
        %v719 = vsel %vm708, %v671, 0
        %v722 = vsel %vm708, %v672, 0
        %v725 = vsel %vm708, %v673, 0
        %v728 = vsel %vm708, %v674, 0
        %v731 = vsel %vm708, %v675, 0
        %v734 = vsel %vm708, %v676, 0
        %v737 = vsel %vm708, %v677, 0
        %v740 = vsel %vm708, %v678, 0
        %v743 = vsel %vm708, %v679, 0
        %v746 = vsel %vm708, %v680, 0
        %v749 = vsel %vm708, %v681, 0
        %v752 = vsel %vm708, %v682, 0
        %v755 = vsel %vm708, %v683, 0
        %v758 = vsel %vm708, %v684, 0
        %v761 = vsel %vm708, %v685, 0
        %v764 = vsel %vm708, %v686, 0
        %v767 = vsel %vm708, %v687, 0
        %v770 = vsel %vm708, %v688, 0
        %v773 = vsel %vm708, %v689, 0
        %v776 = vsel %vm708, %v690, 0
        %v779 = vsel %vm708, %v691, 0
        %v782 = vsel %vm708, %v692, 0
        %v785 = vsel %vm708, %v693, 0
        %v788 = vsel %vm708, %v694, 0
        %v791 = vsel %vm708, %v695, 0
        %v794 = vsel %vm708, %v696, 0
        %v797 = vsel %vm708, %v697, 0
        %v800 = vsel %vm708, %v698, 0
        %v803 = vsel %vm708, %v699, 0
        %vm805 = vcmask 1043456
        %v807 = vsel %vm805, %v700, 0
        %809 = vmatprep.subr.mxu0 0.0
        %810 = vmatpush1.msra.mxu0 %v807
        %811 = vmatprep.subr.mxu0 0.0
        %812 = vmatpush1.msra.mxu0 0.0
        %813 = vmatprep.subr.mxu0 0.0
        %814 = vmatpush1.msra.mxu0 0.0
        %815 = vmatprep.subr.mxu0 0.0
        %816 = vmatpush1.msra.mxu0 0.0
        %817 = vmatprep.subr.mxu0 0.0
        %818 = vmatpush1.msra.mxu0 0.0
        %819 = vmatprep.subr.mxu0 0.0
        %820 = vmatpush1.msra.mxu0 0.0
        %821 = vmatprep.subr.mxu0 0.0
        %822 = vmatpush1.msra.mxu0 0.0
        %823 = vmatprep.subr.mxu0 0.0
        %824 = vmatpush1.msra.mxu0 0.0
        %825 = vmatprep.subr.mxu0 0.0
        %826 = vmatpush1.msra.mxu0 0.0
        %827 = vmatprep.subr.mxu0 0.0
        %828 = vmatpush1.msra.mxu0 0.0
        %829 = vmatprep.subr.mxu0 0.0
        %830 = vmatpush1.msra.mxu0 0.0
        %831 = vmatprep.subr.mxu0 0.0
        %832 = vmatpush1.msra.mxu0 0.0
        %833 = vmatprep.subr.mxu0 0.0
        %834 = vmatpush1.msra.mxu0 0.0
        %835 = vmatprep.subr.mxu0 0.0
        %836 = vmatpush1.msra.mxu0 0.0
        %837 = vmatprep.subr.mxu0 0.0
        %838 = vmatpush1.msra.mxu0 0.0
        %839 = vmatprep.subr.mxu0 0.0
        %840 = vmatpush1.msra.mxu0 0.0
        %841 = vmatprep.subr.mxu0 0.0
        %842 = vmatpush1.msra.mxu0 0.0
        %843 = vmatprep.subr.mxu0 0.0
        %844 = vmatpush1.msra.mxu0 0.0
        %845 = vmatprep.subr.mxu0 0.0
        %846 = vmatpush1.msra.mxu0 0.0
        %847 = vmatprep.subr.mxu0 0.0
        %848 = vmatpush1.msra.mxu0 0.0
        %849 = vmatprep.subr.mxu0 0.0
        %850 = vmatpush1.msra.mxu0 0.0
        %851 = vmatprep.subr.mxu0 0.0
        %852 = vmatpush1.msra.mxu0 0.0
        %853 = vmatprep.subr.mxu0 0.0
        %854 = vmatpush1.msra.mxu0 0.0
        %855 = vmatprep.subr.mxu0 0.0
        %856 = vmatpush1.msra.mxu0 0.0
        %857 = vmatprep.subr.mxu0 0.0
        %858 = vmatpush1.msra.mxu0 0.0
        %859 = vmatprep.subr.mxu0 0.0
        %860 = vmatpush1.msra.mxu0 0.0
        %861 = vmatprep.subr.mxu0 0.0
        %862 = vmatpush1.msra.mxu0 0.0
        %863 = vmatprep.subr.mxu0 0.0
        %864 = vmatpush1.msra.mxu0 0.0
        %865 = vmatprep.subr.mxu0 0.0
        %866 = vmatpush1.msra.mxu0 0.0
        %867 = vmatprep.subr.mxu0 0.0
        %868 = vmatpush1.msra.mxu0 0.0
        %869 = vmatprep.subr.mxu0 0.0
        %870 = vmatpush1.msra.mxu0 0.0
        %871 = vmatprep.subr.mxu0 0.0
        %872 = vmatpush1.msra.mxu0 0.0
        %873 = vmatprep.mubr.f32.mxu0 0.0
        %874 = vmatmul.mubr.f32.gmra.mrb[0].mxu0 %v710
        %v875 = vpop.f32.mrb[0].mxu0
        %v876 = vadd.f32 %v706, %v875
        %v877 = vpop.f32.mrb[0].mxu0
        %878 = vmatprep.mubr.f32.mxu0 0.0
        %879 = vmatmul.mubr.f32.gmra.mrb[0].mxu0 %v713
        %v880 = vpop.f32.mrb[0].mxu0
        %v881 = vadd.f32 %v706, %v880
        %v882 = vpop.f32.mrb[0].mxu0
        %883 = vmatprep.mubr.f32.mxu0 0.0
        %884 = vmatmul.mubr.f32.gmra.mrb[0].mxu0 %v716
        %v885 = vpop.f32.mrb[0].mxu0
        %v886 = vadd.f32 %v706, %v885
        %v887 = vpop.f32.mrb[0].mxu0
        %888 = vmatprep.mubr.f32.mxu0 0.0
        %889 = vmatmul.mubr.f32.gmra.mrb[0].mxu0 %v719
        %v890 = vpop.f32.mrb[0].mxu0
        %v891 = vadd.f32 %v706, %v890
        %v892 = vpop.f32.mrb[0].mxu0
        %893 = vmatprep.mubr.f32.mxu0 0.0
        %894 = vmatmul.mubr.f32.gmra.mrb[0].mxu0 %v722
        %v895 = vpop.f32.mrb[0].mxu0
        %v896 = vadd.f32 %v706, %v895
        %v897 = vpop.f32.mrb[0].mxu0
        %898 = vmatprep.mubr.f32.mxu0 0.0
        %899 = vmatmul.mubr.f32.gmra.mrb[0].mxu0 %v725
        %v900 = vpop.f32.mrb[0].mxu0
        %v901 = vadd.f32 %v706, %v900
        %v902 = vpop.f32.mrb[0].mxu0
        %903 = vmatprep.mubr.f32.mxu0 0.0
        %904 = vmatmul.mubr.f32.gmra.mrb[0].mxu0 %v728
        %v905 = vpop.f32.mrb[0].mxu0
        %v906 = vadd.f32 %v706, %v905
        %v907 = vpop.f32.mrb[0].mxu0
        %908 = vmatprep.mubr.f32.mxu0 0.0
        %909 = vmatmul.mubr.f32.gmra.mrb[0].mxu0 %v731
        %v910 = vpop.f32.mrb[0].mxu0
        %v911 = vadd.f32 %v706, %v910
        %v912 = vpop.f32.mrb[0].mxu0
        %913 = vmatprep.mubr.f32.mxu0 0.0
        %914 = vmatmul.mubr.f32.gmra.mrb[0].mxu0 %v734
        %v915 = vpop.f32.mrb[0].mxu0
        %v916 = vadd.f32 %v706, %v915
        %v917 = vpop.f32.mrb[0].mxu0
        %918 = vmatprep.mubr.f32.mxu0 0.0
        %919 = vmatmul.mubr.f32.gmra.mrb[0].mxu0 %v737
        %v920 = vpop.f32.mrb[0].mxu0
        %v921 = vadd.f32 %v706, %v920
        %v922 = vpop.f32.mrb[0].mxu0
        %923 = vmatprep.mubr.f32.mxu0 0.0
        %924 = vmatmul.mubr.f32.gmra.mrb[0].mxu0 %v740
        %v925 = vpop.f32.mrb[0].mxu0
        %v926 = vadd.f32 %v706, %v925
        %v927 = vpop.f32.mrb[0].mxu0
        %928 = vmatprep.mubr.f32.mxu0 0.0
        %929 = vmatmul.mubr.f32.gmra.mrb[0].mxu0 %v743
        %v930 = vpop.f32.mrb[0].mxu0
        %v931 = vadd.f32 %v706, %v930
        %v932 = vpop.f32.mrb[0].mxu0
        %933 = vmatprep.mubr.f32.mxu0 0.0
        %934 = vmatmul.mubr.f32.gmra.mrb[0].mxu0 %v746
        %v935 = vpop.f32.mrb[0].mxu0
        %v936 = vadd.f32 %v706, %v935
        %v937 = vpop.f32.mrb[0].mxu0
        %938 = vmatprep.mubr.f32.mxu0 0.0
        %939 = vmatmul.mubr.f32.gmra.mrb[0].mxu0 %v749
        %v940 = vpop.f32.mrb[0].mxu0
        %v941 = vadd.f32 %v706, %v940
        %v942 = vpop.f32.mrb[0].mxu0
        %943 = vmatprep.mubr.f32.mxu0 0.0
        %944 = vmatmul.mubr.f32.gmra.mrb[0].mxu0 %v752
        %v945 = vpop.f32.mrb[0].mxu0
        %v946 = vadd.f32 %v706, %v945
        %v947 = vpop.f32.mrb[0].mxu0
        %948 = vmatprep.mubr.f32.mxu0 0.0
        %949 = vmatmul.mubr.f32.gmra.mrb[0].mxu0 %v755
        %v950 = vpop.f32.mrb[0].mxu0
        %v951 = vadd.f32 %v706, %v950
        %v952 = vpop.f32.mrb[0].mxu0
        %953 = vmatprep.mubr.f32.mxu0 0.0
        %954 = vmatmul.mubr.f32.gmra.mrb[0].mxu0 %v758
        %v955 = vpop.f32.mrb[0].mxu0
        %v956 = vadd.f32 %v706, %v955
        %v957 = vpop.f32.mrb[0].mxu0
        %958 = vmatprep.mubr.f32.mxu0 0.0
        %959 = vmatmul.mubr.f32.gmra.mrb[0].mxu0 %v761
        %v960 = vpop.f32.mrb[0].mxu0
        %v961 = vadd.f32 %v706, %v960
        %v962 = vpop.f32.mrb[0].mxu0
        %963 = vmatprep.mubr.f32.mxu0 0.0
        %964 = vmatmul.mubr.f32.gmra.mrb[0].mxu0 %v764
        %v965 = vpop.f32.mrb[0].mxu0
        %v966 = vadd.f32 %v706, %v965
        %v967 = vpop.f32.mrb[0].mxu0
        %968 = vmatprep.mubr.f32.mxu0 0.0
        %969 = vmatmul.mubr.f32.gmra.mrb[0].mxu0 %v767
        %v970 = vpop.f32.mrb[0].mxu0
        %v971 = vadd.f32 %v706, %v970
        %v972 = vpop.f32.mrb[0].mxu0
        %973 = vmatprep.mubr.f32.mxu0 0.0
        %974 = vmatmul.mubr.f32.gmra.mrb[0].mxu0 %v770
        %v975 = vpop.f32.mrb[0].mxu0
        %v976 = vadd.f32 %v706, %v975
        %v977 = vpop.f32.mrb[0].mxu0
        %978 = vmatprep.mubr.f32.mxu0 0.0
        %979 = vmatmul.mubr.f32.gmra.mrb[0].mxu0 %v773
        %v980 = vpop.f32.mrb[0].mxu0
        %v981 = vadd.f32 %v706, %v980
        %v982 = vpop.f32.mrb[0].mxu0
        %983 = vmatprep.mubr.f32.mxu0 0.0
        %984 = vmatmul.mubr.f32.gmra.mrb[0].mxu0 %v776
        %v985 = vpop.f32.mrb[0].mxu0
        %v986 = vadd.f32 %v706, %v985
        %v987 = vpop.f32.mrb[0].mxu0
        %988 = vmatprep.mubr.f32.mxu0 0.0
        %989 = vmatmul.mubr.f32.gmra.mrb[0].mxu0 %v779
        %v990 = vpop.f32.mrb[0].mxu0
        %v991 = vadd.f32 %v706, %v990
        %v992 = vpop.f32.mrb[0].mxu0
        %993 = vmatprep.mubr.f32.mxu0 0.0
        %994 = vmatmul.mubr.f32.gmra.mrb[0].mxu0 %v782
        %v995 = vpop.f32.mrb[0].mxu0
        %v996 = vadd.f32 %v706, %v995
        %v997 = vpop.f32.mrb[0].mxu0
        %998 = vmatprep.mubr.f32.mxu0 0.0
        %999 = vmatmul.mubr.f32.gmra.mrb[0].mxu0 %v785
        %v1000 = vpop.f32.mrb[0].mxu0
        %v1001 = vadd.f32 %v706, %v1000
        %v1002 = vpop.f32.mrb[0].mxu0
        %1003 = vmatprep.mubr.f32.mxu0 0.0
        %1004 = vmatmul.mubr.f32.gmra.mrb[0].mxu0 %v788
        %v1005 = vpop.f32.mrb[0].mxu0
        %v1006 = vadd.f32 %v706, %v1005
        %v1007 = vpop.f32.mrb[0].mxu0
        %1008 = vmatprep.mubr.f32.mxu0 0.0
        %1009 = vmatmul.mubr.f32.gmra.mrb[0].mxu0 %v791
        %v1010 = vpop.f32.mrb[0].mxu0
        %v1011 = vadd.f32 %v706, %v1010
        %v1012 = vpop.f32.mrb[0].mxu0
        %1013 = vmatprep.mubr.f32.mxu0 0.0
        %1014 = vmatmul.mubr.f32.gmra.mrb[0].mxu0 %v794
        %v1015 = vpop.f32.mrb[0].mxu0
        %v1016 = vadd.f32 %v706, %v1015
        %v1017 = vpop.f32.mrb[0].mxu0
        %1018 = vmatprep.mubr.f32.mxu0 0.0
        %1019 = vmatmul.mubr.f32.gmra.mrb[0].mxu0 %v797
        %v1020 = vpop.f32.mrb[0].mxu0
        %v1021 = vadd.f32 %v706, %v1020
        %v1022 = vpop.f32.mrb[0].mxu0
        %1023 = vmatprep.mubr.f32.mxu0 0.0
        %1024 = vmatmul.mubr.f32.gmra.mrb[0].mxu0 %v800
        %v1025 = vpop.f32.mrb[0].mxu0
        %v1026 = vadd.f32 %v706, %v1025
        %v1027 = vpop.f32.mrb[0].mxu0
        %1028 = vmatprep.mubr.f32.mxu0 0.0
        %1029 = vmatmul.mubr.f32.gmra.mrb[0].mxu0 %v803
        %v1030 = vpop.f32.mrb[0].mxu0
        %v1031 = vadd.f32 %v706, %v1030
        %v1032 = vpop.f32.mrb[0].mxu0
        %1033 = vdwg.mxu0
        %v1034 = vmul.f32 %v876, 0.01
        %v1035 = vmul.f32 %v881, 0.01
        %v1036 = vmul.f32 %v886, 0.01
        %v1037 = vmul.f32 %v891, 0.01
        %v1038 = vmul.f32 %v896, 0.01
        %v1039 = vmul.f32 %v901, 0.01
        %v1040 = vmul.f32 %v906, 0.01
        %v1041 = vmul.f32 %v911, 0.01
        %v1042 = vmul.f32 %v916, 0.01
        %v1043 = vmul.f32 %v921, 0.01
        %v1044 = vmul.f32 %v926, 0.01
        %v1045 = vmul.f32 %v931, 0.01
        %v1046 = vmul.f32 %v936, 0.01
        %v1047 = vmul.f32 %v941, 0.01
        %v1048 = vmul.f32 %v946, 0.01
        %v1049 = vmul.f32 %v951, 0.01
        %v1050 = vmul.f32 %v956, 0.01
        %v1051 = vmul.f32 %v961, 0.01
        %v1052 = vmul.f32 %v966, 0.01
        %v1053 = vmul.f32 %v971, 0.01
        %v1054 = vmul.f32 %v976, 0.01
        %v1055 = vmul.f32 %v981, 0.01
        %v1056 = vmul.f32 %v986, 0.01
        %v1057 = vmul.f32 %v991, 0.01
        %v1058 = vmul.f32 %v996, 0.01
        %v1059 = vmul.f32 %v1001, 0.01
        %v1060 = vmul.f32 %v1006, 0.01
        %v1061 = vmul.f32 %v1011, 0.01
        %v1062 = vmul.f32 %v1016, 0.01
        %v1063 = vmul.f32 %v1021, 0.01
        %v1064 = vmul.f32 %v1026, 0.01
        %v1065 = vmul.f32 %v1031, 0.01
        %v1066 = vmax.f32 %v876, %v1034
        %v1067 = vmax.f32 %v881, %v1035
        %v1068 = vmax.f32 %v886, %v1036
        %v1069 = vmax.f32 %v891, %v1037
        %v1070 = vmax.f32 %v896, %v1038
        %v1071 = vmax.f32 %v901, %v1039
        %v1072 = vmax.f32 %v906, %v1040
        %v1073 = vmax.f32 %v911, %v1041
        %v1074 = vmax.f32 %v916, %v1042
        %v1075 = vmax.f32 %v921, %v1043
        %v1076 = vmax.f32 %v926, %v1044
        %v1077 = vmax.f32 %v931, %v1045
        %v1078 = vmax.f32 %v936, %v1046
        %v1079 = vmax.f32 %v941, %v1047
        %v1080 = vmax.f32 %v946, %v1048
        %v1081 = vmax.f32 %v951, %v1049
        %v1082 = vmax.f32 %v956, %v1050
        %v1083 = vmax.f32 %v961, %v1051
        %v1084 = vmax.f32 %v966, %v1052
        %v1085 = vmax.f32 %v971, %v1053
        %v1086 = vmax.f32 %v976, %v1054
        %v1087 = vmax.f32 %v981, %v1055
        %v1088 = vmax.f32 %v986, %v1056
        %v1089 = vmax.f32 %v991, %v1057
        %v1090 = vmax.f32 %v996, %v1058
        %v1091 = vmax.f32 %v1001, %v1059
        %v1092 = vmax.f32 %v1006, %v1060
        %v1093 = vmax.f32 %v1011, %v1061
        %v1094 = vmax.f32 %v1016, %v1062
        %v1095 = vmax.f32 %v1021, %v1063
        %v1096 = vmax.f32 %v1026, %v1064
        %v1097 = vmax.f32 %v1031, %v1065
        %vm1099 = vcmask 1040384
        %v1100 = vrot.slane 0.0, 7
        %v1101 = vsel %vm1099, %v1100, %v1100
        %v1102 = vrot.slane %v668, 7
        %v1103 = vrot.slane %v669, 7
        %v1104 = vsel %vm1099, %v1102, %v1103
        %v1105 = vrot.slane %v670, 7
        %v1106 = vrot.slane %v671, 7
        %v1107 = vsel %vm1099, %v1105, %v1106
        %v1108 = vrot.slane %v672, 7
        %v1109 = vrot.slane %v673, 7
        %v1110 = vsel %vm1099, %v1108, %v1109
        %v1111 = vrot.slane %v674, 7
        %v1112 = vrot.slane %v675, 7
        %v1113 = vsel %vm1099, %v1111, %v1112
        %v1114 = vrot.slane %v676, 7
        %v1115 = vrot.slane %v677, 7
        %v1116 = vsel %vm1099, %v1114, %v1115
        %v1117 = vrot.slane %v678, 7
        %v1118 = vrot.slane %v679, 7
        %v1119 = vsel %vm1099, %v1117, %v1118
        %v1120 = vrot.slane %v680, 7
        %v1121 = vrot.slane %v681, 7
        %v1122 = vsel %vm1099, %v1120, %v1121
        %v1123 = vrot.slane %v682, 7
        %v1124 = vrot.slane %v683, 7
        %v1125 = vsel %vm1099, %v1123, %v1124
        %v1126 = vrot.slane %v684, 7
        %v1127 = vrot.slane %v685, 7
        %v1128 = vsel %vm1099, %v1126, %v1127
        %v1129 = vrot.slane %v686, 7
        %v1130 = vrot.slane %v687, 7
        %v1131 = vsel %vm1099, %v1129, %v1130
        %v1132 = vrot.slane %v688, 7
        %v1133 = vrot.slane %v689, 7
        %v1134 = vsel %vm1099, %v1132, %v1133
        %v1135 = vrot.slane %v690, 7
        %v1136 = vrot.slane %v691, 7
        %v1137 = vsel %vm1099, %v1135, %v1136
        %v1138 = vrot.slane %v692, 7
        %v1139 = vrot.slane %v693, 7
        %v1140 = vsel %vm1099, %v1138, %v1139
        %v1141 = vrot.slane %v694, 7
        %v1142 = vrot.slane %v695, 7
        %v1143 = vsel %vm1099, %v1141, %v1142
        %v1144 = vrot.slane %v696, 7
        %v1145 = vrot.slane %v697, 7
        %v1146 = vsel %vm1099, %v1144, %v1145
        %v1147 = vrot.slane %v698, 7
        %v1148 = vrot.slane %v699, 7
        %v1149 = vsel %vm1099, %v1147, %v1148
        %v1199 = vsel %vm1099, 0.0, %v1100
        %v1200 = vsel %vm1099, 0.0, %v1102
        %v1201 = vsel %vm1099, 0.0, %v1105
        %v1202 = vsel %vm1099, 0.0, %v1108
        %v1203 = vsel %vm1099, 0.0, %v1111
        %v1204 = vsel %vm1099, 0.0, %v1114
        %v1205 = vsel %vm1099, 0.0, %v1117
        %v1206 = vsel %vm1099, 0.0, %v1120
        %v1207 = vsel %vm1099, 0.0, %v1123
        %v1208 = vsel %vm1099, 0.0, %v1126
        %v1209 = vsel %vm1099, 0.0, %v1129
        %v1210 = vsel %vm1099, 0.0, %v1132
        %v1211 = vsel %vm1099, 0.0, %v1135
        %v1212 = vsel %vm1099, 0.0, %v1138
        %v1213 = vsel %vm1099, 0.0, %v1141
        %v1214 = vsel %vm1099, 0.0, %v1144
        %v1215 = vsel %vm1099, 0.0, %v1147
        %v1216 = vsel %vm1099, %v1100, 0.0
        %v1217 = vsel %vm1099, %v1103, 0.0
        %v1218 = vsel %vm1099, %v1106, 0.0
        %v1219 = vsel %vm1099, %v1109, 0.0
        %v1220 = vsel %vm1099, %v1112, 0.0
        %v1221 = vsel %vm1099, %v1115, 0.0
        %v1222 = vsel %vm1099, %v1118, 0.0
        %v1223 = vsel %vm1099, %v1121, 0.0
        %v1224 = vsel %vm1099, %v1124, 0.0
        %v1225 = vsel %vm1099, %v1127, 0.0
        %v1226 = vsel %vm1099, %v1130, 0.0
        %v1227 = vsel %vm1099, %v1133, 0.0
        %v1228 = vsel %vm1099, %v1136, 0.0
        %v1229 = vsel %vm1099, %v1139, 0.0
        %v1230 = vsel %vm1099, %v1142, 0.0
        %v1231 = vsel %vm1099, %v1145, 0.0
        %v1232 = vsel %vm1099, %v1148, 0.0
        %vm1265 = vcmask 1046528
        %v1266 = vrot.slane %v1199, 1
        %v1267 = vrot.slane %v1101, 1
        %v1268 = vsel %vm1265, %v1266, %v1267
        %v1269 = vrot.slane %v1216, 1
        %v1270 = vsel %vm1265, %v1267, %v1269
        %v1271 = vrot.slane %v1200, 1
        %v1272 = vrot.slane %v1104, 1
        %v1273 = vsel %vm1265, %v1271, %v1272
        %v1274 = vrot.slane %v1217, 1
        %v1275 = vsel %vm1265, %v1272, %v1274
        %v1276 = vrot.slane %v1201, 1
        %v1277 = vrot.slane %v1107, 1
        %v1278 = vsel %vm1265, %v1276, %v1277
        %v1279 = vrot.slane %v1218, 1
        %v1280 = vsel %vm1265, %v1277, %v1279
        %v1281 = vrot.slane %v1202, 1
        %v1282 = vrot.slane %v1110, 1
        %v1283 = vsel %vm1265, %v1281, %v1282
        %v1284 = vrot.slane %v1219, 1
        %v1285 = vsel %vm1265, %v1282, %v1284
        %v1286 = vrot.slane %v1203, 1
        %v1287 = vrot.slane %v1113, 1
        %v1288 = vsel %vm1265, %v1286, %v1287
        %v1289 = vrot.slane %v1220, 1
        %v1290 = vsel %vm1265, %v1287, %v1289
        %v1291 = vrot.slane %v1204, 1
        %v1292 = vrot.slane %v1116, 1
        %v1293 = vsel %vm1265, %v1291, %v1292
        %v1294 = vrot.slane %v1221, 1
        %v1295 = vsel %vm1265, %v1292, %v1294
        %v1296 = vrot.slane %v1205, 1
        %v1297 = vrot.slane %v1119, 1
        %v1298 = vsel %vm1265, %v1296, %v1297
        %v1299 = vrot.slane %v1222, 1
        %v1300 = vsel %vm1265, %v1297, %v1299
        %v1301 = vrot.slane %v1206, 1
        %v1302 = vrot.slane %v1122, 1
        %v1303 = vsel %vm1265, %v1301, %v1302
        %v1304 = vrot.slane %v1223, 1
        %v1305 = vsel %vm1265, %v1302, %v1304
        %v1306 = vrot.slane %v1207, 1
        %v1307 = vrot.slane %v1125, 1
        %v1308 = vsel %vm1265, %v1306, %v1307
        %v1309 = vrot.slane %v1224, 1
        %v1310 = vsel %vm1265, %v1307, %v1309
        %v1311 = vrot.slane %v1208, 1
        %v1312 = vrot.slane %v1128, 1
        %v1313 = vsel %vm1265, %v1311, %v1312
        %v1314 = vrot.slane %v1225, 1
        %v1315 = vsel %vm1265, %v1312, %v1314
        %v1316 = vrot.slane %v1209, 1
        %v1317 = vrot.slane %v1131, 1
        %v1318 = vsel %vm1265, %v1316, %v1317
        %v1319 = vrot.slane %v1226, 1
        %v1320 = vsel %vm1265, %v1317, %v1319
        %v1321 = vrot.slane %v1210, 1
        %v1322 = vrot.slane %v1134, 1
        %v1323 = vsel %vm1265, %v1321, %v1322
        %v1324 = vrot.slane %v1227, 1
        %v1325 = vsel %vm1265, %v1322, %v1324
        %v1326 = vrot.slane %v1211, 1
        %v1327 = vrot.slane %v1137, 1
        %v1328 = vsel %vm1265, %v1326, %v1327
        %v1329 = vrot.slane %v1228, 1
        %v1330 = vsel %vm1265, %v1327, %v1329
        %v1331 = vrot.slane %v1212, 1
        %v1332 = vrot.slane %v1140, 1
        %v1333 = vsel %vm1265, %v1331, %v1332
        %v1334 = vrot.slane %v1229, 1
        %v1335 = vsel %vm1265, %v1332, %v1334
        %v1336 = vrot.slane %v1213, 1
        %v1337 = vrot.slane %v1143, 1
        %v1338 = vsel %vm1265, %v1336, %v1337
        %v1339 = vrot.slane %v1230, 1
        %v1340 = vsel %vm1265, %v1337, %v1339
        %v1341 = vrot.slane %v1214, 1
        %v1342 = vrot.slane %v1146, 1
        %v1343 = vsel %vm1265, %v1341, %v1342
        %v1344 = vrot.slane %v1231, 1
        %v1345 = vsel %vm1265, %v1342, %v1344
        %1346 = vrot.lane.b32.xlu0 %v1268, 4
        %v1347 = vpop.permute.xlu0 %1346
        %1348 = vrot.lane.b32.xlu0 %v1270, 4
        %v1349 = vpop.permute.xlu0 %1348
        %1350 = vrot.lane.b32.xlu0 %v1273, 4
        %v1351 = vpop.permute.xlu0 %1350
        %1352 = vrot.lane.b32.xlu0 %v1275, 4
        %v1353 = vpop.permute.xlu0 %1352
        %1354 = vrot.lane.b32.xlu0 %v1278, 4
        %v1355 = vpop.permute.xlu0 %1354
        %1356 = vrot.lane.b32.xlu0 %v1280, 4
        %v1357 = vpop.permute.xlu0 %1356
        %1358 = vrot.lane.b32.xlu0 %v1283, 4
        %v1359 = vpop.permute.xlu0 %1358
        %1360 = vrot.lane.b32.xlu0 %v1285, 4
        %v1361 = vpop.permute.xlu0 %1360
        %1362 = vrot.lane.b32.xlu0 %v1288, 4
        %v1363 = vpop.permute.xlu0 %1362
        %1364 = vrot.lane.b32.xlu0 %v1290, 4
        %v1365 = vpop.permute.xlu0 %1364
        %1366 = vrot.lane.b32.xlu0 %v1293, 4
        %v1367 = vpop.permute.xlu0 %1366
        %1368 = vrot.lane.b32.xlu0 %v1295, 4
        %v1369 = vpop.permute.xlu0 %1368
        %1370 = vrot.lane.b32.xlu0 %v1298, 4
        %v1371 = vpop.permute.xlu0 %1370
        %1372 = vrot.lane.b32.xlu0 %v1300, 4
        %v1373 = vpop.permute.xlu0 %1372
        %1374 = vrot.lane.b32.xlu0 %v1303, 4
        %v1375 = vpop.permute.xlu0 %1374
        %1376 = vrot.lane.b32.xlu0 %v1305, 4
        %v1377 = vpop.permute.xlu0 %1376
        %1378 = vrot.lane.b32.xlu0 %v1308, 4
        %v1379 = vpop.permute.xlu0 %1378
        %1380 = vrot.lane.b32.xlu0 %v1310, 4
        %v1381 = vpop.permute.xlu0 %1380
        %1382 = vrot.lane.b32.xlu0 %v1313, 4
        %v1383 = vpop.permute.xlu0 %1382
        %1384 = vrot.lane.b32.xlu0 %v1315, 4
        %v1385 = vpop.permute.xlu0 %1384
        %1386 = vrot.lane.b32.xlu0 %v1318, 4
        %v1387 = vpop.permute.xlu0 %1386
        %1388 = vrot.lane.b32.xlu0 %v1320, 4
        %v1389 = vpop.permute.xlu0 %1388
        %1390 = vrot.lane.b32.xlu0 %v1323, 4
        %v1391 = vpop.permute.xlu0 %1390
        %1392 = vrot.lane.b32.xlu0 %v1325, 4
        %v1393 = vpop.permute.xlu0 %1392
        %1394 = vrot.lane.b32.xlu0 %v1328, 4
        %v1395 = vpop.permute.xlu0 %1394
        %1396 = vrot.lane.b32.xlu0 %v1330, 4
        %v1397 = vpop.permute.xlu0 %1396
        %1398 = vrot.lane.b32.xlu0 %v1333, 4
        %v1399 = vpop.permute.xlu0 %1398
        %1400 = vrot.lane.b32.xlu0 %v1335, 4
        %v1401 = vpop.permute.xlu0 %1400
        %1402 = vrot.lane.b32.xlu0 %v1338, 4
        %v1403 = vpop.permute.xlu0 %1402
        %1404 = vrot.lane.b32.xlu0 %v1340, 4
        %v1405 = vpop.permute.xlu0 %1404
        %1406 = vrot.lane.b32.xlu0 %v1343, 4
        %v1407 = vpop.permute.xlu0 %1406
        %1408 = vrot.lane.b32.xlu0 %v1345, 4
        %v1409 = vpop.permute.xlu0 %1408
        %vm1442 = vcmask 1045504
        %v1443 = vrot.slane %v1199, 2
        %v1444 = vrot.slane %v1101, 2
        %v1445 = vsel %vm1442, %v1443, %v1444
        %v1446 = vrot.slane %v1216, 2
        %v1447 = vsel %vm1442, %v1444, %v1446
        %v1448 = vrot.slane %v1200, 2
        %v1449 = vrot.slane %v1104, 2
        %v1450 = vsel %vm1442, %v1448, %v1449
        %v1451 = vrot.slane %v1217, 2
        %v1452 = vsel %vm1442, %v1449, %v1451
        %v1453 = vrot.slane %v1201, 2
        %v1454 = vrot.slane %v1107, 2
        %v1455 = vsel %vm1442, %v1453, %v1454
        %v1456 = vrot.slane %v1218, 2
        %v1457 = vsel %vm1442, %v1454, %v1456
        %v1458 = vrot.slane %v1202, 2
        %v1459 = vrot.slane %v1110, 2
        %v1460 = vsel %vm1442, %v1458, %v1459
        %v1461 = vrot.slane %v1219, 2
        %v1462 = vsel %vm1442, %v1459, %v1461
        %v1463 = vrot.slane %v1203, 2
        %v1464 = vrot.slane %v1113, 2
        %v1465 = vsel %vm1442, %v1463, %v1464
        %v1466 = vrot.slane %v1220, 2
        %v1467 = vsel %vm1442, %v1464, %v1466
        %v1468 = vrot.slane %v1204, 2
        %v1469 = vrot.slane %v1116, 2
        %v1470 = vsel %vm1442, %v1468, %v1469
        %v1471 = vrot.slane %v1221, 2
        %v1472 = vsel %vm1442, %v1469, %v1471
        %v1473 = vrot.slane %v1205, 2
        %v1474 = vrot.slane %v1119, 2
        %v1475 = vsel %vm1442, %v1473, %v1474
        %v1476 = vrot.slane %v1222, 2
        %v1477 = vsel %vm1442, %v1474, %v1476
        %v1478 = vrot.slane %v1206, 2
        %v1479 = vrot.slane %v1122, 2
        %v1480 = vsel %vm1442, %v1478, %v1479
        %v1481 = vrot.slane %v1223, 2
        %v1482 = vsel %vm1442, %v1479, %v1481
        %v1483 = vrot.slane %v1207, 2
        %v1484 = vrot.slane %v1125, 2
        %v1485 = vsel %vm1442, %v1483, %v1484
        %v1486 = vrot.slane %v1224, 2
        %v1487 = vsel %vm1442, %v1484, %v1486
        %v1488 = vrot.slane %v1208, 2
        %v1489 = vrot.slane %v1128, 2
        %v1490 = vsel %vm1442, %v1488, %v1489
        %v1491 = vrot.slane %v1225, 2
        %v1492 = vsel %vm1442, %v1489, %v1491
        %v1493 = vrot.slane %v1209, 2
        %v1494 = vrot.slane %v1131, 2
        %v1495 = vsel %vm1442, %v1493, %v1494
        %v1496 = vrot.slane %v1226, 2
        %v1497 = vsel %vm1442, %v1494, %v1496
        %v1498 = vrot.slane %v1210, 2
        %v1499 = vrot.slane %v1134, 2
        %v1500 = vsel %vm1442, %v1498, %v1499
        %v1501 = vrot.slane %v1227, 2
        %v1502 = vsel %vm1442, %v1499, %v1501
        %v1503 = vrot.slane %v1211, 2
        %v1504 = vrot.slane %v1137, 2
        %v1505 = vsel %vm1442, %v1503, %v1504
        %v1506 = vrot.slane %v1228, 2
        %v1507 = vsel %vm1442, %v1504, %v1506
        %v1508 = vrot.slane %v1212, 2
        %v1509 = vrot.slane %v1140, 2
        %v1510 = vsel %vm1442, %v1508, %v1509
        %v1511 = vrot.slane %v1229, 2
        %v1512 = vsel %vm1442, %v1509, %v1511
        %v1513 = vrot.slane %v1213, 2
        %v1514 = vrot.slane %v1143, 2
        %v1515 = vsel %vm1442, %v1513, %v1514
        %v1516 = vrot.slane %v1230, 2
        %v1517 = vsel %vm1442, %v1514, %v1516
        %v1518 = vrot.slane %v1214, 2
        %v1519 = vrot.slane %v1146, 2
        %v1520 = vsel %vm1442, %v1518, %v1519
        %v1521 = vrot.slane %v1231, 2
        %v1522 = vsel %vm1442, %v1519, %v1521
        %1523 = vrot.lane.b32.xlu0 %v1445, 8
        %v1524 = vpop.permute.xlu0 %1523
        %1525 = vrot.lane.b32.xlu0 %v1447, 8
        %v1526 = vpop.permute.xlu0 %1525
        %1527 = vrot.lane.b32.xlu0 %v1450, 8
        %v1528 = vpop.permute.xlu0 %1527
        %1529 = vrot.lane.b32.xlu0 %v1452, 8
        %v1530 = vpop.permute.xlu0 %1529
        %1531 = vrot.lane.b32.xlu0 %v1455, 8
        %v1532 = vpop.permute.xlu0 %1531
        %1533 = vrot.lane.b32.xlu0 %v1457, 8
        %v1534 = vpop.permute.xlu0 %1533
        %1535 = vrot.lane.b32.xlu0 %v1460, 8
        %v1536 = vpop.permute.xlu0 %1535
        %1537 = vrot.lane.b32.xlu0 %v1462, 8
        %v1538 = vpop.permute.xlu0 %1537
        %1539 = vrot.lane.b32.xlu0 %v1465, 8
        %v1540 = vpop.permute.xlu0 %1539
        %1541 = vrot.lane.b32.xlu0 %v1467, 8
        %v1542 = vpop.permute.xlu0 %1541
        %1543 = vrot.lane.b32.xlu0 %v1470, 8
        %v1544 = vpop.permute.xlu0 %1543
        %1545 = vrot.lane.b32.xlu0 %v1472, 8
        %v1546 = vpop.permute.xlu0 %1545
        %1547 = vrot.lane.b32.xlu0 %v1475, 8
        %v1548 = vpop.permute.xlu0 %1547
        %1549 = vrot.lane.b32.xlu0 %v1477, 8
        %v1550 = vpop.permute.xlu0 %1549
        %1551 = vrot.lane.b32.xlu0 %v1480, 8
        %v1552 = vpop.permute.xlu0 %1551
        %1553 = vrot.lane.b32.xlu0 %v1482, 8
        %v1554 = vpop.permute.xlu0 %1553
        %1555 = vrot.lane.b32.xlu0 %v1485, 8
        %v1556 = vpop.permute.xlu0 %1555
        %1557 = vrot.lane.b32.xlu0 %v1487, 8
        %v1558 = vpop.permute.xlu0 %1557
        %1559 = vrot.lane.b32.xlu0 %v1490, 8
        %v1560 = vpop.permute.xlu0 %1559
        %1561 = vrot.lane.b32.xlu0 %v1492, 8
        %v1562 = vpop.permute.xlu0 %1561
        %1563 = vrot.lane.b32.xlu0 %v1495, 8
        %v1564 = vpop.permute.xlu0 %1563
        %1565 = vrot.lane.b32.xlu0 %v1497, 8
        %v1566 = vpop.permute.xlu0 %1565
        %1567 = vrot.lane.b32.xlu0 %v1500, 8
        %v1568 = vpop.permute.xlu0 %1567
        %1569 = vrot.lane.b32.xlu0 %v1502, 8
        %v1570 = vpop.permute.xlu0 %1569
        %1571 = vrot.lane.b32.xlu0 %v1505, 8
        %v1572 = vpop.permute.xlu0 %1571
        %1573 = vrot.lane.b32.xlu0 %v1507, 8
        %v1574 = vpop.permute.xlu0 %1573
        %1575 = vrot.lane.b32.xlu0 %v1510, 8
        %v1576 = vpop.permute.xlu0 %1575
        %1577 = vrot.lane.b32.xlu0 %v1512, 8
        %v1578 = vpop.permute.xlu0 %1577
        %1579 = vrot.lane.b32.xlu0 %v1515, 8
        %v1580 = vpop.permute.xlu0 %1579
        %1581 = vrot.lane.b32.xlu0 %v1517, 8
        %v1582 = vpop.permute.xlu0 %1581
        %1583 = vrot.lane.b32.xlu0 %v1520, 8
        %v1584 = vpop.permute.xlu0 %1583
        %1585 = vrot.lane.b32.xlu0 %v1522, 8
        %v1586 = vpop.permute.xlu0 %1585
        %1620 = vrot.lane.b32.xlu0 %v1200, 12
        %v1621 = vpop.permute.xlu0 %1620
        %1622 = vrot.lane.b32.xlu0 %v1104, 12
        %v1623 = vpop.permute.xlu0 %1622
        %1624 = vrot.lane.b32.xlu0 %v1201, 12
        %v1625 = vpop.permute.xlu0 %1624
        %1626 = vrot.lane.b32.xlu0 %v1107, 12
        %v1627 = vpop.permute.xlu0 %1626
        %1628 = vrot.lane.b32.xlu0 %v1202, 12
        %v1629 = vpop.permute.xlu0 %1628
        %1630 = vrot.lane.b32.xlu0 %v1110, 12
        %v1631 = vpop.permute.xlu0 %1630
        %1632 = vrot.lane.b32.xlu0 %v1203, 12
        %v1633 = vpop.permute.xlu0 %1632
        %1634 = vrot.lane.b32.xlu0 %v1113, 12
        %v1635 = vpop.permute.xlu0 %1634
        %1636 = vrot.lane.b32.xlu0 %v1204, 12
        %v1637 = vpop.permute.xlu0 %1636
        %1638 = vrot.lane.b32.xlu0 %v1116, 12
        %v1639 = vpop.permute.xlu0 %1638
        %1640 = vrot.lane.b32.xlu0 %v1205, 12
        %v1641 = vpop.permute.xlu0 %1640
        %1642 = vrot.lane.b32.xlu0 %v1119, 12
        %v1643 = vpop.permute.xlu0 %1642
        %1644 = vrot.lane.b32.xlu0 %v1206, 12
        %v1645 = vpop.permute.xlu0 %1644
        %1646 = vrot.lane.b32.xlu0 %v1122, 12
        %v1647 = vpop.permute.xlu0 %1646
        %1648 = vrot.lane.b32.xlu0 %v1207, 12
        %v1649 = vpop.permute.xlu0 %1648
        %1650 = vrot.lane.b32.xlu0 %v1125, 12
        %v1651 = vpop.permute.xlu0 %1650
        %1652 = vrot.lane.b32.xlu0 %v1208, 12
        %v1653 = vpop.permute.xlu0 %1652
        %1654 = vrot.lane.b32.xlu0 %v1128, 12
        %v1655 = vpop.permute.xlu0 %1654
        %1656 = vrot.lane.b32.xlu0 %v1209, 12
        %v1657 = vpop.permute.xlu0 %1656
        %1658 = vrot.lane.b32.xlu0 %v1131, 12
        %v1659 = vpop.permute.xlu0 %1658
        %1660 = vrot.lane.b32.xlu0 %v1210, 12
        %v1661 = vpop.permute.xlu0 %1660
        %1662 = vrot.lane.b32.xlu0 %v1134, 12
        %v1663 = vpop.permute.xlu0 %1662
        %1664 = vrot.lane.b32.xlu0 %v1211, 12
        %v1665 = vpop.permute.xlu0 %1664
        %1666 = vrot.lane.b32.xlu0 %v1137, 12
        %v1667 = vpop.permute.xlu0 %1666
        %1668 = vrot.lane.b32.xlu0 %v1212, 12
        %v1669 = vpop.permute.xlu0 %1668
        %1670 = vrot.lane.b32.xlu0 %v1140, 12
        %v1671 = vpop.permute.xlu0 %1670
        %1672 = vrot.lane.b32.xlu0 %v1213, 12
        %v1673 = vpop.permute.xlu0 %1672
        %1674 = vrot.lane.b32.xlu0 %v1143, 12
        %v1675 = vpop.permute.xlu0 %1674
        %1676 = vrot.lane.b32.xlu0 %v1214, 12
        %v1677 = vpop.permute.xlu0 %1676
        %1678 = vrot.lane.b32.xlu0 %v1146, 12
        %v1679 = vpop.permute.xlu0 %1678
        %1680 = vrot.lane.b32.xlu0 %v1215, 12
        %v1681 = vpop.permute.xlu0 %1680
        %1682 = vrot.lane.b32.xlu0 %v1149, 12
        %v1683 = vpop.permute.xlu0 %1682
        %v1717 = vrot.slane %v1215, 1
        %v1718 = vrot.slane %v1149, 1
        %v1719 = vsel %vm1265, %v1717, %v1718
        %v1720 = vrot.slane %v1232, 1
        %v1721 = vsel %vm1265, %v1718, %v1720
        %1722 = vrot.lane.b32.xlu0 %v1273, 16
        %v1723 = vpop.permute.xlu0 %1722
        %1724 = vrot.lane.b32.xlu0 %v1275, 16
        %v1725 = vpop.permute.xlu0 %1724
        %1726 = vrot.lane.b32.xlu0 %v1278, 16
        %v1727 = vpop.permute.xlu0 %1726
        %1728 = vrot.lane.b32.xlu0 %v1280, 16
        %v1729 = vpop.permute.xlu0 %1728
        %1730 = vrot.lane.b32.xlu0 %v1283, 16
        %v1731 = vpop.permute.xlu0 %1730
        %1732 = vrot.lane.b32.xlu0 %v1285, 16
        %v1733 = vpop.permute.xlu0 %1732
        %1734 = vrot.lane.b32.xlu0 %v1288, 16
        %v1735 = vpop.permute.xlu0 %1734
        %1736 = vrot.lane.b32.xlu0 %v1290, 16
        %v1737 = vpop.permute.xlu0 %1736
        %1738 = vrot.lane.b32.xlu0 %v1293, 16
        %v1739 = vpop.permute.xlu0 %1738
        %1740 = vrot.lane.b32.xlu0 %v1295, 16
        %v1741 = vpop.permute.xlu0 %1740
        %1742 = vrot.lane.b32.xlu0 %v1298, 16
        %v1743 = vpop.permute.xlu0 %1742
        %1744 = vrot.lane.b32.xlu0 %v1300, 16
        %v1745 = vpop.permute.xlu0 %1744
        %1746 = vrot.lane.b32.xlu0 %v1303, 16
        %v1747 = vpop.permute.xlu0 %1746
        %1748 = vrot.lane.b32.xlu0 %v1305, 16
        %v1749 = vpop.permute.xlu0 %1748
        %1750 = vrot.lane.b32.xlu0 %v1308, 16
        %v1751 = vpop.permute.xlu0 %1750
        %1752 = vrot.lane.b32.xlu0 %v1310, 16
        %v1753 = vpop.permute.xlu0 %1752
        %1754 = vrot.lane.b32.xlu0 %v1313, 16
        %v1755 = vpop.permute.xlu0 %1754
        %1756 = vrot.lane.b32.xlu0 %v1315, 16
        %v1757 = vpop.permute.xlu0 %1756
        %1758 = vrot.lane.b32.xlu0 %v1318, 16
        %v1759 = vpop.permute.xlu0 %1758
        %1760 = vrot.lane.b32.xlu0 %v1320, 16
        %v1761 = vpop.permute.xlu0 %1760
        %1762 = vrot.lane.b32.xlu0 %v1323, 16
        %v1763 = vpop.permute.xlu0 %1762
        %1764 = vrot.lane.b32.xlu0 %v1325, 16
        %v1765 = vpop.permute.xlu0 %1764
        %1766 = vrot.lane.b32.xlu0 %v1328, 16
        %v1767 = vpop.permute.xlu0 %1766
        %1768 = vrot.lane.b32.xlu0 %v1330, 16
        %v1769 = vpop.permute.xlu0 %1768
        %1770 = vrot.lane.b32.xlu0 %v1333, 16
        %v1771 = vpop.permute.xlu0 %1770
        %1772 = vrot.lane.b32.xlu0 %v1335, 16
        %v1773 = vpop.permute.xlu0 %1772
        %1774 = vrot.lane.b32.xlu0 %v1338, 16
        %v1775 = vpop.permute.xlu0 %1774
        %1776 = vrot.lane.b32.xlu0 %v1340, 16
        %v1777 = vpop.permute.xlu0 %1776
        %1778 = vrot.lane.b32.xlu0 %v1343, 16
        %v1779 = vpop.permute.xlu0 %1778
        %1780 = vrot.lane.b32.xlu0 %v1345, 16
        %v1781 = vpop.permute.xlu0 %1780
        %1782 = vrot.lane.b32.xlu0 %v1719, 16
        %v1783 = vpop.permute.xlu0 %1782
        %1784 = vrot.lane.b32.xlu0 %v1721, 16
        %v1785 = vpop.permute.xlu0 %1784
        %v1818 = vrot.slane %v1215, 2
        %v1819 = vrot.slane %v1149, 2
        %v1820 = vsel %vm1442, %v1818, %v1819
        %v1821 = vrot.slane %v1232, 2
        %v1822 = vsel %vm1442, %v1819, %v1821
        %1823 = vrot.lane.b32.xlu0 %v1450, 20
        %v1824 = vpop.permute.xlu0 %1823
        %1825 = vrot.lane.b32.xlu0 %v1452, 20
        %v1826 = vpop.permute.xlu0 %1825
        %1827 = vrot.lane.b32.xlu0 %v1455, 20
        %v1828 = vpop.permute.xlu0 %1827
        %1829 = vrot.lane.b32.xlu0 %v1457, 20
        %v1830 = vpop.permute.xlu0 %1829
        %1831 = vrot.lane.b32.xlu0 %v1460, 20
        %v1832 = vpop.permute.xlu0 %1831
        %1833 = vrot.lane.b32.xlu0 %v1462, 20
        %v1834 = vpop.permute.xlu0 %1833
        %1835 = vrot.lane.b32.xlu0 %v1465, 20
        %v1836 = vpop.permute.xlu0 %1835
        %1837 = vrot.lane.b32.xlu0 %v1467, 20
        %v1838 = vpop.permute.xlu0 %1837
        %1839 = vrot.lane.b32.xlu0 %v1470, 20
        %v1840 = vpop.permute.xlu0 %1839
        %1841 = vrot.lane.b32.xlu0 %v1472, 20
        %v1842 = vpop.permute.xlu0 %1841
        %1843 = vrot.lane.b32.xlu0 %v1475, 20
        %v1844 = vpop.permute.xlu0 %1843
        %1845 = vrot.lane.b32.xlu0 %v1477, 20
        %v1846 = vpop.permute.xlu0 %1845
        %1847 = vrot.lane.b32.xlu0 %v1480, 20
        %v1848 = vpop.permute.xlu0 %1847
        %1849 = vrot.lane.b32.xlu0 %v1482, 20
        %v1850 = vpop.permute.xlu0 %1849
        %1851 = vrot.lane.b32.xlu0 %v1485, 20
        %v1852 = vpop.permute.xlu0 %1851
        %1853 = vrot.lane.b32.xlu0 %v1487, 20
        %v1854 = vpop.permute.xlu0 %1853
        %1855 = vrot.lane.b32.xlu0 %v1490, 20
        %v1856 = vpop.permute.xlu0 %1855
        %1857 = vrot.lane.b32.xlu0 %v1492, 20
        %v1858 = vpop.permute.xlu0 %1857
        %1859 = vrot.lane.b32.xlu0 %v1495, 20
        %v1860 = vpop.permute.xlu0 %1859
        %1861 = vrot.lane.b32.xlu0 %v1497, 20
        %v1862 = vpop.permute.xlu0 %1861
        %1863 = vrot.lane.b32.xlu0 %v1500, 20
        %v1864 = vpop.permute.xlu0 %1863
        %1865 = vrot.lane.b32.xlu0 %v1502, 20
        %v1866 = vpop.permute.xlu0 %1865
        %1867 = vrot.lane.b32.xlu0 %v1505, 20
        %v1868 = vpop.permute.xlu0 %1867
        %1869 = vrot.lane.b32.xlu0 %v1507, 20
        %v1870 = vpop.permute.xlu0 %1869
        %1871 = vrot.lane.b32.xlu0 %v1510, 20
        %v1872 = vpop.permute.xlu0 %1871
        %1873 = vrot.lane.b32.xlu0 %v1512, 20
        %v1874 = vpop.permute.xlu0 %1873
        %1875 = vrot.lane.b32.xlu0 %v1515, 20
        %v1876 = vpop.permute.xlu0 %1875
        %1877 = vrot.lane.b32.xlu0 %v1517, 20
        %v1878 = vpop.permute.xlu0 %1877
        %1879 = vrot.lane.b32.xlu0 %v1520, 20
        %v1880 = vpop.permute.xlu0 %1879
        %1881 = vrot.lane.b32.xlu0 %v1522, 20
        %v1882 = vpop.permute.xlu0 %1881
        %1883 = vrot.lane.b32.xlu0 %v1820, 20
        %v1884 = vpop.permute.xlu0 %1883
        %1885 = vrot.lane.b32.xlu0 %v1822, 20
        %v1886 = vpop.permute.xlu0 %1885
        %1919 = vrot.lane.b32.xlu0 %v1201, 24
        %v1920 = vpop.permute.xlu0 %1919
        %1921 = vrot.lane.b32.xlu0 %v1107, 24
        %v1922 = vpop.permute.xlu0 %1921
        %1923 = vrot.lane.b32.xlu0 %v1202, 24
        %v1924 = vpop.permute.xlu0 %1923
        %1925 = vrot.lane.b32.xlu0 %v1110, 24
        %v1926 = vpop.permute.xlu0 %1925
        %1927 = vrot.lane.b32.xlu0 %v1203, 24
        %v1928 = vpop.permute.xlu0 %1927
        %1929 = vrot.lane.b32.xlu0 %v1113, 24
        %v1930 = vpop.permute.xlu0 %1929
        %1931 = vrot.lane.b32.xlu0 %v1204, 24
        %v1932 = vpop.permute.xlu0 %1931
        %1933 = vrot.lane.b32.xlu0 %v1116, 24
        %v1934 = vpop.permute.xlu0 %1933
        %1935 = vrot.lane.b32.xlu0 %v1205, 24
        %v1936 = vpop.permute.xlu0 %1935
        %1937 = vrot.lane.b32.xlu0 %v1119, 24
        %v1938 = vpop.permute.xlu0 %1937
        %1939 = vrot.lane.b32.xlu0 %v1206, 24
        %v1940 = vpop.permute.xlu0 %1939
        %1941 = vrot.lane.b32.xlu0 %v1122, 24
        %v1942 = vpop.permute.xlu0 %1941
        %1943 = vrot.lane.b32.xlu0 %v1207, 24
        %v1944 = vpop.permute.xlu0 %1943
        %1945 = vrot.lane.b32.xlu0 %v1125, 24
        %v1946 = vpop.permute.xlu0 %1945
        %1947 = vrot.lane.b32.xlu0 %v1208, 24
        %v1948 = vpop.permute.xlu0 %1947
        %1949 = vrot.lane.b32.xlu0 %v1128, 24
        %v1950 = vpop.permute.xlu0 %1949
        %1951 = vrot.lane.b32.xlu0 %v1209, 24
        %v1952 = vpop.permute.xlu0 %1951
        %1953 = vrot.lane.b32.xlu0 %v1131, 24
        %v1954 = vpop.permute.xlu0 %1953
        %1955 = vrot.lane.b32.xlu0 %v1210, 24
        %v1956 = vpop.permute.xlu0 %1955
        %1957 = vrot.lane.b32.xlu0 %v1134, 24
        %v1958 = vpop.permute.xlu0 %1957
        %1959 = vrot.lane.b32.xlu0 %v1211, 24
        %v1960 = vpop.permute.xlu0 %1959
        %1961 = vrot.lane.b32.xlu0 %v1137, 24
        %v1962 = vpop.permute.xlu0 %1961
        %1963 = vrot.lane.b32.xlu0 %v1212, 24
        %v1964 = vpop.permute.xlu0 %1963
        %1965 = vrot.lane.b32.xlu0 %v1140, 24
        %v1966 = vpop.permute.xlu0 %1965
        %1967 = vrot.lane.b32.xlu0 %v1213, 24
        %v1968 = vpop.permute.xlu0 %1967
        %1969 = vrot.lane.b32.xlu0 %v1143, 24
        %v1970 = vpop.permute.xlu0 %1969
        %1971 = vrot.lane.b32.xlu0 %v1214, 24
        %v1972 = vpop.permute.xlu0 %1971
        %1973 = vrot.lane.b32.xlu0 %v1146, 24
        %v1974 = vpop.permute.xlu0 %1973
        %1975 = vrot.lane.b32.xlu0 %v1215, 24
        %v1976 = vpop.permute.xlu0 %1975
        %1977 = vrot.lane.b32.xlu0 %v1149, 24
        %v1978 = vpop.permute.xlu0 %1977
        %1979 = vrot.lane.b32.xlu0 %v1199, 24
        %v1980 = vpop.permute.xlu0 %1979
        %1981 = vrot.lane.b32.xlu0 %v1101, 24
        %v1982 = vpop.permute.xlu0 %1981
        %2015 = vrot.lane.b32.xlu0 %v1278, 28
        %v2016 = vpop.permute.xlu0 %2015
        %2017 = vrot.lane.b32.xlu0 %v1280, 28
        %v2018 = vpop.permute.xlu0 %2017
        %2019 = vrot.lane.b32.xlu0 %v1283, 28
        %v2020 = vpop.permute.xlu0 %2019
        %2021 = vrot.lane.b32.xlu0 %v1285, 28
        %v2022 = vpop.permute.xlu0 %2021
        %2023 = vrot.lane.b32.xlu0 %v1288, 28
        %v2024 = vpop.permute.xlu0 %2023
        %2025 = vrot.lane.b32.xlu0 %v1290, 28
        %v2026 = vpop.permute.xlu0 %2025
        %2027 = vrot.lane.b32.xlu0 %v1293, 28
        %v2028 = vpop.permute.xlu0 %2027
        %2029 = vrot.lane.b32.xlu0 %v1295, 28
        %v2030 = vpop.permute.xlu0 %2029
        %2031 = vrot.lane.b32.xlu0 %v1298, 28
        %v2032 = vpop.permute.xlu0 %2031
        %2033 = vrot.lane.b32.xlu0 %v1300, 28
        %v2034 = vpop.permute.xlu0 %2033
        %2035 = vrot.lane.b32.xlu0 %v1303, 28
        %v2036 = vpop.permute.xlu0 %2035
        %2037 = vrot.lane.b32.xlu0 %v1305, 28
        %v2038 = vpop.permute.xlu0 %2037
        %2039 = vrot.lane.b32.xlu0 %v1308, 28
        %v2040 = vpop.permute.xlu0 %2039
        %2041 = vrot.lane.b32.xlu0 %v1310, 28
        %v2042 = vpop.permute.xlu0 %2041
        %2043 = vrot.lane.b32.xlu0 %v1313, 28
        %v2044 = vpop.permute.xlu0 %2043
        %2045 = vrot.lane.b32.xlu0 %v1315, 28
        %v2046 = vpop.permute.xlu0 %2045
        %2047 = vrot.lane.b32.xlu0 %v1318, 28
        %v2048 = vpop.permute.xlu0 %2047
        %2049 = vrot.lane.b32.xlu0 %v1320, 28
        %v2050 = vpop.permute.xlu0 %2049
        %2051 = vrot.lane.b32.xlu0 %v1323, 28
        %v2052 = vpop.permute.xlu0 %2051
        %2053 = vrot.lane.b32.xlu0 %v1325, 28
        %v2054 = vpop.permute.xlu0 %2053
        %2055 = vrot.lane.b32.xlu0 %v1328, 28
        %v2056 = vpop.permute.xlu0 %2055
        %2057 = vrot.lane.b32.xlu0 %v1330, 28
        %v2058 = vpop.permute.xlu0 %2057
        %2059 = vrot.lane.b32.xlu0 %v1333, 28
        %v2060 = vpop.permute.xlu0 %2059
        %2061 = vrot.lane.b32.xlu0 %v1335, 28
        %v2062 = vpop.permute.xlu0 %2061
        %2063 = vrot.lane.b32.xlu0 %v1338, 28
        %v2064 = vpop.permute.xlu0 %2063
        %2065 = vrot.lane.b32.xlu0 %v1340, 28
        %v2066 = vpop.permute.xlu0 %2065
        %2067 = vrot.lane.b32.xlu0 %v1343, 28
        %v2068 = vpop.permute.xlu0 %2067
        %2069 = vrot.lane.b32.xlu0 %v1345, 28
        %v2070 = vpop.permute.xlu0 %2069
        %2071 = vrot.lane.b32.xlu0 %v1719, 28
        %v2072 = vpop.permute.xlu0 %2071
        %2073 = vrot.lane.b32.xlu0 %v1721, 28
        %v2074 = vpop.permute.xlu0 %2073
        %2075 = vrot.lane.b32.xlu0 %v1268, 28
        %v2076 = vpop.permute.xlu0 %2075
        %2077 = vrot.lane.b32.xlu0 %v1270, 28
        %v2078 = vpop.permute.xlu0 %2077
        %2111 = vrot.lane.b32.xlu0 %v1455, 32
        %v2112 = vpop.permute.xlu0 %2111
        %2113 = vrot.lane.b32.xlu0 %v1457, 32
        %v2114 = vpop.permute.xlu0 %2113
        %2115 = vrot.lane.b32.xlu0 %v1460, 32
        %v2116 = vpop.permute.xlu0 %2115
        %2117 = vrot.lane.b32.xlu0 %v1462, 32
        %v2118 = vpop.permute.xlu0 %2117
        %2119 = vrot.lane.b32.xlu0 %v1465, 32
        %v2120 = vpop.permute.xlu0 %2119
        %2121 = vrot.lane.b32.xlu0 %v1467, 32
        %v2122 = vpop.permute.xlu0 %2121
        %2123 = vrot.lane.b32.xlu0 %v1470, 32
        %v2124 = vpop.permute.xlu0 %2123
        %2125 = vrot.lane.b32.xlu0 %v1472, 32
        %v2126 = vpop.permute.xlu0 %2125
        %2127 = vrot.lane.b32.xlu0 %v1475, 32
        %v2128 = vpop.permute.xlu0 %2127
        %2129 = vrot.lane.b32.xlu0 %v1477, 32
        %v2130 = vpop.permute.xlu0 %2129
        %2131 = vrot.lane.b32.xlu0 %v1480, 32
        %v2132 = vpop.permute.xlu0 %2131
        %2133 = vrot.lane.b32.xlu0 %v1482, 32
        %v2134 = vpop.permute.xlu0 %2133
        %2135 = vrot.lane.b32.xlu0 %v1485, 32
        %v2136 = vpop.permute.xlu0 %2135
        %2137 = vrot.lane.b32.xlu0 %v1487, 32
        %v2138 = vpop.permute.xlu0 %2137
        %2139 = vrot.lane.b32.xlu0 %v1490, 32
        %v2140 = vpop.permute.xlu0 %2139
        %2141 = vrot.lane.b32.xlu0 %v1492, 32
        %v2142 = vpop.permute.xlu0 %2141
        %2143 = vrot.lane.b32.xlu0 %v1495, 32
        %v2144 = vpop.permute.xlu0 %2143
        %2145 = vrot.lane.b32.xlu0 %v1497, 32
        %v2146 = vpop.permute.xlu0 %2145
        %2147 = vrot.lane.b32.xlu0 %v1500, 32
        %v2148 = vpop.permute.xlu0 %2147
        %2149 = vrot.lane.b32.xlu0 %v1502, 32
        %v2150 = vpop.permute.xlu0 %2149
        %2151 = vrot.lane.b32.xlu0 %v1505, 32
        %v2152 = vpop.permute.xlu0 %2151
        %2153 = vrot.lane.b32.xlu0 %v1507, 32
        %v2154 = vpop.permute.xlu0 %2153
        %2155 = vrot.lane.b32.xlu0 %v1510, 32
        %v2156 = vpop.permute.xlu0 %2155
        %2157 = vrot.lane.b32.xlu0 %v1512, 32
        %v2158 = vpop.permute.xlu0 %2157
        %2159 = vrot.lane.b32.xlu0 %v1515, 32
        %v2160 = vpop.permute.xlu0 %2159
        %2161 = vrot.lane.b32.xlu0 %v1517, 32
        %v2162 = vpop.permute.xlu0 %2161
        %2163 = vrot.lane.b32.xlu0 %v1520, 32
        %v2164 = vpop.permute.xlu0 %2163
        %2165 = vrot.lane.b32.xlu0 %v1522, 32
        %v2166 = vpop.permute.xlu0 %2165
        %2167 = vrot.lane.b32.xlu0 %v1820, 32
        %v2168 = vpop.permute.xlu0 %2167
        %2169 = vrot.lane.b32.xlu0 %v1822, 32
        %v2170 = vpop.permute.xlu0 %2169
        %2171 = vrot.lane.b32.xlu0 %v1445, 32
        %v2172 = vpop.permute.xlu0 %2171
        %2173 = vrot.lane.b32.xlu0 %v1447, 32
        %v2174 = vpop.permute.xlu0 %2173
        %v2207 = vsel %vm708, %v1199, %v1347
        %v2208 = vsel %vm708, %v1101, %v1349
        %v2209 = vsel %vm708, %v1200, %v1351
        %v2210 = vsel %vm708, %v1104, %v1353
        %v2211 = vsel %vm708, %v1201, %v1355
        %v2212 = vsel %vm708, %v1107, %v1357
        %v2213 = vsel %vm708, %v1202, %v1359
        %v2214 = vsel %vm708, %v1110, %v1361
        %v2215 = vsel %vm708, %v1203, %v1363
        %v2216 = vsel %vm708, %v1113, %v1365
        %v2217 = vsel %vm708, %v1204, %v1367
        %v2218 = vsel %vm708, %v1116, %v1369
        %v2219 = vsel %vm708, %v1205, %v1371
        %v2220 = vsel %vm708, %v1119, %v1373
        %v2221 = vsel %vm708, %v1206, %v1375
        %v2222 = vsel %vm708, %v1122, %v1377
        %v2223 = vsel %vm708, %v1207, %v1379
        %v2224 = vsel %vm708, %v1125, %v1381
        %v2225 = vsel %vm708, %v1208, %v1383
        %v2226 = vsel %vm708, %v1128, %v1385
        %v2227 = vsel %vm708, %v1209, %v1387
        %v2228 = vsel %vm708, %v1131, %v1389
        %v2229 = vsel %vm708, %v1210, %v1391
        %v2230 = vsel %vm708, %v1134, %v1393
        %v2231 = vsel %vm708, %v1211, %v1395
        %v2232 = vsel %vm708, %v1137, %v1397
        %v2233 = vsel %vm708, %v1212, %v1399
        %v2234 = vsel %vm708, %v1140, %v1401
        %v2235 = vsel %vm708, %v1213, %v1403
        %v2236 = vsel %vm708, %v1143, %v1405
        %v2237 = vsel %vm708, %v1214, %v1407
        %v2238 = vsel %vm708, %v1146, %v1409
        %vm2239 = vcmask 64512
        %v2240 = vsel %vm2239, %v2207, %v1524
        %v2241 = vsel %vm2239, %v2208, %v1526
        %v2242 = vsel %vm2239, %v2209, %v1528
        %v2243 = vsel %vm2239, %v2210, %v1530
        %v2244 = vsel %vm2239, %v2211, %v1532
        %v2245 = vsel %vm2239, %v2212, %v1534
        %v2246 = vsel %vm2239, %v2213, %v1536
        %v2247 = vsel %vm2239, %v2214, %v1538
        %v2248 = vsel %vm2239, %v2215, %v1540
        %v2249 = vsel %vm2239, %v2216, %v1542
        %v2250 = vsel %vm2239, %v2217, %v1544
        %v2251 = vsel %vm2239, %v2218, %v1546
        %v2252 = vsel %vm2239, %v2219, %v1548
        %v2253 = vsel %vm2239, %v2220, %v1550
        %v2254 = vsel %vm2239, %v2221, %v1552
        %v2255 = vsel %vm2239, %v2222, %v1554
        %v2256 = vsel %vm2239, %v2223, %v1556
        %v2257 = vsel %vm2239, %v2224, %v1558
        %v2258 = vsel %vm2239, %v2225, %v1560
        %v2259 = vsel %vm2239, %v2226, %v1562
        %v2260 = vsel %vm2239, %v2227, %v1564
        %v2261 = vsel %vm2239, %v2228, %v1566
        %v2262 = vsel %vm2239, %v2229, %v1568
        %v2263 = vsel %vm2239, %v2230, %v1570
        %v2264 = vsel %vm2239, %v2231, %v1572
        %v2265 = vsel %vm2239, %v2232, %v1574
        %v2266 = vsel %vm2239, %v2233, %v1576
        %v2267 = vsel %vm2239, %v2234, %v1578
        %v2268 = vsel %vm2239, %v2235, %v1580
        %v2269 = vsel %vm2239, %v2236, %v1582
        %v2270 = vsel %vm2239, %v2237, %v1584
        %v2271 = vsel %vm2239, %v2238, %v1586
        %vm2272 = vcmask 97280
        %v2273 = vsel %vm2272, %v2240, %v1621
        %v2274 = vsel %vm2272, %v2241, %v1623
        %v2275 = vsel %vm2272, %v2242, %v1625
        %v2276 = vsel %vm2272, %v2243, %v1627
        %v2277 = vsel %vm2272, %v2244, %v1629
        %v2278 = vsel %vm2272, %v2245, %v1631
        %v2279 = vsel %vm2272, %v2246, %v1633
        %v2280 = vsel %vm2272, %v2247, %v1635
        %v2281 = vsel %vm2272, %v2248, %v1637
        %v2282 = vsel %vm2272, %v2249, %v1639
        %v2283 = vsel %vm2272, %v2250, %v1641
        %v2284 = vsel %vm2272, %v2251, %v1643
        %v2285 = vsel %vm2272, %v2252, %v1645
        %v2286 = vsel %vm2272, %v2253, %v1647
        %v2287 = vsel %vm2272, %v2254, %v1649
        %v2288 = vsel %vm2272, %v2255, %v1651
        %v2289 = vsel %vm2272, %v2256, %v1653
        %v2290 = vsel %vm2272, %v2257, %v1655
        %v2291 = vsel %vm2272, %v2258, %v1657
        %v2292 = vsel %vm2272, %v2259, %v1659
        %v2293 = vsel %vm2272, %v2260, %v1661
        %v2294 = vsel %vm2272, %v2261, %v1663
        %v2295 = vsel %vm2272, %v2262, %v1665
        %v2296 = vsel %vm2272, %v2263, %v1667
        %v2297 = vsel %vm2272, %v2264, %v1669
        %v2298 = vsel %vm2272, %v2265, %v1671
        %v2299 = vsel %vm2272, %v2266, %v1673
        %v2300 = vsel %vm2272, %v2267, %v1675
        %v2301 = vsel %vm2272, %v2268, %v1677
        %v2302 = vsel %vm2272, %v2269, %v1679
        %v2303 = vsel %vm2272, %v2270, %v1681
        %v2304 = vsel %vm2272, %v2271, %v1683
        %vm2305 = vcmask 130048
        %v2306 = vsel %vm2305, %v2273, %v1723
        %v2307 = vsel %vm2305, %v2274, %v1725
        %v2308 = vsel %vm2305, %v2275, %v1727
        %v2309 = vsel %vm2305, %v2276, %v1729
        %v2310 = vsel %vm2305, %v2277, %v1731
        %v2311 = vsel %vm2305, %v2278, %v1733
        %v2312 = vsel %vm2305, %v2279, %v1735
        %v2313 = vsel %vm2305, %v2280, %v1737
        %v2314 = vsel %vm2305, %v2281, %v1739
        %v2315 = vsel %vm2305, %v2282, %v1741
        %v2316 = vsel %vm2305, %v2283, %v1743
        %v2317 = vsel %vm2305, %v2284, %v1745
        %v2318 = vsel %vm2305, %v2285, %v1747
        %v2319 = vsel %vm2305, %v2286, %v1749
        %v2320 = vsel %vm2305, %v2287, %v1751
        %v2321 = vsel %vm2305, %v2288, %v1753
        %v2322 = vsel %vm2305, %v2289, %v1755
        %v2323 = vsel %vm2305, %v2290, %v1757
        %v2324 = vsel %vm2305, %v2291, %v1759
        %v2325 = vsel %vm2305, %v2292, %v1761
        %v2326 = vsel %vm2305, %v2293, %v1763
        %v2327 = vsel %vm2305, %v2294, %v1765
        %v2328 = vsel %vm2305, %v2295, %v1767
        %v2329 = vsel %vm2305, %v2296, %v1769
        %v2330 = vsel %vm2305, %v2297, %v1771
        %v2331 = vsel %vm2305, %v2298, %v1773
        %v2332 = vsel %vm2305, %v2299, %v1775
        %v2333 = vsel %vm2305, %v2300, %v1777
        %v2334 = vsel %vm2305, %v2301, %v1779
        %v2335 = vsel %vm2305, %v2302, %v1781
        %v2336 = vsel %vm2305, %v2303, %v1783
        %v2337 = vsel %vm2305, %v2304, %v1785
        %vm2338 = vcmask 162816
        %v2339 = vsel %vm2338, %v2306, %v1824
        %v2340 = vsel %vm2338, %v2307, %v1826
        %v2341 = vsel %vm2338, %v2308, %v1828
        %v2342 = vsel %vm2338, %v2309, %v1830
        %v2343 = vsel %vm2338, %v2310, %v1832
        %v2344 = vsel %vm2338, %v2311, %v1834
        %v2345 = vsel %vm2338, %v2312, %v1836
        %v2346 = vsel %vm2338, %v2313, %v1838
        %v2347 = vsel %vm2338, %v2314, %v1840
        %v2348 = vsel %vm2338, %v2315, %v1842
        %v2349 = vsel %vm2338, %v2316, %v1844
        %v2350 = vsel %vm2338, %v2317, %v1846
        %v2351 = vsel %vm2338, %v2318, %v1848
        %v2352 = vsel %vm2338, %v2319, %v1850
        %v2353 = vsel %vm2338, %v2320, %v1852
        %v2354 = vsel %vm2338, %v2321, %v1854
        %v2355 = vsel %vm2338, %v2322, %v1856
        %v2356 = vsel %vm2338, %v2323, %v1858
        %v2357 = vsel %vm2338, %v2324, %v1860
        %v2358 = vsel %vm2338, %v2325, %v1862
        %v2359 = vsel %vm2338, %v2326, %v1864
        %v2360 = vsel %vm2338, %v2327, %v1866
        %v2361 = vsel %vm2338, %v2328, %v1868
        %v2362 = vsel %vm2338, %v2329, %v1870
        %v2363 = vsel %vm2338, %v2330, %v1872
        %v2364 = vsel %vm2338, %v2331, %v1874
        %v2365 = vsel %vm2338, %v2332, %v1876
        %v2366 = vsel %vm2338, %v2333, %v1878
        %v2367 = vsel %vm2338, %v2334, %v1880
        %v2368 = vsel %vm2338, %v2335, %v1882
        %v2369 = vsel %vm2338, %v2336, %v1884
        %v2370 = vsel %vm2338, %v2337, %v1886
        %vm2371 = vcmask 195584
        %v2372 = vsel %vm2371, %v2339, %v1920
        %v2373 = vsel %vm2371, %v2340, %v1922
        %v2374 = vsel %vm2371, %v2341, %v1924
        %v2375 = vsel %vm2371, %v2342, %v1926
        %v2376 = vsel %vm2371, %v2343, %v1928
        %v2377 = vsel %vm2371, %v2344, %v1930
        %v2378 = vsel %vm2371, %v2345, %v1932
        %v2379 = vsel %vm2371, %v2346, %v1934
        %v2380 = vsel %vm2371, %v2347, %v1936
        %v2381 = vsel %vm2371, %v2348, %v1938
        %v2382 = vsel %vm2371, %v2349, %v1940
        %v2383 = vsel %vm2371, %v2350, %v1942
        %v2384 = vsel %vm2371, %v2351, %v1944
        %v2385 = vsel %vm2371, %v2352, %v1946
        %v2386 = vsel %vm2371, %v2353, %v1948
        %v2387 = vsel %vm2371, %v2354, %v1950
        %v2388 = vsel %vm2371, %v2355, %v1952
        %v2389 = vsel %vm2371, %v2356, %v1954
        %v2390 = vsel %vm2371, %v2357, %v1956
        %v2391 = vsel %vm2371, %v2358, %v1958
        %v2392 = vsel %vm2371, %v2359, %v1960
        %v2393 = vsel %vm2371, %v2360, %v1962
        %v2394 = vsel %vm2371, %v2361, %v1964
        %v2395 = vsel %vm2371, %v2362, %v1966
        %v2396 = vsel %vm2371, %v2363, %v1968
        %v2397 = vsel %vm2371, %v2364, %v1970
        %v2398 = vsel %vm2371, %v2365, %v1972
        %v2399 = vsel %vm2371, %v2366, %v1974
        %v2400 = vsel %vm2371, %v2367, %v1976
        %v2401 = vsel %vm2371, %v2368, %v1978
        %v2402 = vsel %vm2371, %v2369, %v1980
        %v2403 = vsel %vm2371, %v2370, %v1982
        %vm2404 = vcmask 228352
        %v2405 = vsel %vm2404, %v2372, %v2016
        %v2406 = vsel %vm2404, %v2373, %v2018
        %v2407 = vsel %vm2404, %v2374, %v2020
        %v2408 = vsel %vm2404, %v2375, %v2022
        %v2409 = vsel %vm2404, %v2376, %v2024
        %v2410 = vsel %vm2404, %v2377, %v2026
        %v2411 = vsel %vm2404, %v2378, %v2028
        %v2412 = vsel %vm2404, %v2379, %v2030
        %v2413 = vsel %vm2404, %v2380, %v2032
        %v2414 = vsel %vm2404, %v2381, %v2034
        %v2415 = vsel %vm2404, %v2382, %v2036
        %v2416 = vsel %vm2404, %v2383, %v2038
        %v2417 = vsel %vm2404, %v2384, %v2040
        %v2418 = vsel %vm2404, %v2385, %v2042
        %v2419 = vsel %vm2404, %v2386, %v2044
        %v2420 = vsel %vm2404, %v2387, %v2046
        %v2421 = vsel %vm2404, %v2388, %v2048
        %v2422 = vsel %vm2404, %v2389, %v2050
        %v2423 = vsel %vm2404, %v2390, %v2052
        %v2424 = vsel %vm2404, %v2391, %v2054
        %v2425 = vsel %vm2404, %v2392, %v2056
        %v2426 = vsel %vm2404, %v2393, %v2058
        %v2427 = vsel %vm2404, %v2394, %v2060
        %v2428 = vsel %vm2404, %v2395, %v2062
        %v2429 = vsel %vm2404, %v2396, %v2064
        %v2430 = vsel %vm2404, %v2397, %v2066
        %v2431 = vsel %vm2404, %v2398, %v2068
        %v2432 = vsel %vm2404, %v2399, %v2070
        %v2433 = vsel %vm2404, %v2400, %v2072
        %v2434 = vsel %vm2404, %v2401, %v2074
        %v2435 = vsel %vm2404, %v2402, %v2076
        %v2436 = vsel %vm2404, %v2403, %v2078
        %vm2437 = vcmask 261120
        %v2438 = vsel %vm2437, %v2405, %v2112
        %v2439 = vsel %vm2437, %v2406, %v2114
        %v2440 = vsel %vm2437, %v2407, %v2116
        %v2441 = vsel %vm2437, %v2408, %v2118
        %v2442 = vsel %vm2437, %v2409, %v2120
        %v2443 = vsel %vm2437, %v2410, %v2122
        %v2444 = vsel %vm2437, %v2411, %v2124
        %v2445 = vsel %vm2437, %v2412, %v2126
        %v2446 = vsel %vm2437, %v2413, %v2128
        %v2447 = vsel %vm2437, %v2414, %v2130
        %v2448 = vsel %vm2437, %v2415, %v2132
        %v2449 = vsel %vm2437, %v2416, %v2134
        %v2450 = vsel %vm2437, %v2417, %v2136
        %v2451 = vsel %vm2437, %v2418, %v2138
        %v2452 = vsel %vm2437, %v2419, %v2140
        %v2453 = vsel %vm2437, %v2420, %v2142
        %v2454 = vsel %vm2437, %v2421, %v2144
        %v2455 = vsel %vm2437, %v2422, %v2146
        %v2456 = vsel %vm2437, %v2423, %v2148
        %v2457 = vsel %vm2437, %v2424, %v2150
        %v2458 = vsel %vm2437, %v2425, %v2152
        %v2459 = vsel %vm2437, %v2426, %v2154
        %v2460 = vsel %vm2437, %v2427, %v2156
        %v2461 = vsel %vm2437, %v2428, %v2158
        %v2462 = vsel %vm2437, %v2429, %v2160
        %v2463 = vsel %vm2437, %v2430, %v2162
        %v2464 = vsel %vm2437, %v2431, %v2164
        %v2465 = vsel %vm2437, %v2432, %v2166
        %v2466 = vsel %vm2437, %v2433, %v2168
        %v2467 = vsel %vm2437, %v2434, %v2170
        %v2468 = vsel %vm2437, %v2435, %v2172
        %v2469 = vsel %vm2437, %v2436, %v2174
        %v2470 = vld [vmem:[%s3] sm:$0xff]
        %v2471 = vld [vmem:[%s3 + $0x8] sm:$0xff]
        %v2472 = vld [vmem:[%s3 + $0x10] sm:$0xff]
        %v2473 = vld [vmem:[%s3 + $0x18] sm:$0xff]
        %v2474 = vld [vmem:[%s3 + $0x20] sm:$0xf]
        %v2475 = vld [vmem:[%s4] sm:$0x1]
        %v2477 = vlaneseq
        %v2478 = vshrl.u32 %v2477, 7
        %v2479 = vsub.s32 0, %v2478
        %v2480 = vrot.slane %v2475, %v2479
        %vm2482 = vcmask 293888
        %v2484 = vsel %vm2482, %v2438, 0
        %v2487 = vsel %vm2482, %v2439, 0
        %v2490 = vsel %vm2482, %v2440, 0
        %v2493 = vsel %vm2482, %v2441, 0
        %v2496 = vsel %vm2482, %v2442, 0
        %v2499 = vsel %vm2482, %v2443, 0
        %v2502 = vsel %vm2482, %v2444, 0
        %v2505 = vsel %vm2482, %v2445, 0
        %v2508 = vsel %vm2482, %v2446, 0
        %v2511 = vsel %vm2482, %v2447, 0
        %v2514 = vsel %vm2482, %v2448, 0
        %v2517 = vsel %vm2482, %v2449, 0
        %v2520 = vsel %vm2482, %v2450, 0
        %v2523 = vsel %vm2482, %v2451, 0
        %v2526 = vsel %vm2482, %v2452, 0
        %v2529 = vsel %vm2482, %v2453, 0
        %v2532 = vsel %vm2482, %v2454, 0
        %v2535 = vsel %vm2482, %v2455, 0
        %v2538 = vsel %vm2482, %v2456, 0
        %v2541 = vsel %vm2482, %v2457, 0
        %v2544 = vsel %vm2482, %v2458, 0
        %v2547 = vsel %vm2482, %v2459, 0
        %v2550 = vsel %vm2482, %v2460, 0
        %v2553 = vsel %vm2482, %v2461, 0
        %v2556 = vsel %vm2482, %v2462, 0
        %v2559 = vsel %vm2482, %v2463, 0
        %v2562 = vsel %vm2482, %v2464, 0
        %v2565 = vsel %vm2482, %v2465, 0
        %v2568 = vsel %vm2482, %v2466, 0
        %v2571 = vsel %vm2482, %v2467, 0
        %v2574 = vsel %vm2482, %v2468, 0
        %v2577 = vsel %vm2482, %v2469, 0
        %v2580 = vsel %vm805, %v2474, 0
        %2582 = vmatprep.subr.mxu0 0.0
        %2583 = vmatpush1.msra.mxu0 %v2470
        %2584 = vmatprep.subr.mxu0 0.0
        %2585 = vmatpush1.msra.mxu0 %v2471
        %2586 = vmatprep.subr.mxu0 0.0
        %2587 = vmatpush1.msra.mxu0 %v2472
        %2588 = vmatprep.subr.mxu0 0.0
        %2589 = vmatpush1.msra.mxu0 %v2473
        %2590 = vmatprep.subr.mxu0 0.0
        %2591 = vmatpush1.msra.mxu0 %v2580
        %2592 = vmatprep.subr.mxu0 0.0
        %2593 = vmatpush1.msra.mxu0 0.0
        %2594 = vmatprep.subr.mxu0 0.0
        %2595 = vmatpush1.msra.mxu0 0.0
        %2596 = vmatprep.subr.mxu0 0.0
        %2597 = vmatpush1.msra.mxu0 0.0
        %2598 = vmatprep.subr.mxu0 0.0
        %2599 = vmatpush1.msra.mxu0 0.0
        %2600 = vmatprep.subr.mxu0 0.0
        %2601 = vmatpush1.msra.mxu0 0.0
        %2602 = vmatprep.subr.mxu0 0.0
        %2603 = vmatpush1.msra.mxu0 0.0
        %2604 = vmatprep.subr.mxu0 0.0
        %2605 = vmatpush1.msra.mxu0 0.0
        %2606 = vmatprep.subr.mxu0 0.0
        %2607 = vmatpush1.msra.mxu0 0.0
        %2608 = vmatprep.subr.mxu0 0.0
        %2609 = vmatpush1.msra.mxu0 0.0
        %2610 = vmatprep.subr.mxu0 0.0
        %2611 = vmatpush1.msra.mxu0 0.0
        %2612 = vmatprep.subr.mxu0 0.0
        %2613 = vmatpush1.msra.mxu0 0.0
        %2614 = vmatprep.subr.mxu0 0.0
        %2615 = vmatpush1.msra.mxu0 0.0
        %2616 = vmatprep.subr.mxu0 0.0
        %2617 = vmatpush1.msra.mxu0 0.0
        %2618 = vmatprep.subr.mxu0 0.0
        %2619 = vmatpush1.msra.mxu0 0.0
        %2620 = vmatprep.subr.mxu0 0.0
        %2621 = vmatpush1.msra.mxu0 0.0
        %2622 = vmatprep.subr.mxu0 0.0
        %2623 = vmatpush1.msra.mxu0 0.0
        %2624 = vmatprep.subr.mxu0 0.0
        %2625 = vmatpush1.msra.mxu0 0.0
        %2626 = vmatprep.subr.mxu0 0.0
        %2627 = vmatpush1.msra.mxu0 0.0
        %2628 = vmatprep.subr.mxu0 0.0
        %2629 = vmatpush1.msra.mxu0 0.0
        %2630 = vmatprep.subr.mxu0 0.0
        %2631 = vmatpush1.msra.mxu0 0.0
        %2632 = vmatprep.subr.mxu0 0.0
        %2633 = vmatpush1.msra.mxu0 0.0
        %2634 = vmatprep.subr.mxu0 0.0
        %2635 = vmatpush1.msra.mxu0 0.0
        %2636 = vmatprep.subr.mxu0 0.0
        %2637 = vmatpush1.msra.mxu0 0.0
        %2638 = vmatprep.subr.mxu0 0.0
        %2639 = vmatpush1.msra.mxu0 0.0
        %2640 = vmatprep.subr.mxu0 0.0
        %2641 = vmatpush1.msra.mxu0 0.0
        %2642 = vmatprep.subr.mxu0 0.0
        %2643 = vmatpush1.msra.mxu0 0.0
        %2644 = vmatprep.subr.mxu0 0.0
        %2645 = vmatpush1.msra.mxu0 0.0
        %2646 = vmatprep.mubr.f32.mxu0 0.0
        %2647 = vmatmul.mubr.f32.gmra.mrb[0].mxu0 %v2484
        %v2648 = vpop.f32.mrb[0].mxu0
        %v2649 = vadd.f32 %v2480, %v2648
        %v2650 = vpop.f32.mrb[0].mxu0
        %2651 = vmatprep.mubr.f32.mxu0 0.0
        %2652 = vmatmul.mubr.f32.gmra.mrb[0].mxu0 %v2487
        %v2653 = vpop.f32.mrb[0].mxu0
        %v2654 = vadd.f32 %v2480, %v2653
        %v2655 = vpop.f32.mrb[0].mxu0
        %2656 = vmatprep.mubr.f32.mxu0 0.0
        %2657 = vmatmul.mubr.f32.gmra.mrb[0].mxu0 %v2490
        %v2658 = vpop.f32.mrb[0].mxu0
        %v2659 = vadd.f32 %v2480, %v2658
        %v2660 = vpop.f32.mrb[0].mxu0
        %2661 = vmatprep.mubr.f32.mxu0 0.0
        %2662 = vmatmul.mubr.f32.gmra.mrb[0].mxu0 %v2493
        %v2663 = vpop.f32.mrb[0].mxu0
        %v2664 = vadd.f32 %v2480, %v2663
        %v2665 = vpop.f32.mrb[0].mxu0
        %2666 = vmatprep.mubr.f32.mxu0 0.0
        %2667 = vmatmul.mubr.f32.gmra.mrb[0].mxu0 %v2496
        %v2668 = vpop.f32.mrb[0].mxu0
        %v2669 = vadd.f32 %v2480, %v2668
        %v2670 = vpop.f32.mrb[0].mxu0
        %2671 = vmatprep.mubr.f32.mxu0 0.0
        %2672 = vmatmul.mubr.f32.gmra.mrb[0].mxu0 %v2499
        %v2673 = vpop.f32.mrb[0].mxu0
        %v2674 = vadd.f32 %v2480, %v2673
        %v2675 = vpop.f32.mrb[0].mxu0
        %2676 = vmatprep.mubr.f32.mxu0 0.0
        %2677 = vmatmul.mubr.f32.gmra.mrb[0].mxu0 %v2502
        %v2678 = vpop.f32.mrb[0].mxu0
        %v2679 = vadd.f32 %v2480, %v2678
        %v2680 = vpop.f32.mrb[0].mxu0
        %2681 = vmatprep.mubr.f32.mxu0 0.0
        %2682 = vmatmul.mubr.f32.gmra.mrb[0].mxu0 %v2505
        %v2683 = vpop.f32.mrb[0].mxu0
        %v2684 = vadd.f32 %v2480, %v2683
        %v2685 = vpop.f32.mrb[0].mxu0
        %2686 = vmatprep.mubr.f32.mxu0 0.0
        %2687 = vmatmul.mubr.f32.gmra.mrb[0].mxu0 %v2508
        %v2688 = vpop.f32.mrb[0].mxu0
        %v2689 = vadd.f32 %v2480, %v2688
        %v2690 = vpop.f32.mrb[0].mxu0
        %2691 = vmatprep.mubr.f32.mxu0 0.0
        %2692 = vmatmul.mubr.f32.gmra.mrb[0].mxu0 %v2511
        %v2693 = vpop.f32.mrb[0].mxu0
        %v2694 = vadd.f32 %v2480, %v2693
        %v2695 = vpop.f32.mrb[0].mxu0
        %2696 = vmatprep.mubr.f32.mxu0 0.0
        %2697 = vmatmul.mubr.f32.gmra.mrb[0].mxu0 %v2514
        %v2698 = vpop.f32.mrb[0].mxu0
        %v2699 = vadd.f32 %v2480, %v2698
        %v2700 = vpop.f32.mrb[0].mxu0
        %2701 = vmatprep.mubr.f32.mxu0 0.0
        %2702 = vmatmul.mubr.f32.gmra.mrb[0].mxu0 %v2517
        %v2703 = vpop.f32.mrb[0].mxu0
        %v2704 = vadd.f32 %v2480, %v2703
        %v2705 = vpop.f32.mrb[0].mxu0
        %2706 = vmatprep.mubr.f32.mxu0 0.0
        %2707 = vmatmul.mubr.f32.gmra.mrb[0].mxu0 %v2520
        %v2708 = vpop.f32.mrb[0].mxu0
        %v2709 = vadd.f32 %v2480, %v2708
        %v2710 = vpop.f32.mrb[0].mxu0
        %2711 = vmatprep.mubr.f32.mxu0 0.0
        %2712 = vmatmul.mubr.f32.gmra.mrb[0].mxu0 %v2523
        %v2713 = vpop.f32.mrb[0].mxu0
        %v2714 = vadd.f32 %v2480, %v2713
        %v2715 = vpop.f32.mrb[0].mxu0
        %2716 = vmatprep.mubr.f32.mxu0 0.0
        %2717 = vmatmul.mubr.f32.gmra.mrb[0].mxu0 %v2526
        %v2718 = vpop.f32.mrb[0].mxu0
        %v2719 = vadd.f32 %v2480, %v2718
        %v2720 = vpop.f32.mrb[0].mxu0
        %2721 = vmatprep.mubr.f32.mxu0 0.0
        %2722 = vmatmul.mubr.f32.gmra.mrb[0].mxu0 %v2529
        %v2723 = vpop.f32.mrb[0].mxu0
        %v2724 = vadd.f32 %v2480, %v2723
        %v2725 = vpop.f32.mrb[0].mxu0
        %2726 = vmatprep.mubr.f32.mxu0 0.0
        %2727 = vmatmul.mubr.f32.gmra.mrb[0].mxu0 %v2532
        %v2728 = vpop.f32.mrb[0].mxu0
        %v2729 = vadd.f32 %v2480, %v2728
        %v2730 = vpop.f32.mrb[0].mxu0
        %2731 = vmatprep.mubr.f32.mxu0 0.0
        %2732 = vmatmul.mubr.f32.gmra.mrb[0].mxu0 %v2535
        %v2733 = vpop.f32.mrb[0].mxu0
        %v2734 = vadd.f32 %v2480, %v2733
        %v2735 = vpop.f32.mrb[0].mxu0
        %2736 = vmatprep.mubr.f32.mxu0 0.0
        %2737 = vmatmul.mubr.f32.gmra.mrb[0].mxu0 %v2538
        %v2738 = vpop.f32.mrb[0].mxu0
        %v2739 = vadd.f32 %v2480, %v2738
        %v2740 = vpop.f32.mrb[0].mxu0
        %2741 = vmatprep.mubr.f32.mxu0 0.0
        %2742 = vmatmul.mubr.f32.gmra.mrb[0].mxu0 %v2541
        %v2743 = vpop.f32.mrb[0].mxu0
        %v2744 = vadd.f32 %v2480, %v2743
        %v2745 = vpop.f32.mrb[0].mxu0
        %2746 = vmatprep.mubr.f32.mxu0 0.0
        %2747 = vmatmul.mubr.f32.gmra.mrb[0].mxu0 %v2544
        %v2748 = vpop.f32.mrb[0].mxu0
        %v2749 = vadd.f32 %v2480, %v2748
        %v2750 = vpop.f32.mrb[0].mxu0
        %2751 = vmatprep.mubr.f32.mxu0 0.0
        %2752 = vmatmul.mubr.f32.gmra.mrb[0].mxu0 %v2547
        %v2753 = vpop.f32.mrb[0].mxu0
        %v2754 = vadd.f32 %v2480, %v2753
        %v2755 = vpop.f32.mrb[0].mxu0
        %2756 = vmatprep.mubr.f32.mxu0 0.0
        %2757 = vmatmul.mubr.f32.gmra.mrb[0].mxu0 %v2550
        %v2758 = vpop.f32.mrb[0].mxu0
        %v2759 = vadd.f32 %v2480, %v2758
        %v2760 = vpop.f32.mrb[0].mxu0
        %2761 = vmatprep.mubr.f32.mxu0 0.0
        %2762 = vmatmul.mubr.f32.gmra.mrb[0].mxu0 %v2553
        %v2763 = vpop.f32.mrb[0].mxu0
        %v2764 = vadd.f32 %v2480, %v2763
        %v2765 = vpop.f32.mrb[0].mxu0
        %2766 = vmatprep.mubr.f32.mxu0 0.0
        %2767 = vmatmul.mubr.f32.gmra.mrb[0].mxu0 %v2556
        %v2768 = vpop.f32.mrb[0].mxu0
        %v2769 = vadd.f32 %v2480, %v2768
        %v2770 = vpop.f32.mrb[0].mxu0
        %2771 = vmatprep.mubr.f32.mxu0 0.0
        %2772 = vmatmul.mubr.f32.gmra.mrb[0].mxu0 %v2559
        %v2773 = vpop.f32.mrb[0].mxu0
        %v2774 = vadd.f32 %v2480, %v2773
        %v2775 = vpop.f32.mrb[0].mxu0
        %2776 = vmatprep.mubr.f32.mxu0 0.0
        %2777 = vmatmul.mubr.f32.gmra.mrb[0].mxu0 %v2562
        %v2778 = vpop.f32.mrb[0].mxu0
        %v2779 = vadd.f32 %v2480, %v2778
        %v2780 = vpop.f32.mrb[0].mxu0
        %2781 = vmatprep.mubr.f32.mxu0 0.0
        %2782 = vmatmul.mubr.f32.gmra.mrb[0].mxu0 %v2565
        %v2783 = vpop.f32.mrb[0].mxu0
        %v2784 = vadd.f32 %v2480, %v2783
        %v2785 = vpop.f32.mrb[0].mxu0
        %2786 = vmatprep.mubr.f32.mxu0 0.0
        %2787 = vmatmul.mubr.f32.gmra.mrb[0].mxu0 %v2568
        %v2788 = vpop.f32.mrb[0].mxu0
        %v2789 = vadd.f32 %v2480, %v2788
        %v2790 = vpop.f32.mrb[0].mxu0
        %2791 = vmatprep.mubr.f32.mxu0 0.0
        %2792 = vmatmul.mubr.f32.gmra.mrb[0].mxu0 %v2571
        %v2793 = vpop.f32.mrb[0].mxu0
        %v2794 = vadd.f32 %v2480, %v2793
        %v2795 = vpop.f32.mrb[0].mxu0
        %2796 = vmatprep.mubr.f32.mxu0 0.0
        %2797 = vmatmul.mubr.f32.gmra.mrb[0].mxu0 %v2574
        %v2798 = vpop.f32.mrb[0].mxu0
        %v2799 = vadd.f32 %v2480, %v2798
        %v2800 = vpop.f32.mrb[0].mxu0
        %2801 = vmatprep.mubr.f32.mxu0 0.0
        %2802 = vmatmul.mubr.f32.gmra.mrb[0].mxu0 %v2577
        %v2803 = vpop.f32.mrb[0].mxu0
        %v2804 = vadd.f32 %v2480, %v2803
        %v2805 = vpop.f32.mrb[0].mxu0
        %2806 = vdwg.mxu0
        %v2807 = vmul.f32 %v2649, 0.01
        %v2808 = vmul.f32 %v2654, 0.01
        %v2809 = vmul.f32 %v2659, 0.01
        %v2810 = vmul.f32 %v2664, 0.01
        %v2811 = vmul.f32 %v2669, 0.01
        %v2812 = vmul.f32 %v2674, 0.01
        %v2813 = vmul.f32 %v2679, 0.01
        %v2814 = vmul.f32 %v2684, 0.01
        %v2815 = vmul.f32 %v2689, 0.01
        %v2816 = vmul.f32 %v2694, 0.01
        %v2817 = vmul.f32 %v2699, 0.01
        %v2818 = vmul.f32 %v2704, 0.01
        %v2819 = vmul.f32 %v2709, 0.01
        %v2820 = vmul.f32 %v2714, 0.01
        %v2821 = vmul.f32 %v2719, 0.01
        %v2822 = vmul.f32 %v2724, 0.01
        %v2823 = vmul.f32 %v2729, 0.01
        %v2824 = vmul.f32 %v2734, 0.01
        %v2825 = vmul.f32 %v2739, 0.01
        %v2826 = vmul.f32 %v2744, 0.01
        %v2827 = vmul.f32 %v2749, 0.01
        %v2828 = vmul.f32 %v2754, 0.01
        %v2829 = vmul.f32 %v2759, 0.01
        %v2830 = vmul.f32 %v2764, 0.01
        %v2831 = vmul.f32 %v2769, 0.01
        %v2832 = vmul.f32 %v2774, 0.01
        %v2833 = vmul.f32 %v2779, 0.01
        %v2834 = vmul.f32 %v2784, 0.01
        %v2835 = vmul.f32 %v2789, 0.01
        %v2836 = vmul.f32 %v2794, 0.01
        %v2837 = vmul.f32 %v2799, 0.01
        %v2838 = vmul.f32 %v2804, 0.01
        %v2839 = vmax.f32 %v2649, %v2807
        %v2840 = vmax.f32 %v2654, %v2808
        %v2841 = vmax.f32 %v2659, %v2809
        %v2842 = vmax.f32 %v2664, %v2810
        %v2843 = vmax.f32 %v2669, %v2811
        %v2844 = vmax.f32 %v2674, %v2812
        %v2845 = vmax.f32 %v2679, %v2813
        %v2846 = vmax.f32 %v2684, %v2814
        %v2847 = vmax.f32 %v2689, %v2815
        %v2848 = vmax.f32 %v2694, %v2816
        %v2849 = vmax.f32 %v2699, %v2817
        %v2850 = vmax.f32 %v2704, %v2818
        %v2851 = vmax.f32 %v2709, %v2819
        %v2852 = vmax.f32 %v2714, %v2820
        %v2853 = vmax.f32 %v2719, %v2821
        %v2854 = vmax.f32 %v2724, %v2822
        %v2855 = vmax.f32 %v2729, %v2823
        %v2856 = vmax.f32 %v2734, %v2824
        %v2857 = vmax.f32 %v2739, %v2825
        %v2858 = vmax.f32 %v2744, %v2826
        %v2859 = vmax.f32 %v2749, %v2827
        %v2860 = vmax.f32 %v2754, %v2828
        %v2861 = vmax.f32 %v2759, %v2829
        %v2862 = vmax.f32 %v2764, %v2830
        %v2863 = vmax.f32 %v2769, %v2831
        %v2864 = vmax.f32 %v2774, %v2832
        %v2865 = vmax.f32 %v2779, %v2833
        %v2866 = vmax.f32 %v2784, %v2834
        %v2867 = vmax.f32 %v2789, %v2835
        %v2868 = vmax.f32 %v2794, %v2836
        %v2869 = vmax.f32 %v2799, %v2837
        %v2870 = vmax.f32 %v2804, %v2838
        %v2871 = vld [vmem:[%s11] sm:$0x1]
        %v2873 = vlaneseq
        %v2874 = vshrl.u32 %v2873, 7
        %v2875 = vsub.s32 0, %v2874
        %v2876 = vrot.slane %v2871, %v2875
        %v2878 = vmul.f32 %v2839, %v2876
        %v2879 = vmul.f32 %v2840, %v2876
        %v2880 = vmul.f32 %v2841, %v2876
        %v2881 = vmul.f32 %v2842, %v2876
        %v2882 = vmul.f32 %v2843, %v2876
        %v2883 = vmul.f32 %v2844, %v2876
        %v2884 = vmul.f32 %v2845, %v2876
        %v2885 = vmul.f32 %v2846, %v2876
        %v2886 = vmul.f32 %v2847, %v2876
        %v2887 = vmul.f32 %v2848, %v2876
        %v2888 = vmul.f32 %v2849, %v2876
        %v2889 = vmul.f32 %v2850, %v2876
        %v2890 = vmul.f32 %v2851, %v2876
        %v2891 = vmul.f32 %v2852, %v2876
        %v2892 = vmul.f32 %v2853, %v2876
        %v2893 = vmul.f32 %v2854, %v2876
        %v2894 = vmul.f32 %v2855, %v2876
        %v2895 = vmul.f32 %v2856, %v2876
        %v2896 = vmul.f32 %v2857, %v2876
        %v2897 = vmul.f32 %v2858, %v2876
        %v2898 = vmul.f32 %v2859, %v2876
        %v2899 = vmul.f32 %v2860, %v2876
        %v2900 = vmul.f32 %v2861, %v2876
        %v2901 = vmul.f32 %v2862, %v2876
        %v2902 = vmul.f32 %v2863, %v2876
        %v2903 = vmul.f32 %v2864, %v2876
        %v2904 = vmul.f32 %v2865, %v2876
        %v2905 = vmul.f32 %v2866, %v2876
        %v2906 = vmul.f32 %v2867, %v2876
        %v2907 = vmul.f32 %v2868, %v2876
        %v2908 = vmul.f32 %v2869, %v2876
        %v2909 = vmul.f32 %v2870, %v2876
        %v2910 = vld [vmem:[%s12] sm:$0x1]
        %v2912 = vlaneseq
        %v2913 = vshrl.u32 %v2912, 7
        %v2914 = vsub.s32 0, %v2913
        %v2915 = vrot.slane %v2910, %v2914
        %v2917 = vadd.f32 %v2878, %v2915
        %v2918 = vadd.f32 %v2879, %v2915
        %v2919 = vadd.f32 %v2880, %v2915
        %v2920 = vadd.f32 %v2881, %v2915
        %v2921 = vadd.f32 %v2882, %v2915
        %v2922 = vadd.f32 %v2883, %v2915
        %v2923 = vadd.f32 %v2884, %v2915
        %v2924 = vadd.f32 %v2885, %v2915
        %v2925 = vadd.f32 %v2886, %v2915
        %v2926 = vadd.f32 %v2887, %v2915
        %v2927 = vadd.f32 %v2888, %v2915
        %v2928 = vadd.f32 %v2889, %v2915
        %v2929 = vadd.f32 %v2890, %v2915
        %v2930 = vadd.f32 %v2891, %v2915
        %v2931 = vadd.f32 %v2892, %v2915
        %v2932 = vadd.f32 %v2893, %v2915
        %v2933 = vadd.f32 %v2894, %v2915
        %v2934 = vadd.f32 %v2895, %v2915
        %v2935 = vadd.f32 %v2896, %v2915
        %v2936 = vadd.f32 %v2897, %v2915
        %v2937 = vadd.f32 %v2898, %v2915
        %v2938 = vadd.f32 %v2899, %v2915
        %v2939 = vadd.f32 %v2900, %v2915
        %v2940 = vadd.f32 %v2901, %v2915
        %v2941 = vadd.f32 %v2902, %v2915
        %v2942 = vadd.f32 %v2903, %v2915
        %v2943 = vadd.f32 %v2904, %v2915
        %v2944 = vadd.f32 %v2905, %v2915
        %v2945 = vadd.f32 %v2906, %v2915
        %v2946 = vadd.f32 %v2907, %v2915
        %v2947 = vadd.f32 %v2908, %v2915
        %v2948 = vadd.f32 %v2909, %v2915
        %vm2981 = vcmask 1041408
        %v2982 = vrot.slane 0.0, 6
        %v2983 = vsel %vm2981, %v2982, %v2982
        %v2984 = vrot.slane %v2917, 6
        %v2985 = vrot.slane %v2918, 6
        %v2986 = vsel %vm2981, %v2984, %v2985
        %v2987 = vrot.slane %v2919, 6
        %v2988 = vrot.slane %v2920, 6
        %v2989 = vsel %vm2981, %v2987, %v2988
        %v2990 = vrot.slane %v2921, 6
        %v2991 = vrot.slane %v2922, 6
        %v2992 = vsel %vm2981, %v2990, %v2991
        %v2993 = vrot.slane %v2923, 6
        %v2994 = vrot.slane %v2924, 6
        %v2995 = vsel %vm2981, %v2993, %v2994
        %v2996 = vrot.slane %v2925, 6
        %v2997 = vrot.slane %v2926, 6
        %v2998 = vsel %vm2981, %v2996, %v2997
        %v2999 = vrot.slane %v2927, 6
        %v3000 = vrot.slane %v2928, 6
        %v3001 = vsel %vm2981, %v2999, %v3000
        %v3002 = vrot.slane %v2929, 6
        %v3003 = vrot.slane %v2930, 6
        %v3004 = vsel %vm2981, %v3002, %v3003
        %v3005 = vrot.slane %v2931, 6
        %v3006 = vrot.slane %v2932, 6
        %v3007 = vsel %vm2981, %v3005, %v3006
        %v3008 = vrot.slane %v2933, 6
        %v3009 = vrot.slane %v2934, 6
        %v3010 = vsel %vm2981, %v3008, %v3009
        %v3011 = vrot.slane %v2935, 6
        %v3012 = vrot.slane %v2936, 6
        %v3013 = vsel %vm2981, %v3011, %v3012
        %v3014 = vrot.slane %v2937, 6
        %v3015 = vrot.slane %v2938, 6
        %v3016 = vsel %vm2981, %v3014, %v3015
        %v3017 = vrot.slane %v2939, 6
        %v3018 = vrot.slane %v2940, 6
        %v3019 = vsel %vm2981, %v3017, %v3018
        %v3020 = vrot.slane %v2941, 6
        %v3021 = vrot.slane %v2942, 6
        %v3022 = vsel %vm2981, %v3020, %v3021
        %v3023 = vrot.slane %v2943, 6
        %v3024 = vrot.slane %v2944, 6
        %v3025 = vsel %vm2981, %v3023, %v3024
        %v3026 = vrot.slane %v2945, 6
        %v3027 = vrot.slane %v2946, 6
        %v3028 = vsel %vm2981, %v3026, %v3027
        %v3029 = vrot.slane %v2947, 6
        %v3030 = vrot.slane %v2948, 6
        %v3031 = vsel %vm2981, %v3029, %v3030
        %v3080 = vsel %vm2981, 0.0, %v2982
        %v3081 = vsel %vm2981, 0.0, %v2984
        %v3082 = vsel %vm2981, 0.0, %v2987
        %v3083 = vsel %vm2981, 0.0, %v2990
        %v3084 = vsel %vm2981, 0.0, %v2993
        %v3085 = vsel %vm2981, 0.0, %v2996
        %v3086 = vsel %vm2981, 0.0, %v2999
        %v3087 = vsel %vm2981, 0.0, %v3002
        %v3088 = vsel %vm2981, 0.0, %v3005
        %v3089 = vsel %vm2981, 0.0, %v3008
        %v3090 = vsel %vm2981, 0.0, %v3011
        %v3091 = vsel %vm2981, 0.0, %v3014
        %v3092 = vsel %vm2981, 0.0, %v3017
        %v3093 = vsel %vm2981, 0.0, %v3020
        %v3094 = vsel %vm2981, 0.0, %v3023
        %v3095 = vsel %vm2981, 0.0, %v3026
        %v3096 = vsel %vm2981, 0.0, %v3029
        %v3097 = vsel %vm2981, %v2982, 0.0
        %v3098 = vsel %vm2981, %v2985, 0.0
        %v3099 = vsel %vm2981, %v2988, 0.0
        %v3100 = vsel %vm2981, %v2991, 0.0
        %v3101 = vsel %vm2981, %v2994, 0.0
        %v3102 = vsel %vm2981, %v2997, 0.0
        %v3103 = vsel %vm2981, %v3000, 0.0
        %v3104 = vsel %vm2981, %v3003, 0.0
        %v3105 = vsel %vm2981, %v3006, 0.0
        %v3106 = vsel %vm2981, %v3009, 0.0
        %v3107 = vsel %vm2981, %v3012, 0.0
        %v3108 = vsel %vm2981, %v3015, 0.0
        %v3109 = vsel %vm2981, %v3018, 0.0
        %v3110 = vsel %vm2981, %v3021, 0.0
        %v3111 = vsel %vm2981, %v3024, 0.0
        %v3112 = vsel %vm2981, %v3027, 0.0
        %v3113 = vsel %vm2981, %v3030, 0.0
        %v3144 = vrot.slane %v3080, 2
        %v3145 = vrot.slane %v2983, 2
        %v3146 = vsel %vm1442, %v3144, %v3145
        %v3147 = vrot.slane %v3097, 2
        %v3148 = vsel %vm1442, %v3145, %v3147
        %v3149 = vrot.slane %v3081, 2
        %v3150 = vrot.slane %v2986, 2
        %v3151 = vsel %vm1442, %v3149, %v3150
        %v3152 = vrot.slane %v3098, 2
        %v3153 = vsel %vm1442, %v3150, %v3152
        %v3154 = vrot.slane %v3082, 2
        %v3155 = vrot.slane %v2989, 2
        %v3156 = vsel %vm1442, %v3154, %v3155
        %v3157 = vrot.slane %v3099, 2
        %v3158 = vsel %vm1442, %v3155, %v3157
        %v3159 = vrot.slane %v3083, 2
        %v3160 = vrot.slane %v2992, 2
        %v3161 = vsel %vm1442, %v3159, %v3160
        %v3162 = vrot.slane %v3100, 2
        %v3163 = vsel %vm1442, %v3160, %v3162
        %v3164 = vrot.slane %v3084, 2
        %v3165 = vrot.slane %v2995, 2
        %v3166 = vsel %vm1442, %v3164, %v3165
        %v3167 = vrot.slane %v3101, 2
        %v3168 = vsel %vm1442, %v3165, %v3167
        %v3169 = vrot.slane %v3085, 2
        %v3170 = vrot.slane %v2998, 2
        %v3171 = vsel %vm1442, %v3169, %v3170
        %v3172 = vrot.slane %v3102, 2
        %v3173 = vsel %vm1442, %v3170, %v3172
        %v3174 = vrot.slane %v3086, 2
        %v3175 = vrot.slane %v3001, 2
        %v3176 = vsel %vm1442, %v3174, %v3175
        %v3177 = vrot.slane %v3103, 2
        %v3178 = vsel %vm1442, %v3175, %v3177
        %v3179 = vrot.slane %v3087, 2
        %v3180 = vrot.slane %v3004, 2
        %v3181 = vsel %vm1442, %v3179, %v3180
        %v3182 = vrot.slane %v3104, 2
        %v3183 = vsel %vm1442, %v3180, %v3182
        %v3184 = vrot.slane %v3088, 2
        %v3185 = vrot.slane %v3007, 2
        %v3186 = vsel %vm1442, %v3184, %v3185
        %v3187 = vrot.slane %v3105, 2
        %v3188 = vsel %vm1442, %v3185, %v3187
        %v3189 = vrot.slane %v3089, 2
        %v3190 = vrot.slane %v3010, 2
        %v3191 = vsel %vm1442, %v3189, %v3190
        %v3192 = vrot.slane %v3106, 2
        %v3193 = vsel %vm1442, %v3190, %v3192
        %v3194 = vrot.slane %v3090, 2
        %v3195 = vrot.slane %v3013, 2
        %v3196 = vsel %vm1442, %v3194, %v3195
        %v3197 = vrot.slane %v3107, 2
        %v3198 = vsel %vm1442, %v3195, %v3197
        %v3199 = vrot.slane %v3091, 2
        %v3200 = vrot.slane %v3016, 2
        %v3201 = vsel %vm1442, %v3199, %v3200
        %v3202 = vrot.slane %v3108, 2
        %v3203 = vsel %vm1442, %v3200, %v3202
        %v3204 = vrot.slane %v3092, 2
        %v3205 = vrot.slane %v3019, 2
        %v3206 = vsel %vm1442, %v3204, %v3205
        %v3207 = vrot.slane %v3109, 2
        %v3208 = vsel %vm1442, %v3205, %v3207
        %v3209 = vrot.slane %v3093, 2
        %v3210 = vrot.slane %v3022, 2
        %v3211 = vsel %vm1442, %v3209, %v3210
        %v3212 = vrot.slane %v3110, 2
        %v3213 = vsel %vm1442, %v3210, %v3212
        %v3214 = vrot.slane %v3094, 2
        %v3215 = vrot.slane %v3025, 2
        %v3216 = vsel %vm1442, %v3214, %v3215
        %v3217 = vrot.slane %v3111, 2
        %v3218 = vsel %vm1442, %v3215, %v3217
        %3219 = vrot.lane.b32.xlu0 %v3146, 8
        %v3220 = vpop.permute.xlu0 %3219
        %3221 = vrot.lane.b32.xlu0 %v3148, 8
        %v3222 = vpop.permute.xlu0 %3221
        %3223 = vrot.lane.b32.xlu0 %v3151, 8
        %v3224 = vpop.permute.xlu0 %3223
        %3225 = vrot.lane.b32.xlu0 %v3153, 8
        %v3226 = vpop.permute.xlu0 %3225
        %3227 = vrot.lane.b32.xlu0 %v3156, 8
        %v3228 = vpop.permute.xlu0 %3227
        %3229 = vrot.lane.b32.xlu0 %v3158, 8
        %v3230 = vpop.permute.xlu0 %3229
        %3231 = vrot.lane.b32.xlu0 %v3161, 8
        %v3232 = vpop.permute.xlu0 %3231
        %3233 = vrot.lane.b32.xlu0 %v3163, 8
        %v3234 = vpop.permute.xlu0 %3233
        %3235 = vrot.lane.b32.xlu0 %v3166, 8
        %v3236 = vpop.permute.xlu0 %3235
        %3237 = vrot.lane.b32.xlu0 %v3168, 8
        %v3238 = vpop.permute.xlu0 %3237
        %3239 = vrot.lane.b32.xlu0 %v3171, 8
        %v3240 = vpop.permute.xlu0 %3239
        %3241 = vrot.lane.b32.xlu0 %v3173, 8
        %v3242 = vpop.permute.xlu0 %3241
        %3243 = vrot.lane.b32.xlu0 %v3176, 8
        %v3244 = vpop.permute.xlu0 %3243
        %3245 = vrot.lane.b32.xlu0 %v3178, 8
        %v3246 = vpop.permute.xlu0 %3245
        %3247 = vrot.lane.b32.xlu0 %v3181, 8
        %v3248 = vpop.permute.xlu0 %3247
        %3249 = vrot.lane.b32.xlu0 %v3183, 8
        %v3250 = vpop.permute.xlu0 %3249
        %3251 = vrot.lane.b32.xlu0 %v3186, 8
        %v3252 = vpop.permute.xlu0 %3251
        %3253 = vrot.lane.b32.xlu0 %v3188, 8
        %v3254 = vpop.permute.xlu0 %3253
        %3255 = vrot.lane.b32.xlu0 %v3191, 8
        %v3256 = vpop.permute.xlu0 %3255
        %3257 = vrot.lane.b32.xlu0 %v3193, 8
        %v3258 = vpop.permute.xlu0 %3257
        %3259 = vrot.lane.b32.xlu0 %v3196, 8
        %v3260 = vpop.permute.xlu0 %3259
        %3261 = vrot.lane.b32.xlu0 %v3198, 8
        %v3262 = vpop.permute.xlu0 %3261
        %3263 = vrot.lane.b32.xlu0 %v3201, 8
        %v3264 = vpop.permute.xlu0 %3263
        %3265 = vrot.lane.b32.xlu0 %v3203, 8
        %v3266 = vpop.permute.xlu0 %3265
        %3267 = vrot.lane.b32.xlu0 %v3206, 8
        %v3268 = vpop.permute.xlu0 %3267
        %3269 = vrot.lane.b32.xlu0 %v3208, 8
        %v3270 = vpop.permute.xlu0 %3269
        %3271 = vrot.lane.b32.xlu0 %v3211, 8
        %v3272 = vpop.permute.xlu0 %3271
        %3273 = vrot.lane.b32.xlu0 %v3213, 8
        %v3274 = vpop.permute.xlu0 %3273
        %3275 = vrot.lane.b32.xlu0 %v3216, 8
        %v3276 = vpop.permute.xlu0 %3275
        %3277 = vrot.lane.b32.xlu0 %v3218, 8
        %v3278 = vpop.permute.xlu0 %3277
        %v3309 = vrot.slane %v3080, 4
        %v3310 = vrot.slane %v2983, 4
        %v3311 = vsel %vm805, %v3309, %v3310
        %v3312 = vrot.slane %v3097, 4
        %v3313 = vsel %vm805, %v3310, %v3312
        %v3314 = vrot.slane %v3081, 4
        %v3315 = vrot.slane %v2986, 4
        %v3316 = vsel %vm805, %v3314, %v3315
        %v3317 = vrot.slane %v3098, 4
        %v3318 = vsel %vm805, %v3315, %v3317
        %v3319 = vrot.slane %v3082, 4
        %v3320 = vrot.slane %v2989, 4
        %v3321 = vsel %vm805, %v3319, %v3320
        %v3322 = vrot.slane %v3099, 4
        %v3323 = vsel %vm805, %v3320, %v3322
        %v3324 = vrot.slane %v3083, 4
        %v3325 = vrot.slane %v2992, 4
        %v3326 = vsel %vm805, %v3324, %v3325
        %v3327 = vrot.slane %v3100, 4
        %v3328 = vsel %vm805, %v3325, %v3327
        %v3329 = vrot.slane %v3084, 4
        %v3330 = vrot.slane %v2995, 4
        %v3331 = vsel %vm805, %v3329, %v3330
        %v3332 = vrot.slane %v3101, 4
        %v3333 = vsel %vm805, %v3330, %v3332
        %v3334 = vrot.slane %v3085, 4
        %v3335 = vrot.slane %v2998, 4
        %v3336 = vsel %vm805, %v3334, %v3335
        %v3337 = vrot.slane %v3102, 4
        %v3338 = vsel %vm805, %v3335, %v3337
        %v3339 = vrot.slane %v3086, 4
        %v3340 = vrot.slane %v3001, 4
        %v3341 = vsel %vm805, %v3339, %v3340
        %v3342 = vrot.slane %v3103, 4
        %v3343 = vsel %vm805, %v3340, %v3342
        %v3344 = vrot.slane %v3087, 4
        %v3345 = vrot.slane %v3004, 4
        %v3346 = vsel %vm805, %v3344, %v3345
        %v3347 = vrot.slane %v3104, 4
        %v3348 = vsel %vm805, %v3345, %v3347
        %v3349 = vrot.slane %v3088, 4
        %v3350 = vrot.slane %v3007, 4
        %v3351 = vsel %vm805, %v3349, %v3350
        %v3352 = vrot.slane %v3105, 4
        %v3353 = vsel %vm805, %v3350, %v3352
        %v3354 = vrot.slane %v3089, 4
        %v3355 = vrot.slane %v3010, 4
        %v3356 = vsel %vm805, %v3354, %v3355
        %v3357 = vrot.slane %v3106, 4
        %v3358 = vsel %vm805, %v3355, %v3357
        %v3359 = vrot.slane %v3090, 4
        %v3360 = vrot.slane %v3013, 4
        %v3361 = vsel %vm805, %v3359, %v3360
        %v3362 = vrot.slane %v3107, 4
        %v3363 = vsel %vm805, %v3360, %v3362
        %v3364 = vrot.slane %v3091, 4
        %v3365 = vrot.slane %v3016, 4
        %v3366 = vsel %vm805, %v3364, %v3365
        %v3367 = vrot.slane %v3108, 4
        %v3368 = vsel %vm805, %v3365, %v3367
        %v3369 = vrot.slane %v3092, 4
        %v3370 = vrot.slane %v3019, 4
        %v3371 = vsel %vm805, %v3369, %v3370
        %v3372 = vrot.slane %v3109, 4
        %v3373 = vsel %vm805, %v3370, %v3372
        %v3374 = vrot.slane %v3093, 4
        %v3375 = vrot.slane %v3022, 4
        %v3376 = vsel %vm805, %v3374, %v3375
        %v3377 = vrot.slane %v3110, 4
        %v3378 = vsel %vm805, %v3375, %v3377
        %v3379 = vrot.slane %v3094, 4
        %v3380 = vrot.slane %v3025, 4
        %v3381 = vsel %vm805, %v3379, %v3380
        %v3382 = vrot.slane %v3111, 4
        %v3383 = vsel %vm805, %v3380, %v3382
        %3384 = vrot.lane.b32.xlu0 %v3311, 16
        %v3385 = vpop.permute.xlu0 %3384
        %3386 = vrot.lane.b32.xlu0 %v3313, 16
        %v3387 = vpop.permute.xlu0 %3386
        %3388 = vrot.lane.b32.xlu0 %v3316, 16
        %v3389 = vpop.permute.xlu0 %3388
        %3390 = vrot.lane.b32.xlu0 %v3318, 16
        %v3391 = vpop.permute.xlu0 %3390
        %3392 = vrot.lane.b32.xlu0 %v3321, 16
        %v3393 = vpop.permute.xlu0 %3392
        %3394 = vrot.lane.b32.xlu0 %v3323, 16
        %v3395 = vpop.permute.xlu0 %3394
        %3396 = vrot.lane.b32.xlu0 %v3326, 16
        %v3397 = vpop.permute.xlu0 %3396
        %3398 = vrot.lane.b32.xlu0 %v3328, 16
        %v3399 = vpop.permute.xlu0 %3398
        %3400 = vrot.lane.b32.xlu0 %v3331, 16
        %v3401 = vpop.permute.xlu0 %3400
        %3402 = vrot.lane.b32.xlu0 %v3333, 16
        %v3403 = vpop.permute.xlu0 %3402
        %3404 = vrot.lane.b32.xlu0 %v3336, 16
        %v3405 = vpop.permute.xlu0 %3404
        %3406 = vrot.lane.b32.xlu0 %v3338, 16
        %v3407 = vpop.permute.xlu0 %3406
        %3408 = vrot.lane.b32.xlu0 %v3341, 16
        %v3409 = vpop.permute.xlu0 %3408
        %3410 = vrot.lane.b32.xlu0 %v3343, 16
        %v3411 = vpop.permute.xlu0 %3410
        %3412 = vrot.lane.b32.xlu0 %v3346, 16
        %v3413 = vpop.permute.xlu0 %3412
        %3414 = vrot.lane.b32.xlu0 %v3348, 16
        %v3415 = vpop.permute.xlu0 %3414
        %3416 = vrot.lane.b32.xlu0 %v3351, 16
        %v3417 = vpop.permute.xlu0 %3416
        %3418 = vrot.lane.b32.xlu0 %v3353, 16
        %v3419 = vpop.permute.xlu0 %3418
        %3420 = vrot.lane.b32.xlu0 %v3356, 16
        %v3421 = vpop.permute.xlu0 %3420
        %3422 = vrot.lane.b32.xlu0 %v3358, 16
        %v3423 = vpop.permute.xlu0 %3422
        %3424 = vrot.lane.b32.xlu0 %v3361, 16
        %v3425 = vpop.permute.xlu0 %3424
        %3426 = vrot.lane.b32.xlu0 %v3363, 16
        %v3427 = vpop.permute.xlu0 %3426
        %3428 = vrot.lane.b32.xlu0 %v3366, 16
        %v3429 = vpop.permute.xlu0 %3428
        %3430 = vrot.lane.b32.xlu0 %v3368, 16
        %v3431 = vpop.permute.xlu0 %3430
        %3432 = vrot.lane.b32.xlu0 %v3371, 16
        %v3433 = vpop.permute.xlu0 %3432
        %3434 = vrot.lane.b32.xlu0 %v3373, 16
        %v3435 = vpop.permute.xlu0 %3434
        %3436 = vrot.lane.b32.xlu0 %v3376, 16
        %v3437 = vpop.permute.xlu0 %3436
        %3438 = vrot.lane.b32.xlu0 %v3378, 16
        %v3439 = vpop.permute.xlu0 %3438
        %3440 = vrot.lane.b32.xlu0 %v3381, 16
        %v3441 = vpop.permute.xlu0 %3440
        %3442 = vrot.lane.b32.xlu0 %v3383, 16
        %v3443 = vpop.permute.xlu0 %3442
        %3476 = vrot.lane.b32.xlu0 %v3081, 24
        %v3477 = vpop.permute.xlu0 %3476
        %3478 = vrot.lane.b32.xlu0 %v2986, 24
        %v3479 = vpop.permute.xlu0 %3478
        %3480 = vrot.lane.b32.xlu0 %v3082, 24
        %v3481 = vpop.permute.xlu0 %3480
        %3482 = vrot.lane.b32.xlu0 %v2989, 24
        %v3483 = vpop.permute.xlu0 %3482
        %3484 = vrot.lane.b32.xlu0 %v3083, 24
        %v3485 = vpop.permute.xlu0 %3484
        %3486 = vrot.lane.b32.xlu0 %v2992, 24
        %v3487 = vpop.permute.xlu0 %3486
        %3488 = vrot.lane.b32.xlu0 %v3084, 24
        %v3489 = vpop.permute.xlu0 %3488
        %3490 = vrot.lane.b32.xlu0 %v2995, 24
        %v3491 = vpop.permute.xlu0 %3490
        %3492 = vrot.lane.b32.xlu0 %v3085, 24
        %v3493 = vpop.permute.xlu0 %3492
        %3494 = vrot.lane.b32.xlu0 %v2998, 24
        %v3495 = vpop.permute.xlu0 %3494
        %3496 = vrot.lane.b32.xlu0 %v3086, 24
        %v3497 = vpop.permute.xlu0 %3496
        %3498 = vrot.lane.b32.xlu0 %v3001, 24
        %v3499 = vpop.permute.xlu0 %3498
        %3500 = vrot.lane.b32.xlu0 %v3087, 24
        %v3501 = vpop.permute.xlu0 %3500
        %3502 = vrot.lane.b32.xlu0 %v3004, 24
        %v3503 = vpop.permute.xlu0 %3502
        %3504 = vrot.lane.b32.xlu0 %v3088, 24
        %v3505 = vpop.permute.xlu0 %3504
        %3506 = vrot.lane.b32.xlu0 %v3007, 24
        %v3507 = vpop.permute.xlu0 %3506
        %3508 = vrot.lane.b32.xlu0 %v3089, 24
        %v3509 = vpop.permute.xlu0 %3508
        %3510 = vrot.lane.b32.xlu0 %v3010, 24
        %v3511 = vpop.permute.xlu0 %3510
        %3512 = vrot.lane.b32.xlu0 %v3090, 24
        %v3513 = vpop.permute.xlu0 %3512
        %3514 = vrot.lane.b32.xlu0 %v3013, 24
        %v3515 = vpop.permute.xlu0 %3514
        %3516 = vrot.lane.b32.xlu0 %v3091, 24
        %v3517 = vpop.permute.xlu0 %3516
        %3518 = vrot.lane.b32.xlu0 %v3016, 24
        %v3519 = vpop.permute.xlu0 %3518
        %3520 = vrot.lane.b32.xlu0 %v3092, 24
        %v3521 = vpop.permute.xlu0 %3520
        %3522 = vrot.lane.b32.xlu0 %v3019, 24
        %v3523 = vpop.permute.xlu0 %3522
        %3524 = vrot.lane.b32.xlu0 %v3093, 24
        %v3525 = vpop.permute.xlu0 %3524
        %3526 = vrot.lane.b32.xlu0 %v3022, 24
        %v3527 = vpop.permute.xlu0 %3526
        %3528 = vrot.lane.b32.xlu0 %v3094, 24
        %v3529 = vpop.permute.xlu0 %3528
        %3530 = vrot.lane.b32.xlu0 %v3025, 24
        %v3531 = vpop.permute.xlu0 %3530
        %3532 = vrot.lane.b32.xlu0 %v3095, 24
        %v3533 = vpop.permute.xlu0 %3532
        %3534 = vrot.lane.b32.xlu0 %v3028, 24
        %v3535 = vpop.permute.xlu0 %3534
        %3536 = vrot.lane.b32.xlu0 %v3096, 24
        %v3537 = vpop.permute.xlu0 %3536
        %3538 = vrot.lane.b32.xlu0 %v3031, 24
        %v3539 = vpop.permute.xlu0 %3538
        %v3574 = vrot.slane %v3095, 2
        %v3575 = vrot.slane %v3028, 2
        %v3576 = vsel %vm1442, %v3574, %v3575
        %v3577 = vrot.slane %v3112, 2
        %v3578 = vsel %vm1442, %v3575, %v3577
        %v3579 = vrot.slane %v3096, 2
        %v3580 = vrot.slane %v3031, 2
        %v3581 = vsel %vm1442, %v3579, %v3580
        %v3582 = vrot.slane %v3113, 2
        %v3583 = vsel %vm1442, %v3580, %v3582
        %3584 = vrot.lane.b32.xlu0 %v3151, 32
        %v3585 = vpop.permute.xlu0 %3584
        %3586 = vrot.lane.b32.xlu0 %v3153, 32
        %v3587 = vpop.permute.xlu0 %3586
        %3588 = vrot.lane.b32.xlu0 %v3156, 32
        %v3589 = vpop.permute.xlu0 %3588
        %3590 = vrot.lane.b32.xlu0 %v3158, 32
        %v3591 = vpop.permute.xlu0 %3590
        %3592 = vrot.lane.b32.xlu0 %v3161, 32
        %v3593 = vpop.permute.xlu0 %3592
        %3594 = vrot.lane.b32.xlu0 %v3163, 32
        %v3595 = vpop.permute.xlu0 %3594
        %3596 = vrot.lane.b32.xlu0 %v3166, 32
        %v3597 = vpop.permute.xlu0 %3596
        %3598 = vrot.lane.b32.xlu0 %v3168, 32
        %v3599 = vpop.permute.xlu0 %3598
        %3600 = vrot.lane.b32.xlu0 %v3171, 32
        %v3601 = vpop.permute.xlu0 %3600
        %3602 = vrot.lane.b32.xlu0 %v3173, 32
        %v3603 = vpop.permute.xlu0 %3602
        %3604 = vrot.lane.b32.xlu0 %v3176, 32
        %v3605 = vpop.permute.xlu0 %3604
        %3606 = vrot.lane.b32.xlu0 %v3178, 32
        %v3607 = vpop.permute.xlu0 %3606
        %3608 = vrot.lane.b32.xlu0 %v3181, 32
        %v3609 = vpop.permute.xlu0 %3608
        %3610 = vrot.lane.b32.xlu0 %v3183, 32
        %v3611 = vpop.permute.xlu0 %3610
        %3612 = vrot.lane.b32.xlu0 %v3186, 32
        %v3613 = vpop.permute.xlu0 %3612
        %3614 = vrot.lane.b32.xlu0 %v3188, 32
        %v3615 = vpop.permute.xlu0 %3614
        %3616 = vrot.lane.b32.xlu0 %v3191, 32
        %v3617 = vpop.permute.xlu0 %3616
        %3618 = vrot.lane.b32.xlu0 %v3193, 32
        %v3619 = vpop.permute.xlu0 %3618
        %3620 = vrot.lane.b32.xlu0 %v3196, 32
        %v3621 = vpop.permute.xlu0 %3620
        %3622 = vrot.lane.b32.xlu0 %v3198, 32
        %v3623 = vpop.permute.xlu0 %3622
        %3624 = vrot.lane.b32.xlu0 %v3201, 32
        %v3625 = vpop.permute.xlu0 %3624
        %3626 = vrot.lane.b32.xlu0 %v3203, 32
        %v3627 = vpop.permute.xlu0 %3626
        %3628 = vrot.lane.b32.xlu0 %v3206, 32
        %v3629 = vpop.permute.xlu0 %3628
        %3630 = vrot.lane.b32.xlu0 %v3208, 32
        %v3631 = vpop.permute.xlu0 %3630
        %3632 = vrot.lane.b32.xlu0 %v3211, 32
        %v3633 = vpop.permute.xlu0 %3632
        %3634 = vrot.lane.b32.xlu0 %v3213, 32
        %v3635 = vpop.permute.xlu0 %3634
        %3636 = vrot.lane.b32.xlu0 %v3216, 32
        %v3637 = vpop.permute.xlu0 %3636
        %3638 = vrot.lane.b32.xlu0 %v3218, 32
        %v3639 = vpop.permute.xlu0 %3638
        %3640 = vrot.lane.b32.xlu0 %v3576, 32
        %v3641 = vpop.permute.xlu0 %3640
        %3642 = vrot.lane.b32.xlu0 %v3578, 32
        %v3643 = vpop.permute.xlu0 %3642
        %3644 = vrot.lane.b32.xlu0 %v3581, 32
        %v3645 = vpop.permute.xlu0 %3644
        %3646 = vrot.lane.b32.xlu0 %v3583, 32
        %v3647 = vpop.permute.xlu0 %3646
        %v3680 = vrot.slane %v3095, 4
        %v3681 = vrot.slane %v3028, 4
        %v3682 = vsel %vm805, %v3680, %v3681
        %v3683 = vrot.slane %v3112, 4
        %v3684 = vsel %vm805, %v3681, %v3683
        %v3685 = vrot.slane %v3096, 4
        %v3686 = vrot.slane %v3031, 4
        %v3687 = vsel %vm805, %v3685, %v3686
        %v3688 = vrot.slane %v3113, 4
        %v3689 = vsel %vm805, %v3686, %v3688
        %3690 = vrot.lane.b32.xlu0 %v3316, 40
        %v3691 = vpop.permute.xlu0 %3690
        %3692 = vrot.lane.b32.xlu0 %v3318, 40
        %v3693 = vpop.permute.xlu0 %3692
        %3694 = vrot.lane.b32.xlu0 %v3321, 40
        %v3695 = vpop.permute.xlu0 %3694
        %3696 = vrot.lane.b32.xlu0 %v3323, 40
        %v3697 = vpop.permute.xlu0 %3696
        %3698 = vrot.lane.b32.xlu0 %v3326, 40
        %v3699 = vpop.permute.xlu0 %3698
        %3700 = vrot.lane.b32.xlu0 %v3328, 40
        %v3701 = vpop.permute.xlu0 %3700
        %3702 = vrot.lane.b32.xlu0 %v3331, 40
        %v3703 = vpop.permute.xlu0 %3702
        %3704 = vrot.lane.b32.xlu0 %v3333, 40
        %v3705 = vpop.permute.xlu0 %3704
        %3706 = vrot.lane.b32.xlu0 %v3336, 40
        %v3707 = vpop.permute.xlu0 %3706
        %3708 = vrot.lane.b32.xlu0 %v3338, 40
        %v3709 = vpop.permute.xlu0 %3708
        %3710 = vrot.lane.b32.xlu0 %v3341, 40
        %v3711 = vpop.permute.xlu0 %3710
        %3712 = vrot.lane.b32.xlu0 %v3343, 40
        %v3713 = vpop.permute.xlu0 %3712
        %3714 = vrot.lane.b32.xlu0 %v3346, 40
        %v3715 = vpop.permute.xlu0 %3714
        %3716 = vrot.lane.b32.xlu0 %v3348, 40
        %v3717 = vpop.permute.xlu0 %3716
        %3718 = vrot.lane.b32.xlu0 %v3351, 40
        %v3719 = vpop.permute.xlu0 %3718
        %3720 = vrot.lane.b32.xlu0 %v3353, 40
        %v3721 = vpop.permute.xlu0 %3720
        %3722 = vrot.lane.b32.xlu0 %v3356, 40
        %v3723 = vpop.permute.xlu0 %3722
        %3724 = vrot.lane.b32.xlu0 %v3358, 40
        %v3725 = vpop.permute.xlu0 %3724
        %3726 = vrot.lane.b32.xlu0 %v3361, 40
        %v3727 = vpop.permute.xlu0 %3726
        %3728 = vrot.lane.b32.xlu0 %v3363, 40
        %v3729 = vpop.permute.xlu0 %3728
        %3730 = vrot.lane.b32.xlu0 %v3366, 40
        %v3731 = vpop.permute.xlu0 %3730
        %3732 = vrot.lane.b32.xlu0 %v3368, 40
        %v3733 = vpop.permute.xlu0 %3732
        %3734 = vrot.lane.b32.xlu0 %v3371, 40
        %v3735 = vpop.permute.xlu0 %3734
        %3736 = vrot.lane.b32.xlu0 %v3373, 40
        %v3737 = vpop.permute.xlu0 %3736
        %3738 = vrot.lane.b32.xlu0 %v3376, 40
        %v3739 = vpop.permute.xlu0 %3738
        %3740 = vrot.lane.b32.xlu0 %v3378, 40
        %v3741 = vpop.permute.xlu0 %3740
        %3742 = vrot.lane.b32.xlu0 %v3381, 40
        %v3743 = vpop.permute.xlu0 %3742
        %3744 = vrot.lane.b32.xlu0 %v3383, 40
        %v3745 = vpop.permute.xlu0 %3744
        %3746 = vrot.lane.b32.xlu0 %v3682, 40
        %v3747 = vpop.permute.xlu0 %3746
        %3748 = vrot.lane.b32.xlu0 %v3684, 40
        %v3749 = vpop.permute.xlu0 %3748
        %3750 = vrot.lane.b32.xlu0 %v3687, 40
        %v3751 = vpop.permute.xlu0 %3750
        %3752 = vrot.lane.b32.xlu0 %v3689, 40
        %v3753 = vpop.permute.xlu0 %3752
        %3786 = vrot.lane.b32.xlu0 %v3083, 48
        %v3787 = vpop.permute.xlu0 %3786
        %3788 = vrot.lane.b32.xlu0 %v2992, 48
        %v3789 = vpop.permute.xlu0 %3788
        %3790 = vrot.lane.b32.xlu0 %v3084, 48
        %v3791 = vpop.permute.xlu0 %3790
        %3792 = vrot.lane.b32.xlu0 %v2995, 48
        %v3793 = vpop.permute.xlu0 %3792
        %3794 = vrot.lane.b32.xlu0 %v3085, 48
        %v3795 = vpop.permute.xlu0 %3794
        %3796 = vrot.lane.b32.xlu0 %v2998, 48
        %v3797 = vpop.permute.xlu0 %3796
        %3798 = vrot.lane.b32.xlu0 %v3086, 48
        %v3799 = vpop.permute.xlu0 %3798
        %3800 = vrot.lane.b32.xlu0 %v3001, 48
        %v3801 = vpop.permute.xlu0 %3800
        %3802 = vrot.lane.b32.xlu0 %v3087, 48
        %v3803 = vpop.permute.xlu0 %3802
        %3804 = vrot.lane.b32.xlu0 %v3004, 48
        %v3805 = vpop.permute.xlu0 %3804
        %3806 = vrot.lane.b32.xlu0 %v3088, 48
        %v3807 = vpop.permute.xlu0 %3806
        %3808 = vrot.lane.b32.xlu0 %v3007, 48
        %v3809 = vpop.permute.xlu0 %3808
        %3810 = vrot.lane.b32.xlu0 %v3089, 48
        %v3811 = vpop.permute.xlu0 %3810
        %3812 = vrot.lane.b32.xlu0 %v3010, 48
        %v3813 = vpop.permute.xlu0 %3812
        %3814 = vrot.lane.b32.xlu0 %v3090, 48
        %v3815 = vpop.permute.xlu0 %3814
        %3816 = vrot.lane.b32.xlu0 %v3013, 48
        %v3817 = vpop.permute.xlu0 %3816
        %3818 = vrot.lane.b32.xlu0 %v3091, 48
        %v3819 = vpop.permute.xlu0 %3818
        %3820 = vrot.lane.b32.xlu0 %v3016, 48
        %v3821 = vpop.permute.xlu0 %3820
        %3822 = vrot.lane.b32.xlu0 %v3092, 48
        %v3823 = vpop.permute.xlu0 %3822
        %3824 = vrot.lane.b32.xlu0 %v3019, 48
        %v3825 = vpop.permute.xlu0 %3824
        %3826 = vrot.lane.b32.xlu0 %v3093, 48
        %v3827 = vpop.permute.xlu0 %3826
        %3828 = vrot.lane.b32.xlu0 %v3022, 48
        %v3829 = vpop.permute.xlu0 %3828
        %3830 = vrot.lane.b32.xlu0 %v3094, 48
        %v3831 = vpop.permute.xlu0 %3830
        %3832 = vrot.lane.b32.xlu0 %v3025, 48
        %v3833 = vpop.permute.xlu0 %3832
        %3834 = vrot.lane.b32.xlu0 %v3095, 48
        %v3835 = vpop.permute.xlu0 %3834
        %3836 = vrot.lane.b32.xlu0 %v3028, 48
        %v3837 = vpop.permute.xlu0 %3836
        %3838 = vrot.lane.b32.xlu0 %v3096, 48
        %v3839 = vpop.permute.xlu0 %3838
        %3840 = vrot.lane.b32.xlu0 %v3031, 48
        %v3841 = vpop.permute.xlu0 %3840
        %3842 = vrot.lane.b32.xlu0 %v3080, 48
        %v3843 = vpop.permute.xlu0 %3842
        %3844 = vrot.lane.b32.xlu0 %v2983, 48
        %v3845 = vpop.permute.xlu0 %3844
        %3876 = vrot.lane.b32.xlu0 %v3161, 56
        %v3877 = vpop.permute.xlu0 %3876
        %3878 = vrot.lane.b32.xlu0 %v3163, 56
        %v3879 = vpop.permute.xlu0 %3878
        %3880 = vrot.lane.b32.xlu0 %v3166, 56
        %v3881 = vpop.permute.xlu0 %3880
        %3882 = vrot.lane.b32.xlu0 %v3168, 56
        %v3883 = vpop.permute.xlu0 %3882
        %3884 = vrot.lane.b32.xlu0 %v3171, 56
        %v3885 = vpop.permute.xlu0 %3884
        %3886 = vrot.lane.b32.xlu0 %v3173, 56
        %v3887 = vpop.permute.xlu0 %3886
        %3888 = vrot.lane.b32.xlu0 %v3176, 56
        %v3889 = vpop.permute.xlu0 %3888
        %3890 = vrot.lane.b32.xlu0 %v3178, 56
        %v3891 = vpop.permute.xlu0 %3890
        %3892 = vrot.lane.b32.xlu0 %v3181, 56
        %v3893 = vpop.permute.xlu0 %3892
        %3894 = vrot.lane.b32.xlu0 %v3183, 56
        %v3895 = vpop.permute.xlu0 %3894
        %3896 = vrot.lane.b32.xlu0 %v3186, 56
        %v3897 = vpop.permute.xlu0 %3896
        %3898 = vrot.lane.b32.xlu0 %v3188, 56
        %v3899 = vpop.permute.xlu0 %3898
        %3900 = vrot.lane.b32.xlu0 %v3191, 56
        %v3901 = vpop.permute.xlu0 %3900
        %3902 = vrot.lane.b32.xlu0 %v3193, 56
        %v3903 = vpop.permute.xlu0 %3902
        %3904 = vrot.lane.b32.xlu0 %v3196, 56
        %v3905 = vpop.permute.xlu0 %3904
        %3906 = vrot.lane.b32.xlu0 %v3198, 56
        %v3907 = vpop.permute.xlu0 %3906
        %3908 = vrot.lane.b32.xlu0 %v3201, 56
        %v3909 = vpop.permute.xlu0 %3908
        %3910 = vrot.lane.b32.xlu0 %v3203, 56
        %v3911 = vpop.permute.xlu0 %3910
        %3912 = vrot.lane.b32.xlu0 %v3206, 56
        %v3913 = vpop.permute.xlu0 %3912
        %3914 = vrot.lane.b32.xlu0 %v3208, 56
        %v3915 = vpop.permute.xlu0 %3914
        %3916 = vrot.lane.b32.xlu0 %v3211, 56
        %v3917 = vpop.permute.xlu0 %3916
        %3918 = vrot.lane.b32.xlu0 %v3213, 56
        %v3919 = vpop.permute.xlu0 %3918
        %3920 = vrot.lane.b32.xlu0 %v3216, 56
        %v3921 = vpop.permute.xlu0 %3920
        %3922 = vrot.lane.b32.xlu0 %v3218, 56
        %v3923 = vpop.permute.xlu0 %3922
        %3924 = vrot.lane.b32.xlu0 %v3576, 56
        %v3925 = vpop.permute.xlu0 %3924
        %3926 = vrot.lane.b32.xlu0 %v3578, 56
        %v3927 = vpop.permute.xlu0 %3926
        %3928 = vrot.lane.b32.xlu0 %v3581, 56
        %v3929 = vpop.permute.xlu0 %3928
        %3930 = vrot.lane.b32.xlu0 %v3583, 56
        %v3931 = vpop.permute.xlu0 %3930
        %3932 = vrot.lane.b32.xlu0 %v3146, 56
        %v3933 = vpop.permute.xlu0 %3932
        %3934 = vrot.lane.b32.xlu0 %v3148, 56
        %v3935 = vpop.permute.xlu0 %3934
        %3966 = vrot.lane.b32.xlu0 %v3326, 64
        %v3967 = vpop.permute.xlu0 %3966
        %3968 = vrot.lane.b32.xlu0 %v3328, 64
        %v3969 = vpop.permute.xlu0 %3968
        %3970 = vrot.lane.b32.xlu0 %v3331, 64
        %v3971 = vpop.permute.xlu0 %3970
        %3972 = vrot.lane.b32.xlu0 %v3333, 64
        %v3973 = vpop.permute.xlu0 %3972
        %3974 = vrot.lane.b32.xlu0 %v3336, 64
        %v3975 = vpop.permute.xlu0 %3974
        %3976 = vrot.lane.b32.xlu0 %v3338, 64
        %v3977 = vpop.permute.xlu0 %3976
        %3978 = vrot.lane.b32.xlu0 %v3341, 64
        %v3979 = vpop.permute.xlu0 %3978
        %3980 = vrot.lane.b32.xlu0 %v3343, 64
        %v3981 = vpop.permute.xlu0 %3980
        %3982 = vrot.lane.b32.xlu0 %v3346, 64
        %v3983 = vpop.permute.xlu0 %3982
        %3984 = vrot.lane.b32.xlu0 %v3348, 64
        %v3985 = vpop.permute.xlu0 %3984
        %3986 = vrot.lane.b32.xlu0 %v3351, 64
        %v3987 = vpop.permute.xlu0 %3986
        %3988 = vrot.lane.b32.xlu0 %v3353, 64
        %v3989 = vpop.permute.xlu0 %3988
        %3990 = vrot.lane.b32.xlu0 %v3356, 64
        %v3991 = vpop.permute.xlu0 %3990
        %3992 = vrot.lane.b32.xlu0 %v3358, 64
        %v3993 = vpop.permute.xlu0 %3992
        %3994 = vrot.lane.b32.xlu0 %v3361, 64
        %v3995 = vpop.permute.xlu0 %3994
        %3996 = vrot.lane.b32.xlu0 %v3363, 64
        %v3997 = vpop.permute.xlu0 %3996
        %3998 = vrot.lane.b32.xlu0 %v3366, 64
        %v3999 = vpop.permute.xlu0 %3998
        %4000 = vrot.lane.b32.xlu0 %v3368, 64
        %v4001 = vpop.permute.xlu0 %4000
        %4002 = vrot.lane.b32.xlu0 %v3371, 64
        %v4003 = vpop.permute.xlu0 %4002
        %4004 = vrot.lane.b32.xlu0 %v3373, 64
        %v4005 = vpop.permute.xlu0 %4004
        %4006 = vrot.lane.b32.xlu0 %v3376, 64
        %v4007 = vpop.permute.xlu0 %4006
        %4008 = vrot.lane.b32.xlu0 %v3378, 64
        %v4009 = vpop.permute.xlu0 %4008
        %4010 = vrot.lane.b32.xlu0 %v3381, 64
        %v4011 = vpop.permute.xlu0 %4010
        %4012 = vrot.lane.b32.xlu0 %v3383, 64
        %v4013 = vpop.permute.xlu0 %4012
        %4014 = vrot.lane.b32.xlu0 %v3682, 64
        %v4015 = vpop.permute.xlu0 %4014
        %4016 = vrot.lane.b32.xlu0 %v3684, 64
        %v4017 = vpop.permute.xlu0 %4016
        %4018 = vrot.lane.b32.xlu0 %v3687, 64
        %v4019 = vpop.permute.xlu0 %4018
        %4020 = vrot.lane.b32.xlu0 %v3689, 64
        %v4021 = vpop.permute.xlu0 %4020
        %4022 = vrot.lane.b32.xlu0 %v3311, 64
        %v4023 = vpop.permute.xlu0 %4022
        %4024 = vrot.lane.b32.xlu0 %v3313, 64
        %v4025 = vpop.permute.xlu0 %4024
        %v4056 = vsel %vm2239, %v3080, %v3220
        %v4057 = vsel %vm2239, %v2983, %v3222
        %v4058 = vsel %vm2239, %v3081, %v3224
        %v4059 = vsel %vm2239, %v2986, %v3226
        %v4060 = vsel %vm2239, %v3082, %v3228
        %v4061 = vsel %vm2239, %v2989, %v3230
        %v4062 = vsel %vm2239, %v3083, %v3232
        %v4063 = vsel %vm2239, %v2992, %v3234
        %v4064 = vsel %vm2239, %v3084, %v3236
        %v4065 = vsel %vm2239, %v2995, %v3238
        %v4066 = vsel %vm2239, %v3085, %v3240
        %v4067 = vsel %vm2239, %v2998, %v3242
        %v4068 = vsel %vm2239, %v3086, %v3244
        %v4069 = vsel %vm2239, %v3001, %v3246
        %v4070 = vsel %vm2239, %v3087, %v3248
        %v4071 = vsel %vm2239, %v3004, %v3250
        %v4072 = vsel %vm2239, %v3088, %v3252
        %v4073 = vsel %vm2239, %v3007, %v3254
        %v4074 = vsel %vm2239, %v3089, %v3256
        %v4075 = vsel %vm2239, %v3010, %v3258
        %v4076 = vsel %vm2239, %v3090, %v3260
        %v4077 = vsel %vm2239, %v3013, %v3262
        %v4078 = vsel %vm2239, %v3091, %v3264
        %v4079 = vsel %vm2239, %v3016, %v3266
        %v4080 = vsel %vm2239, %v3092, %v3268
        %v4081 = vsel %vm2239, %v3019, %v3270
        %v4082 = vsel %vm2239, %v3093, %v3272
        %v4083 = vsel %vm2239, %v3022, %v3274
        %v4084 = vsel %vm2239, %v3094, %v3276
        %v4085 = vsel %vm2239, %v3025, %v3278
        %v4086 = vsel %vm2305, %v4056, %v3385
        %v4087 = vsel %vm2305, %v4057, %v3387
        %v4088 = vsel %vm2305, %v4058, %v3389
        %v4089 = vsel %vm2305, %v4059, %v3391
        %v4090 = vsel %vm2305, %v4060, %v3393
        %v4091 = vsel %vm2305, %v4061, %v3395
        %v4092 = vsel %vm2305, %v4062, %v3397
        %v4093 = vsel %vm2305, %v4063, %v3399
        %v4094 = vsel %vm2305, %v4064, %v3401
        %v4095 = vsel %vm2305, %v4065, %v3403
        %v4096 = vsel %vm2305, %v4066, %v3405
        %v4097 = vsel %vm2305, %v4067, %v3407
        %v4098 = vsel %vm2305, %v4068, %v3409
        %v4099 = vsel %vm2305, %v4069, %v3411
        %v4100 = vsel %vm2305, %v4070, %v3413
        %v4101 = vsel %vm2305, %v4071, %v3415
        %v4102 = vsel %vm2305, %v4072, %v3417
        %v4103 = vsel %vm2305, %v4073, %v3419
        %v4104 = vsel %vm2305, %v4074, %v3421
        %v4105 = vsel %vm2305, %v4075, %v3423
        %v4106 = vsel %vm2305, %v4076, %v3425
        %v4107 = vsel %vm2305, %v4077, %v3427
        %v4108 = vsel %vm2305, %v4078, %v3429
        %v4109 = vsel %vm2305, %v4079, %v3431
        %v4110 = vsel %vm2305, %v4080, %v3433
        %v4111 = vsel %vm2305, %v4081, %v3435
        %v4112 = vsel %vm2305, %v4082, %v3437
        %v4113 = vsel %vm2305, %v4083, %v3439
        %v4114 = vsel %vm2305, %v4084, %v3441
        %v4115 = vsel %vm2305, %v4085, %v3443
        %v4116 = vsel %vm2371, %v4086, %v3477
        %v4117 = vsel %vm2371, %v4087, %v3479
        %v4118 = vsel %vm2371, %v4086, %v3481
        %v4119 = vsel %vm2371, %v4087, %v3483
        %v4120 = vsel %vm2371, %v4088, %v3485
        %v4121 = vsel %vm2371, %v4089, %v3487
        %v4122 = vsel %vm2371, %v4090, %v3489
        %v4123 = vsel %vm2371, %v4091, %v3491
        %v4124 = vsel %vm2371, %v4092, %v3493
        %v4125 = vsel %vm2371, %v4093, %v3495
        %v4126 = vsel %vm2371, %v4094, %v3497
        %v4127 = vsel %vm2371, %v4095, %v3499
        %v4128 = vsel %vm2371, %v4096, %v3501
        %v4129 = vsel %vm2371, %v4097, %v3503
        %v4130 = vsel %vm2371, %v4098, %v3505
        %v4131 = vsel %vm2371, %v4099, %v3507
        %v4132 = vsel %vm2371, %v4100, %v3509
        %v4133 = vsel %vm2371, %v4101, %v3511
        %v4134 = vsel %vm2371, %v4102, %v3513
        %v4135 = vsel %vm2371, %v4103, %v3515
        %v4136 = vsel %vm2371, %v4104, %v3517
        %v4137 = vsel %vm2371, %v4105, %v3519
        %v4138 = vsel %vm2371, %v4106, %v3521
        %v4139 = vsel %vm2371, %v4107, %v3523
        %v4140 = vsel %vm2371, %v4108, %v3525
        %v4141 = vsel %vm2371, %v4109, %v3527
        %v4142 = vsel %vm2371, %v4110, %v3529
        %v4143 = vsel %vm2371, %v4111, %v3531
        %v4144 = vsel %vm2371, %v4112, %v3533
        %v4145 = vsel %vm2371, %v4113, %v3535
        %v4146 = vsel %vm2371, %v4114, %v3537
        %v4147 = vsel %vm2371, %v4115, %v3539
        %v4148 = vsel %vm2437, %v4116, %v3585
        %v4149 = vsel %vm2437, %v4117, %v3587
        %v4150 = vsel %vm2437, %v4118, %v3589
        %v4151 = vsel %vm2437, %v4119, %v3591
        %v4152 = vsel %vm2437, %v4120, %v3593
        %v4153 = vsel %vm2437, %v4121, %v3595
        %v4154 = vsel %vm2437, %v4122, %v3597
        %v4155 = vsel %vm2437, %v4123, %v3599
        %v4156 = vsel %vm2437, %v4124, %v3601
        %v4157 = vsel %vm2437, %v4125, %v3603
        %v4158 = vsel %vm2437, %v4126, %v3605
        %v4159 = vsel %vm2437, %v4127, %v3607
        %v4160 = vsel %vm2437, %v4128, %v3609
        %v4161 = vsel %vm2437, %v4129, %v3611
        %v4162 = vsel %vm2437, %v4130, %v3613
        %v4163 = vsel %vm2437, %v4131, %v3615
        %v4164 = vsel %vm2437, %v4132, %v3617
        %v4165 = vsel %vm2437, %v4133, %v3619
        %v4166 = vsel %vm2437, %v4134, %v3621
        %v4167 = vsel %vm2437, %v4135, %v3623
        %v4168 = vsel %vm2437, %v4136, %v3625
        %v4169 = vsel %vm2437, %v4137, %v3627
        %v4170 = vsel %vm2437, %v4138, %v3629
        %v4171 = vsel %vm2437, %v4139, %v3631
        %v4172 = vsel %vm2437, %v4140, %v3633
        %v4173 = vsel %vm2437, %v4141, %v3635
        %v4174 = vsel %vm2437, %v4142, %v3637
        %v4175 = vsel %vm2437, %v4143, %v3639
        %v4176 = vsel %vm2437, %v4144, %v3641
        %v4177 = vsel %vm2437, %v4145, %v3643
        %v4178 = vsel %vm2437, %v4146, %v3645
        %v4179 = vsel %vm2437, %v4147, %v3647
        %vm4180 = vcmask 326656
        %v4181 = vsel %vm4180, %v4148, %v3691
        %v4182 = vsel %vm4180, %v4149, %v3693
        %v4183 = vsel %vm4180, %v4150, %v3695
        %v4184 = vsel %vm4180, %v4151, %v3697
        %v4185 = vsel %vm4180, %v4152, %v3699
        %v4186 = vsel %vm4180, %v4153, %v3701
        %v4187 = vsel %vm4180, %v4154, %v3703
        %v4188 = vsel %vm4180, %v4155, %v3705
        %v4189 = vsel %vm4180, %v4156, %v3707
        %v4190 = vsel %vm4180, %v4157, %v3709
        %v4191 = vsel %vm4180, %v4158, %v3711
        %v4192 = vsel %vm4180, %v4159, %v3713
        %v4193 = vsel %vm4180, %v4160, %v3715
        %v4194 = vsel %vm4180, %v4161, %v3717
        %v4195 = vsel %vm4180, %v4162, %v3719
        %v4196 = vsel %vm4180, %v4163, %v3721
        %v4197 = vsel %vm4180, %v4164, %v3723
        %v4198 = vsel %vm4180, %v4165, %v3725
        %v4199 = vsel %vm4180, %v4166, %v3727
        %v4200 = vsel %vm4180, %v4167, %v3729
        %v4201 = vsel %vm4180, %v4168, %v3731
        %v4202 = vsel %vm4180, %v4169, %v3733
        %v4203 = vsel %vm4180, %v4170, %v3735
        %v4204 = vsel %vm4180, %v4171, %v3737
        %v4205 = vsel %vm4180, %v4172, %v3739
        %v4206 = vsel %vm4180, %v4173, %v3741
        %v4207 = vsel %vm4180, %v4174, %v3743
        %v4208 = vsel %vm4180, %v4175, %v3745
        %v4209 = vsel %vm4180, %v4176, %v3747
        %v4210 = vsel %vm4180, %v4177, %v3749
        %v4211 = vsel %vm4180, %v4178, %v3751
        %v4212 = vsel %vm4180, %v4179, %v3753
        %vm4213 = vcmask 392192
        %v4214 = vsel %vm4213, %v4181, %v3787
        %v4215 = vsel %vm4213, %v4182, %v3789
        %v4216 = vsel %vm4213, %v4183, %v3791
        %v4217 = vsel %vm4213, %v4184, %v3793
        %v4218 = vsel %vm4213, %v4185, %v3795
        %v4219 = vsel %vm4213, %v4186, %v3797
        %v4220 = vsel %vm4213, %v4187, %v3799
        %v4221 = vsel %vm4213, %v4188, %v3801
        %v4222 = vsel %vm4213, %v4189, %v3803
        %v4223 = vsel %vm4213, %v4190, %v3805
        %v4224 = vsel %vm4213, %v4191, %v3807
        %v4225 = vsel %vm4213, %v4192, %v3809
        %v4226 = vsel %vm4213, %v4193, %v3811
        %v4227 = vsel %vm4213, %v4194, %v3813
        %v4228 = vsel %vm4213, %v4195, %v3815
        %v4229 = vsel %vm4213, %v4196, %v3817
        %v4230 = vsel %vm4213, %v4197, %v3819
        %v4231 = vsel %vm4213, %v4198, %v3821
        %v4232 = vsel %vm4213, %v4199, %v3823
        %v4233 = vsel %vm4213, %v4200, %v3825
        %v4234 = vsel %vm4213, %v4201, %v3827
        %v4235 = vsel %vm4213, %v4202, %v3829
        %v4236 = vsel %vm4213, %v4203, %v3831
        %v4237 = vsel %vm4213, %v4204, %v3833
        %v4238 = vsel %vm4213, %v4205, %v3835
        %v4239 = vsel %vm4213, %v4206, %v3837
        %v4240 = vsel %vm4213, %v4207, %v3839
        %v4241 = vsel %vm4213, %v4208, %v3841
        %v4242 = vsel %vm4213, %v4209, %v3843
        %v4243 = vsel %vm4213, %v4210, %v3845
        %v4244 = vsel %vm4213, %v4211, %v3843
        %v4245 = vsel %vm4213, %v4212, %v3845
        %vm4246 = vcmask 457728
        %v4247 = vsel %vm4246, %v4214, %v3877
        %v4248 = vsel %vm4246, %v4215, %v3879
        %v4249 = vsel %vm4246, %v4216, %v3881
        %v4250 = vsel %vm4246, %v4217, %v3883
        %v4251 = vsel %vm4246, %v4218, %v3885
        %v4252 = vsel %vm4246, %v4219, %v3887
        %v4253 = vsel %vm4246, %v4220, %v3889
        %v4254 = vsel %vm4246, %v4221, %v3891
        %v4255 = vsel %vm4246, %v4222, %v3893
        %v4256 = vsel %vm4246, %v4223, %v3895
        %v4257 = vsel %vm4246, %v4224, %v3897
        %v4258 = vsel %vm4246, %v4225, %v3899
        %v4259 = vsel %vm4246, %v4226, %v3901
        %v4260 = vsel %vm4246, %v4227, %v3903
        %v4261 = vsel %vm4246, %v4228, %v3905
        %v4262 = vsel %vm4246, %v4229, %v3907
        %v4263 = vsel %vm4246, %v4230, %v3909
        %v4264 = vsel %vm4246, %v4231, %v3911
        %v4265 = vsel %vm4246, %v4232, %v3913
        %v4266 = vsel %vm4246, %v4233, %v3915
        %v4267 = vsel %vm4246, %v4234, %v3917
        %v4268 = vsel %vm4246, %v4235, %v3919
        %v4269 = vsel %vm4246, %v4236, %v3921
        %v4270 = vsel %vm4246, %v4237, %v3923
        %v4271 = vsel %vm4246, %v4238, %v3925
        %v4272 = vsel %vm4246, %v4239, %v3927
        %v4273 = vsel %vm4246, %v4240, %v3929
        %v4274 = vsel %vm4246, %v4241, %v3931
        %v4275 = vsel %vm4246, %v4242, %v3933
        %v4276 = vsel %vm4246, %v4243, %v3935
        %v4277 = vsel %vm4246, %v4244, %v3933
        %v4278 = vsel %vm4246, %v4245, %v3935
        %vm4279 = vcmask 523264
        %v4280 = vsel %vm4279, %v4247, %v3967
        %v4281 = vsel %vm4279, %v4248, %v3969
        %v4282 = vsel %vm4279, %v4249, %v3971
        %v4283 = vsel %vm4279, %v4250, %v3973
        %v4284 = vsel %vm4279, %v4251, %v3975
        %v4285 = vsel %vm4279, %v4252, %v3977
        %v4286 = vsel %vm4279, %v4253, %v3979
        %v4287 = vsel %vm4279, %v4254, %v3981
        %v4288 = vsel %vm4279, %v4255, %v3983
        %v4289 = vsel %vm4279, %v4256, %v3985
        %v4290 = vsel %vm4279, %v4257, %v3987
        %v4291 = vsel %vm4279, %v4258, %v3989
        %v4292 = vsel %vm4279, %v4259, %v3991
        %v4293 = vsel %vm4279, %v4260, %v3993
        %v4294 = vsel %vm4279, %v4261, %v3995
        %v4295 = vsel %vm4279, %v4262, %v3997
        %v4296 = vsel %vm4279, %v4263, %v3999
        %v4297 = vsel %vm4279, %v4264, %v4001
        %v4298 = vsel %vm4279, %v4265, %v4003
        %v4299 = vsel %vm4279, %v4266, %v4005
        %v4300 = vsel %vm4279, %v4267, %v4007
        %v4301 = vsel %vm4279, %v4268, %v4009
        %v4302 = vsel %vm4279, %v4269, %v4011
        %v4303 = vsel %vm4279, %v4270, %v4013
        %v4304 = vsel %vm4279, %v4271, %v4015
        %v4305 = vsel %vm4279, %v4272, %v4017
        %v4306 = vsel %vm4279, %v4273, %v4019
        %v4307 = vsel %vm4279, %v4274, %v4021
        %v4308 = vsel %vm4279, %v4275, %v4023
        %v4309 = vsel %vm4279, %v4276, %v4025
        %v4310 = vsel %vm4279, %v4277, %v4023
        %v4311 = vsel %vm4279, %v4278, %v4025
        %v4312 = vld [vmem:[%s5] sm:$0xff]
        %v4313 = vld [vmem:[%s5 + $0x8] sm:$0xff]
        %v4314 = vld [vmem:[%s5 + $0x10] sm:$0xff]
        %v4315 = vld [vmem:[%s5 + $0x18] sm:$0xff]
        %v4316 = vld [vmem:[%s5 + $0x20] sm:$0xff]
        %v4317 = vld [vmem:[%s5 + $0x28] sm:$0xff]
        %v4318 = vld [vmem:[%s5 + $0x30] sm:$0xff]
        %v4319 = vld [vmem:[%s5 + $0x38] sm:$0xff]
        %v4320 = vld [vmem:[%s5 + $0x40] sm:$0xff]
        %v4321 = vld [vmem:[%s6] sm:$0x1]
        %v4323 = vlaneseq
        %v4324 = vshrl.u32 %v4323, 7
        %v4325 = vsub.s32 0, %v4324
        %v4326 = vrot.slane %v4321, %v4325
        %vm4328 = vcmask 588800
        %v4330 = vsel %vm4328, %v4280, 0
        %v4333 = vsel %vm4328, %v4281, 0
        %v4336 = vsel %vm4328, %v4282, 0
        %v4339 = vsel %vm4328, %v4283, 0
        %v4342 = vsel %vm4328, %v4284, 0
        %v4345 = vsel %vm4328, %v4285, 0
        %v4348 = vsel %vm4328, %v4286, 0
        %v4351 = vsel %vm4328, %v4287, 0
        %v4354 = vsel %vm4328, %v4288, 0
        %v4357 = vsel %vm4328, %v4289, 0
        %v4360 = vsel %vm4328, %v4290, 0
        %v4363 = vsel %vm4328, %v4291, 0
        %v4366 = vsel %vm4328, %v4292, 0
        %v4369 = vsel %vm4328, %v4293, 0
        %v4372 = vsel %vm4328, %v4294, 0
        %v4375 = vsel %vm4328, %v4295, 0
        %v4378 = vsel %vm4328, %v4296, 0
        %v4381 = vsel %vm4328, %v4297, 0
        %v4384 = vsel %vm4328, %v4298, 0
        %v4387 = vsel %vm4328, %v4299, 0
        %v4390 = vsel %vm4328, %v4300, 0
        %v4393 = vsel %vm4328, %v4301, 0
        %v4396 = vsel %vm4328, %v4302, 0
        %v4399 = vsel %vm4328, %v4303, 0
        %v4402 = vsel %vm4328, %v4304, 0
        %v4405 = vsel %vm4328, %v4305, 0
        %v4408 = vsel %vm4328, %v4306, 0
        %v4411 = vsel %vm4328, %v4307, 0
        %v4414 = vsel %vm4328, %v4308, 0
        %v4417 = vsel %vm4328, %v4309, 0
        %v4420 = vsel %vm4328, %v4310, 0
        %v4423 = vsel %vm4328, %v4311, 0
        %4425 = vmatprep.subr.mxu0 0.0
        %4426 = vmatpush1.msra.mxu0 %v4312
        %4427 = vmatprep.subr.mxu0 0.0
        %4428 = vmatpush1.msra.mxu0 %v4313
        %4429 = vmatprep.subr.mxu0 0.0
        %4430 = vmatpush1.msra.mxu0 %v4314
        %4431 = vmatprep.subr.mxu0 0.0
        %4432 = vmatpush1.msra.mxu0 %v4315
        %4433 = vmatprep.subr.mxu0 0.0
        %4434 = vmatpush1.msra.mxu0 %v4316
        %4435 = vmatprep.subr.mxu0 0.0
        %4436 = vmatpush1.msra.mxu0 %v4317
        %4437 = vmatprep.subr.mxu0 0.0
        %4438 = vmatpush1.msra.mxu0 %v4318
        %4439 = vmatprep.subr.mxu0 0.0
        %4440 = vmatpush1.msra.mxu0 %v4319
        %4441 = vmatprep.subr.mxu0 0.0
        %4442 = vmatpush1.msra.mxu0 %v4320
        %4443 = vmatprep.subr.mxu0 0.0
        %4444 = vmatpush1.msra.mxu0 0.0
        %4445 = vmatprep.subr.mxu0 0.0
        %4446 = vmatpush1.msra.mxu0 0.0
        %4447 = vmatprep.subr.mxu0 0.0
        %4448 = vmatpush1.msra.mxu0 0.0
        %4449 = vmatprep.subr.mxu0 0.0
        %4450 = vmatpush1.msra.mxu0 0.0
        %4451 = vmatprep.subr.mxu0 0.0
        %4452 = vmatpush1.msra.mxu0 0.0
        %4453 = vmatprep.subr.mxu0 0.0
        %4454 = vmatpush1.msra.mxu0 0.0
        %4455 = vmatprep.subr.mxu0 0.0
        %4456 = vmatpush1.msra.mxu0 0.0
        %4457 = vmatprep.subr.mxu0 0.0
        %4458 = vmatpush1.msra.mxu0 0.0
        %4459 = vmatprep.subr.mxu0 0.0
        %4460 = vmatpush1.msra.mxu0 0.0
        %4461 = vmatprep.subr.mxu0 0.0
        %4462 = vmatpush1.msra.mxu0 0.0
        %4463 = vmatprep.subr.mxu0 0.0
        %4464 = vmatpush1.msra.mxu0 0.0
        %4465 = vmatprep.subr.mxu0 0.0
        %4466 = vmatpush1.msra.mxu0 0.0
        %4467 = vmatprep.subr.mxu0 0.0
        %4468 = vmatpush1.msra.mxu0 0.0
        %4469 = vmatprep.subr.mxu0 0.0
        %4470 = vmatpush1.msra.mxu0 0.0
        %4471 = vmatprep.subr.mxu0 0.0
        %4472 = vmatpush1.msra.mxu0 0.0
        %4473 = vmatprep.subr.mxu0 0.0
        %4474 = vmatpush1.msra.mxu0 0.0
        %4475 = vmatprep.subr.mxu0 0.0
        %4476 = vmatpush1.msra.mxu0 0.0
        %4477 = vmatprep.subr.mxu0 0.0
        %4478 = vmatpush1.msra.mxu0 0.0
        %4479 = vmatprep.subr.mxu0 0.0
        %4480 = vmatpush1.msra.mxu0 0.0
        %4481 = vmatprep.subr.mxu0 0.0
        %4482 = vmatpush1.msra.mxu0 0.0
        %4483 = vmatprep.subr.mxu0 0.0
        %4484 = vmatpush1.msra.mxu0 0.0
        %4485 = vmatprep.subr.mxu0 0.0
        %4486 = vmatpush1.msra.mxu0 0.0
        %4487 = vmatprep.subr.mxu0 0.0
        %4488 = vmatpush1.msra.mxu0 0.0
        %4489 = vmatprep.mubr.f32.mxu0 0.0
        %4490 = vmatmul.mubr.f32.gmra.mrb[0].mxu0 %v4330
        %v4491 = vpop.f32.mrb[0].mxu0
        %v4492 = vadd.f32 %v4326, %v4491
        %v4493 = vpop.f32.mrb[0].mxu0
        %4494 = vmatprep.mubr.f32.mxu0 0.0
        %4495 = vmatmul.mubr.f32.gmra.mrb[0].mxu0 %v4333
        %v4496 = vpop.f32.mrb[0].mxu0
        %v4497 = vadd.f32 %v4326, %v4496
        %v4498 = vpop.f32.mrb[0].mxu0
        %4499 = vmatprep.mubr.f32.mxu0 0.0
        %4500 = vmatmul.mubr.f32.gmra.mrb[0].mxu0 %v4336
        %v4501 = vpop.f32.mrb[0].mxu0
        %v4502 = vadd.f32 %v4326, %v4501
        %v4503 = vpop.f32.mrb[0].mxu0
        %4504 = vmatprep.mubr.f32.mxu0 0.0
        %4505 = vmatmul.mubr.f32.gmra.mrb[0].mxu0 %v4339
        %v4506 = vpop.f32.mrb[0].mxu0
        %v4507 = vadd.f32 %v4326, %v4506
        %v4508 = vpop.f32.mrb[0].mxu0
        %4509 = vmatprep.mubr.f32.mxu0 0.0
        %4510 = vmatmul.mubr.f32.gmra.mrb[0].mxu0 %v4342
        %v4511 = vpop.f32.mrb[0].mxu0
        %v4512 = vadd.f32 %v4326, %v4511
        %v4513 = vpop.f32.mrb[0].mxu0
        %4514 = vmatprep.mubr.f32.mxu0 0.0
        %4515 = vmatmul.mubr.f32.gmra.mrb[0].mxu0 %v4345
        %v4516 = vpop.f32.mrb[0].mxu0
        %v4517 = vadd.f32 %v4326, %v4516
        %v4518 = vpop.f32.mrb[0].mxu0
        %4519 = vmatprep.mubr.f32.mxu0 0.0
        %4520 = vmatmul.mubr.f32.gmra.mrb[0].mxu0 %v4348
        %v4521 = vpop.f32.mrb[0].mxu0
        %v4522 = vadd.f32 %v4326, %v4521
        %v4523 = vpop.f32.mrb[0].mxu0
        %4524 = vmatprep.mubr.f32.mxu0 0.0
        %4525 = vmatmul.mubr.f32.gmra.mrb[0].mxu0 %v4351
        %v4526 = vpop.f32.mrb[0].mxu0
        %v4527 = vadd.f32 %v4326, %v4526
        %v4528 = vpop.f32.mrb[0].mxu0
        %4529 = vmatprep.mubr.f32.mxu0 0.0
        %4530 = vmatmul.mubr.f32.gmra.mrb[0].mxu0 %v4354
        %v4531 = vpop.f32.mrb[0].mxu0
        %v4532 = vadd.f32 %v4326, %v4531
        %v4533 = vpop.f32.mrb[0].mxu0
        %4534 = vmatprep.mubr.f32.mxu0 0.0
        %4535 = vmatmul.mubr.f32.gmra.mrb[0].mxu0 %v4357
        %v4536 = vpop.f32.mrb[0].mxu0
        %v4537 = vadd.f32 %v4326, %v4536
        %v4538 = vpop.f32.mrb[0].mxu0
        %4539 = vmatprep.mubr.f32.mxu0 0.0
        %4540 = vmatmul.mubr.f32.gmra.mrb[0].mxu0 %v4360
        %v4541 = vpop.f32.mrb[0].mxu0
        %v4542 = vadd.f32 %v4326, %v4541
        %v4543 = vpop.f32.mrb[0].mxu0
        %4544 = vmatprep.mubr.f32.mxu0 0.0
        %4545 = vmatmul.mubr.f32.gmra.mrb[0].mxu0 %v4363
        %v4546 = vpop.f32.mrb[0].mxu0
        %v4547 = vadd.f32 %v4326, %v4546
        %v4548 = vpop.f32.mrb[0].mxu0
        %4549 = vmatprep.mubr.f32.mxu0 0.0
        %4550 = vmatmul.mubr.f32.gmra.mrb[0].mxu0 %v4366
        %v4551 = vpop.f32.mrb[0].mxu0
        %v4552 = vadd.f32 %v4326, %v4551
        %v4553 = vpop.f32.mrb[0].mxu0
        %4554 = vmatprep.mubr.f32.mxu0 0.0
        %4555 = vmatmul.mubr.f32.gmra.mrb[0].mxu0 %v4369
        %v4556 = vpop.f32.mrb[0].mxu0
        %v4557 = vadd.f32 %v4326, %v4556
        %v4558 = vpop.f32.mrb[0].mxu0
        %4559 = vmatprep.mubr.f32.mxu0 0.0
        %4560 = vmatmul.mubr.f32.gmra.mrb[0].mxu0 %v4372
        %v4561 = vpop.f32.mrb[0].mxu0
        %v4562 = vadd.f32 %v4326, %v4561
        %v4563 = vpop.f32.mrb[0].mxu0
        %4564 = vmatprep.mubr.f32.mxu0 0.0
        %4565 = vmatmul.mubr.f32.gmra.mrb[0].mxu0 %v4375
        %v4566 = vpop.f32.mrb[0].mxu0
        %v4567 = vadd.f32 %v4326, %v4566
        %v4568 = vpop.f32.mrb[0].mxu0
        %4569 = vmatprep.mubr.f32.mxu0 0.0
        %4570 = vmatmul.mubr.f32.gmra.mrb[0].mxu0 %v4378
        %v4571 = vpop.f32.mrb[0].mxu0
        %v4572 = vadd.f32 %v4326, %v4571
        %v4573 = vpop.f32.mrb[0].mxu0
        %4574 = vmatprep.mubr.f32.mxu0 0.0
        %4575 = vmatmul.mubr.f32.gmra.mrb[0].mxu0 %v4381
        %v4576 = vpop.f32.mrb[0].mxu0
        %v4577 = vadd.f32 %v4326, %v4576
        %v4578 = vpop.f32.mrb[0].mxu0
        %4579 = vmatprep.mubr.f32.mxu0 0.0
        %4580 = vmatmul.mubr.f32.gmra.mrb[0].mxu0 %v4384
        %v4581 = vpop.f32.mrb[0].mxu0
        %v4582 = vadd.f32 %v4326, %v4581
        %v4583 = vpop.f32.mrb[0].mxu0
        %4584 = vmatprep.mubr.f32.mxu0 0.0
        %4585 = vmatmul.mubr.f32.gmra.mrb[0].mxu0 %v4387
        %v4586 = vpop.f32.mrb[0].mxu0
        %v4587 = vadd.f32 %v4326, %v4586
        %v4588 = vpop.f32.mrb[0].mxu0
        %4589 = vmatprep.mubr.f32.mxu0 0.0
        %4590 = vmatmul.mubr.f32.gmra.mrb[0].mxu0 %v4390
        %v4591 = vpop.f32.mrb[0].mxu0
        %v4592 = vadd.f32 %v4326, %v4591
        %v4593 = vpop.f32.mrb[0].mxu0
        %4594 = vmatprep.mubr.f32.mxu0 0.0
        %4595 = vmatmul.mubr.f32.gmra.mrb[0].mxu0 %v4393
        %v4596 = vpop.f32.mrb[0].mxu0
        %v4597 = vadd.f32 %v4326, %v4596
        %v4598 = vpop.f32.mrb[0].mxu0
        %4599 = vmatprep.mubr.f32.mxu0 0.0
        %4600 = vmatmul.mubr.f32.gmra.mrb[0].mxu0 %v4396
        %v4601 = vpop.f32.mrb[0].mxu0
        %v4602 = vadd.f32 %v4326, %v4601
        %v4603 = vpop.f32.mrb[0].mxu0
        %4604 = vmatprep.mubr.f32.mxu0 0.0
        %4605 = vmatmul.mubr.f32.gmra.mrb[0].mxu0 %v4399
        %v4606 = vpop.f32.mrb[0].mxu0
        %v4607 = vadd.f32 %v4326, %v4606
        %v4608 = vpop.f32.mrb[0].mxu0
        %4609 = vmatprep.mubr.f32.mxu0 0.0
        %4610 = vmatmul.mubr.f32.gmra.mrb[0].mxu0 %v4402
        %v4611 = vpop.f32.mrb[0].mxu0
        %v4612 = vadd.f32 %v4326, %v4611
        %v4613 = vpop.f32.mrb[0].mxu0
        %4614 = vmatprep.mubr.f32.mxu0 0.0
        %4615 = vmatmul.mubr.f32.gmra.mrb[0].mxu0 %v4405
        %v4616 = vpop.f32.mrb[0].mxu0
        %v4617 = vadd.f32 %v4326, %v4616
        %v4618 = vpop.f32.mrb[0].mxu0
        %4619 = vmatprep.mubr.f32.mxu0 0.0
        %4620 = vmatmul.mubr.f32.gmra.mrb[0].mxu0 %v4408
        %v4621 = vpop.f32.mrb[0].mxu0
        %v4622 = vadd.f32 %v4326, %v4621
        %v4623 = vpop.f32.mrb[0].mxu0
        %4624 = vmatprep.mubr.f32.mxu0 0.0
        %4625 = vmatmul.mubr.f32.gmra.mrb[0].mxu0 %v4411
        %v4626 = vpop.f32.mrb[0].mxu0
        %v4627 = vadd.f32 %v4326, %v4626
        %v4628 = vpop.f32.mrb[0].mxu0
        %4629 = vmatprep.mubr.f32.mxu0 0.0
        %4630 = vmatmul.mubr.f32.gmra.mrb[0].mxu0 %v4414
        %v4631 = vpop.f32.mrb[0].mxu0
        %v4632 = vadd.f32 %v4326, %v4631
        %v4633 = vpop.f32.mrb[0].mxu0
        %4634 = vmatprep.mubr.f32.mxu0 0.0
        %4635 = vmatmul.mubr.f32.gmra.mrb[0].mxu0 %v4417
        %v4636 = vpop.f32.mrb[0].mxu0
        %v4637 = vadd.f32 %v4326, %v4636
        %v4638 = vpop.f32.mrb[0].mxu0
        %4639 = vmatprep.mubr.f32.mxu0 0.0
        %4640 = vmatmul.mubr.f32.gmra.mrb[0].mxu0 %v4420
        %v4641 = vpop.f32.mrb[0].mxu0
        %v4642 = vadd.f32 %v4326, %v4641
        %v4643 = vpop.f32.mrb[0].mxu0
        %4644 = vmatprep.mubr.f32.mxu0 0.0
        %4645 = vmatmul.mubr.f32.gmra.mrb[0].mxu0 %v4423
        %v4646 = vpop.f32.mrb[0].mxu0
        %v4647 = vadd.f32 %v4326, %v4646
        %v4648 = vpop.f32.mrb[0].mxu0
        %4649 = vdwg.mxu0
        %v4650 = vmul.f32 %v4492, 0.01
        %v4651 = vmul.f32 %v4497, 0.01
        %v4652 = vmul.f32 %v4502, 0.01
        %v4653 = vmul.f32 %v4507, 0.01
        %v4654 = vmul.f32 %v4512, 0.01
        %v4655 = vmul.f32 %v4517, 0.01
        %v4656 = vmul.f32 %v4522, 0.01
        %v4657 = vmul.f32 %v4527, 0.01
        %v4658 = vmul.f32 %v4532, 0.01
        %v4659 = vmul.f32 %v4537, 0.01
        %v4660 = vmul.f32 %v4542, 0.01
        %v4661 = vmul.f32 %v4547, 0.01
        %v4662 = vmul.f32 %v4552, 0.01
        %v4663 = vmul.f32 %v4557, 0.01
        %v4664 = vmul.f32 %v4562, 0.01
        %v4665 = vmul.f32 %v4567, 0.01
        %v4666 = vmul.f32 %v4572, 0.01
        %v4667 = vmul.f32 %v4577, 0.01
        %v4668 = vmul.f32 %v4582, 0.01
        %v4669 = vmul.f32 %v4587, 0.01
        %v4670 = vmul.f32 %v4592, 0.01
        %v4671 = vmul.f32 %v4597, 0.01
        %v4672 = vmul.f32 %v4602, 0.01
        %v4673 = vmul.f32 %v4607, 0.01
        %v4674 = vmul.f32 %v4612, 0.01
        %v4675 = vmul.f32 %v4617, 0.01
        %v4676 = vmul.f32 %v4622, 0.01
        %v4677 = vmul.f32 %v4627, 0.01
        %v4678 = vmul.f32 %v4632, 0.01
        %v4679 = vmul.f32 %v4637, 0.01
        %v4680 = vmul.f32 %v4642, 0.01
        %v4681 = vmul.f32 %v4647, 0.01
        %v4682 = vmax.f32 %v4492, %v4650
        %v4683 = vmax.f32 %v4497, %v4651
        %v4684 = vmax.f32 %v4502, %v4652
        %v4685 = vmax.f32 %v4507, %v4653
        %v4686 = vmax.f32 %v4512, %v4654
        %v4687 = vmax.f32 %v4517, %v4655
        %v4688 = vmax.f32 %v4522, %v4656
        %v4689 = vmax.f32 %v4527, %v4657
        %v4690 = vmax.f32 %v4532, %v4658
        %v4691 = vmax.f32 %v4537, %v4659
        %v4692 = vmax.f32 %v4542, %v4660
        %v4693 = vmax.f32 %v4547, %v4661
        %v4694 = vmax.f32 %v4552, %v4662
        %v4695 = vmax.f32 %v4557, %v4663
        %v4696 = vmax.f32 %v4562, %v4664
        %v4697 = vmax.f32 %v4567, %v4665
        %v4698 = vmax.f32 %v4572, %v4666
        %v4699 = vmax.f32 %v4577, %v4667
        %v4700 = vmax.f32 %v4582, %v4668
        %v4701 = vmax.f32 %v4587, %v4669
        %v4702 = vmax.f32 %v4592, %v4670
        %v4703 = vmax.f32 %v4597, %v4671
        %v4704 = vmax.f32 %v4602, %v4672
        %v4705 = vmax.f32 %v4607, %v4673
        %v4706 = vmax.f32 %v4612, %v4674
        %v4707 = vmax.f32 %v4617, %v4675
        %v4708 = vmax.f32 %v4622, %v4676
        %v4709 = vmax.f32 %v4627, %v4677
        %v4710 = vmax.f32 %v4632, %v4678
        %v4711 = vmax.f32 %v4637, %v4679
        %v4712 = vmax.f32 %v4642, %v4680
        %v4713 = vmax.f32 %v4647, %v4681
        %v4714 = vld [vmem:[%s13] sm:$0x1]
        %v4716 = vlaneseq
        %v4717 = vshrl.u32 %v4716, 7
        %v4718 = vsub.s32 0, %v4717
        %v4719 = vrot.slane %v4714, %v4718
        %v4721 = vmul.f32 %v4682, %v4719
        %v4722 = vmul.f32 %v4683, %v4719
        %v4723 = vmul.f32 %v4684, %v4719
        %v4724 = vmul.f32 %v4685, %v4719
        %v4725 = vmul.f32 %v4686, %v4719
        %v4726 = vmul.f32 %v4687, %v4719
        %v4727 = vmul.f32 %v4688, %v4719
        %v4728 = vmul.f32 %v4689, %v4719
        %v4729 = vmul.f32 %v4690, %v4719
        %v4730 = vmul.f32 %v4691, %v4719
        %v4731 = vmul.f32 %v4692, %v4719
        %v4732 = vmul.f32 %v4693, %v4719
        %v4733 = vmul.f32 %v4694, %v4719
        %v4734 = vmul.f32 %v4695, %v4719
        %v4735 = vmul.f32 %v4696, %v4719
        %v4736 = vmul.f32 %v4697, %v4719
        %v4737 = vmul.f32 %v4698, %v4719
        %v4738 = vmul.f32 %v4699, %v4719
        %v4739 = vmul.f32 %v4700, %v4719
        %v4740 = vmul.f32 %v4701, %v4719
        %v4741 = vmul.f32 %v4702, %v4719
        %v4742 = vmul.f32 %v4703, %v4719
        %v4743 = vmul.f32 %v4704, %v4719
        %v4744 = vmul.f32 %v4705, %v4719
        %v4745 = vmul.f32 %v4706, %v4719
        %v4746 = vmul.f32 %v4707, %v4719
        %v4747 = vmul.f32 %v4708, %v4719
        %v4748 = vmul.f32 %v4709, %v4719
        %v4749 = vmul.f32 %v4710, %v4719
        %v4750 = vmul.f32 %v4711, %v4719
        %v4751 = vmul.f32 %v4712, %v4719
        %v4752 = vmul.f32 %v4713, %v4719
        %v4753 = vld [vmem:[%s14] sm:$0x1]
        %v4755 = vlaneseq
        %v4756 = vshrl.u32 %v4755, 7
        %v4757 = vsub.s32 0, %v4756
        %v4758 = vrot.slane %v4753, %v4757
        %v4760 = vadd.f32 %v4721, %v4758
        %v4761 = vadd.f32 %v4722, %v4758
        %v4762 = vadd.f32 %v4723, %v4758
        %v4763 = vadd.f32 %v4724, %v4758
        %v4764 = vadd.f32 %v4725, %v4758
        %v4765 = vadd.f32 %v4726, %v4758
        %v4766 = vadd.f32 %v4727, %v4758
        %v4767 = vadd.f32 %v4728, %v4758
        %v4768 = vadd.f32 %v4729, %v4758
        %v4769 = vadd.f32 %v4730, %v4758
        %v4770 = vadd.f32 %v4731, %v4758
        %v4771 = vadd.f32 %v4732, %v4758
        %v4772 = vadd.f32 %v4733, %v4758
        %v4773 = vadd.f32 %v4734, %v4758
        %v4774 = vadd.f32 %v4735, %v4758
        %v4775 = vadd.f32 %v4736, %v4758
        %v4776 = vadd.f32 %v4737, %v4758
        %v4777 = vadd.f32 %v4738, %v4758
        %v4778 = vadd.f32 %v4739, %v4758
        %v4779 = vadd.f32 %v4740, %v4758
        %v4780 = vadd.f32 %v4741, %v4758
        %v4781 = vadd.f32 %v4742, %v4758
        %v4782 = vadd.f32 %v4743, %v4758
        %v4783 = vadd.f32 %v4744, %v4758
        %v4784 = vadd.f32 %v4745, %v4758
        %v4785 = vadd.f32 %v4746, %v4758
        %v4786 = vadd.f32 %v4747, %v4758
        %v4787 = vadd.f32 %v4748, %v4758
        %v4788 = vadd.f32 %v4749, %v4758
        %v4789 = vadd.f32 %v4750, %v4758
        %v4790 = vadd.f32 %v4751, %v4758
        %v4791 = vadd.f32 %v4752, %v4758
        %v4824 = vrot.slane %v4760, 7
        %v4825 = vrot.slane %v4761, 7
        %v4826 = vsel %vm1099, %v4824, %v4825
        %v4827 = vrot.slane %v4762, 7
        %v4828 = vrot.slane %v4763, 7
        %v4829 = vsel %vm1099, %v4827, %v4828
        %v4830 = vrot.slane %v4764, 7
        %v4831 = vrot.slane %v4765, 7
        %v4832 = vsel %vm1099, %v4830, %v4831
        %v4833 = vrot.slane %v4766, 7
        %v4834 = vrot.slane %v4767, 7
        %v4835 = vsel %vm1099, %v4833, %v4834
        %v4836 = vrot.slane %v4768, 7
        %v4837 = vrot.slane %v4769, 7
        %v4838 = vsel %vm1099, %v4836, %v4837
        %v4839 = vrot.slane %v4770, 7
        %v4840 = vrot.slane %v4771, 7
        %v4841 = vsel %vm1099, %v4839, %v4840
        %v4842 = vrot.slane %v4772, 7
        %v4843 = vrot.slane %v4773, 7
        %v4844 = vsel %vm1099, %v4842, %v4843
        %v4845 = vrot.slane %v4774, 7
        %v4846 = vrot.slane %v4775, 7
        %v4847 = vsel %vm1099, %v4845, %v4846
        %v4848 = vrot.slane %v4776, 7
        %v4849 = vrot.slane %v4777, 7
        %v4850 = vsel %vm1099, %v4848, %v4849
        %v4851 = vrot.slane %v4778, 7
        %v4852 = vrot.slane %v4779, 7
        %v4853 = vsel %vm1099, %v4851, %v4852
        %v4854 = vrot.slane %v4780, 7
        %v4855 = vrot.slane %v4781, 7
        %v4856 = vsel %vm1099, %v4854, %v4855
        %v4857 = vrot.slane %v4782, 7
        %v4858 = vrot.slane %v4783, 7
        %v4859 = vsel %vm1099, %v4857, %v4858
        %v4860 = vrot.slane %v4784, 7
        %v4861 = vrot.slane %v4785, 7
        %v4862 = vsel %vm1099, %v4860, %v4861
        %v4863 = vrot.slane %v4786, 7
        %v4864 = vrot.slane %v4787, 7
        %v4865 = vsel %vm1099, %v4863, %v4864
        %v4866 = vrot.slane %v4788, 7
        %v4867 = vrot.slane %v4789, 7
        %v4868 = vsel %vm1099, %v4866, %v4867
        %v4869 = vrot.slane %v4790, 7
        %v4870 = vrot.slane %v4791, 7
        %v4871 = vsel %vm1099, %v4869, %v4870
        %v4919 = vsel %vm1099, 0.0, %v4824
        %v4920 = vsel %vm1099, 0.0, %v4827
        %v4921 = vsel %vm1099, 0.0, %v4830
        %v4922 = vsel %vm1099, 0.0, %v4833
        %v4923 = vsel %vm1099, 0.0, %v4836
        %v4924 = vsel %vm1099, 0.0, %v4839
        %v4925 = vsel %vm1099, 0.0, %v4842
        %v4926 = vsel %vm1099, 0.0, %v4845
        %v4927 = vsel %vm1099, 0.0, %v4848
        %v4928 = vsel %vm1099, 0.0, %v4851
        %v4929 = vsel %vm1099, 0.0, %v4854
        %v4930 = vsel %vm1099, 0.0, %v4857
        %v4931 = vsel %vm1099, 0.0, %v4860
        %v4932 = vsel %vm1099, 0.0, %v4863
        %v4933 = vsel %vm1099, 0.0, %v4866
        %v4934 = vsel %vm1099, 0.0, %v4869
        %v4935 = vsel %vm1099, %v4825, 0.0
        %v4936 = vsel %vm1099, %v4828, 0.0
        %v4937 = vsel %vm1099, %v4831, 0.0
        %v4938 = vsel %vm1099, %v4834, 0.0
        %v4939 = vsel %vm1099, %v4837, 0.0
        %v4940 = vsel %vm1099, %v4840, 0.0
        %v4941 = vsel %vm1099, %v4843, 0.0
        %v4942 = vsel %vm1099, %v4846, 0.0
        %v4943 = vsel %vm1099, %v4849, 0.0
        %v4944 = vsel %vm1099, %v4852, 0.0
        %v4945 = vsel %vm1099, %v4855, 0.0
        %v4946 = vsel %vm1099, %v4858, 0.0
        %v4947 = vsel %vm1099, %v4861, 0.0
        %v4948 = vsel %vm1099, %v4864, 0.0
        %v4949 = vsel %vm1099, %v4867, 0.0
        %v4950 = vsel %vm1099, %v4870, 0.0
        %v4981 = vrot.slane %v4919, 2
        %v4982 = vrot.slane %v4826, 2
        %v4983 = vsel %vm1442, %v4981, %v4982
        %v4984 = vrot.slane %v4935, 2
        %v4985 = vsel %vm1442, %v4982, %v4984
        %v4986 = vrot.slane %v4920, 2
        %v4987 = vrot.slane %v4829, 2
        %v4988 = vsel %vm1442, %v4986, %v4987
        %v4989 = vrot.slane %v4936, 2
        %v4990 = vsel %vm1442, %v4987, %v4989
        %v4991 = vrot.slane %v4921, 2
        %v4992 = vrot.slane %v4832, 2
        %v4993 = vsel %vm1442, %v4991, %v4992
        %v4994 = vrot.slane %v4937, 2
        %v4995 = vsel %vm1442, %v4992, %v4994
        %v4996 = vrot.slane %v4922, 2
        %v4997 = vrot.slane %v4835, 2
        %v4998 = vsel %vm1442, %v4996, %v4997
        %v4999 = vrot.slane %v4938, 2
        %v5000 = vsel %vm1442, %v4997, %v4999
        %v5001 = vrot.slane %v4923, 2
        %v5002 = vrot.slane %v4838, 2
        %v5003 = vsel %vm1442, %v5001, %v5002
        %v5004 = vrot.slane %v4939, 2
        %v5005 = vsel %vm1442, %v5002, %v5004
        %v5006 = vrot.slane %v4924, 2
        %v5007 = vrot.slane %v4841, 2
        %v5008 = vsel %vm1442, %v5006, %v5007
        %v5009 = vrot.slane %v4940, 2
        %v5010 = vsel %vm1442, %v5007, %v5009
        %v5011 = vrot.slane %v4925, 2
        %v5012 = vrot.slane %v4844, 2
        %v5013 = vsel %vm1442, %v5011, %v5012
        %v5014 = vrot.slane %v4941, 2
        %v5015 = vsel %vm1442, %v5012, %v5014
        %v5016 = vrot.slane %v4926, 2
        %v5017 = vrot.slane %v4847, 2
        %v5018 = vsel %vm1442, %v5016, %v5017
        %v5019 = vrot.slane %v4942, 2
        %v5020 = vsel %vm1442, %v5017, %v5019
        %v5021 = vrot.slane %v4927, 2
        %v5022 = vrot.slane %v4850, 2
        %v5023 = vsel %vm1442, %v5021, %v5022
        %v5024 = vrot.slane %v4943, 2
        %v5025 = vsel %vm1442, %v5022, %v5024
        %v5026 = vrot.slane %v4928, 2
        %v5027 = vrot.slane %v4853, 2
        %v5028 = vsel %vm1442, %v5026, %v5027
        %v5029 = vrot.slane %v4944, 2
        %v5030 = vsel %vm1442, %v5027, %v5029
        %v5031 = vrot.slane %v4929, 2
        %v5032 = vrot.slane %v4856, 2
        %v5033 = vsel %vm1442, %v5031, %v5032
        %v5034 = vrot.slane %v4945, 2
        %v5035 = vsel %vm1442, %v5032, %v5034
        %v5036 = vrot.slane %v4930, 2
        %v5037 = vrot.slane %v4859, 2
        %v5038 = vsel %vm1442, %v5036, %v5037
        %v5039 = vrot.slane %v4946, 2
        %v5040 = vsel %vm1442, %v5037, %v5039
        %v5041 = vrot.slane %v4931, 2
        %v5042 = vrot.slane %v4862, 2
        %v5043 = vsel %vm1442, %v5041, %v5042
        %v5044 = vrot.slane %v4947, 2
        %v5045 = vsel %vm1442, %v5042, %v5044
        %v5046 = vrot.slane %v4932, 2
        %v5047 = vrot.slane %v4865, 2
        %v5048 = vsel %vm1442, %v5046, %v5047
        %v5049 = vrot.slane %v4948, 2
        %v5050 = vsel %vm1442, %v5047, %v5049
        %v5051 = vrot.slane %v4933, 2
        %v5052 = vrot.slane %v4868, 2
        %v5053 = vsel %vm1442, %v5051, %v5052
        %v5054 = vrot.slane %v4949, 2
        %v5055 = vsel %vm1442, %v5052, %v5054
        %5056 = vrot.lane.b32.xlu0 %v4983, 8
        %v5057 = vpop.permute.xlu0 %5056
        %5058 = vrot.lane.b32.xlu0 %v4985, 8
        %v5059 = vpop.permute.xlu0 %5058
        %5060 = vrot.lane.b32.xlu0 %v4988, 8
        %v5061 = vpop.permute.xlu0 %5060
        %5062 = vrot.lane.b32.xlu0 %v4990, 8
        %v5063 = vpop.permute.xlu0 %5062
        %5064 = vrot.lane.b32.xlu0 %v4993, 8
        %v5065 = vpop.permute.xlu0 %5064
        %5066 = vrot.lane.b32.xlu0 %v4995, 8
        %v5067 = vpop.permute.xlu0 %5066
        %5068 = vrot.lane.b32.xlu0 %v4998, 8
        %v5069 = vpop.permute.xlu0 %5068
        %5070 = vrot.lane.b32.xlu0 %v5000, 8
        %v5071 = vpop.permute.xlu0 %5070
        %5072 = vrot.lane.b32.xlu0 %v5003, 8
        %v5073 = vpop.permute.xlu0 %5072
        %5074 = vrot.lane.b32.xlu0 %v5005, 8
        %v5075 = vpop.permute.xlu0 %5074
        %5076 = vrot.lane.b32.xlu0 %v5008, 8
        %v5077 = vpop.permute.xlu0 %5076
        %5078 = vrot.lane.b32.xlu0 %v5010, 8
        %v5079 = vpop.permute.xlu0 %5078
        %5080 = vrot.lane.b32.xlu0 %v5013, 8
        %v5081 = vpop.permute.xlu0 %5080
        %5082 = vrot.lane.b32.xlu0 %v5015, 8
        %v5083 = vpop.permute.xlu0 %5082
        %5084 = vrot.lane.b32.xlu0 %v5018, 8
        %v5085 = vpop.permute.xlu0 %5084
        %5086 = vrot.lane.b32.xlu0 %v5020, 8
        %v5087 = vpop.permute.xlu0 %5086
        %5088 = vrot.lane.b32.xlu0 %v5023, 8
        %v5089 = vpop.permute.xlu0 %5088
        %5090 = vrot.lane.b32.xlu0 %v5025, 8
        %v5091 = vpop.permute.xlu0 %5090
        %5092 = vrot.lane.b32.xlu0 %v5028, 8
        %v5093 = vpop.permute.xlu0 %5092
        %5094 = vrot.lane.b32.xlu0 %v5030, 8
        %v5095 = vpop.permute.xlu0 %5094
        %5096 = vrot.lane.b32.xlu0 %v5033, 8
        %v5097 = vpop.permute.xlu0 %5096
        %5098 = vrot.lane.b32.xlu0 %v5035, 8
        %v5099 = vpop.permute.xlu0 %5098
        %5100 = vrot.lane.b32.xlu0 %v5038, 8
        %v5101 = vpop.permute.xlu0 %5100
        %5102 = vrot.lane.b32.xlu0 %v5040, 8
        %v5103 = vpop.permute.xlu0 %5102
        %5104 = vrot.lane.b32.xlu0 %v5043, 8
        %v5105 = vpop.permute.xlu0 %5104
        %5106 = vrot.lane.b32.xlu0 %v5045, 8
        %v5107 = vpop.permute.xlu0 %5106
        %5108 = vrot.lane.b32.xlu0 %v5048, 8
        %v5109 = vpop.permute.xlu0 %5108
        %5110 = vrot.lane.b32.xlu0 %v5050, 8
        %v5111 = vpop.permute.xlu0 %5110
        %5112 = vrot.lane.b32.xlu0 %v5053, 8
        %v5113 = vpop.permute.xlu0 %5112
        %5114 = vrot.lane.b32.xlu0 %v5055, 8
        %v5115 = vpop.permute.xlu0 %5114
        %5147 = vrot.lane.b32.xlu0 %v4920, 16
        %v5148 = vpop.permute.xlu0 %5147
        %5149 = vrot.lane.b32.xlu0 %v4829, 16
        %v5150 = vpop.permute.xlu0 %5149
        %5151 = vrot.lane.b32.xlu0 %v4921, 16
        %v5152 = vpop.permute.xlu0 %5151
        %5153 = vrot.lane.b32.xlu0 %v4832, 16
        %v5154 = vpop.permute.xlu0 %5153
        %5155 = vrot.lane.b32.xlu0 %v4922, 16
        %v5156 = vpop.permute.xlu0 %5155
        %5157 = vrot.lane.b32.xlu0 %v4835, 16
        %v5158 = vpop.permute.xlu0 %5157
        %5159 = vrot.lane.b32.xlu0 %v4923, 16
        %v5160 = vpop.permute.xlu0 %5159
        %5161 = vrot.lane.b32.xlu0 %v4838, 16
        %v5162 = vpop.permute.xlu0 %5161
        %5163 = vrot.lane.b32.xlu0 %v4924, 16
        %v5164 = vpop.permute.xlu0 %5163
        %5165 = vrot.lane.b32.xlu0 %v4841, 16
        %v5166 = vpop.permute.xlu0 %5165
        %5167 = vrot.lane.b32.xlu0 %v4925, 16
        %v5168 = vpop.permute.xlu0 %5167
        %5169 = vrot.lane.b32.xlu0 %v4844, 16
        %v5170 = vpop.permute.xlu0 %5169
        %5171 = vrot.lane.b32.xlu0 %v4926, 16
        %v5172 = vpop.permute.xlu0 %5171
        %5173 = vrot.lane.b32.xlu0 %v4847, 16
        %v5174 = vpop.permute.xlu0 %5173
        %5175 = vrot.lane.b32.xlu0 %v4927, 16
        %v5176 = vpop.permute.xlu0 %5175
        %5177 = vrot.lane.b32.xlu0 %v4850, 16
        %v5178 = vpop.permute.xlu0 %5177
        %5179 = vrot.lane.b32.xlu0 %v4928, 16
        %v5180 = vpop.permute.xlu0 %5179
        %5181 = vrot.lane.b32.xlu0 %v4853, 16
        %v5182 = vpop.permute.xlu0 %5181
        %5183 = vrot.lane.b32.xlu0 %v4929, 16
        %v5184 = vpop.permute.xlu0 %5183
        %5185 = vrot.lane.b32.xlu0 %v4856, 16
        %v5186 = vpop.permute.xlu0 %5185
        %5187 = vrot.lane.b32.xlu0 %v4930, 16
        %v5188 = vpop.permute.xlu0 %5187
        %5189 = vrot.lane.b32.xlu0 %v4859, 16
        %v5190 = vpop.permute.xlu0 %5189
        %5191 = vrot.lane.b32.xlu0 %v4931, 16
        %v5192 = vpop.permute.xlu0 %5191
        %5193 = vrot.lane.b32.xlu0 %v4862, 16
        %v5194 = vpop.permute.xlu0 %5193
        %5195 = vrot.lane.b32.xlu0 %v4932, 16
        %v5196 = vpop.permute.xlu0 %5195
        %5197 = vrot.lane.b32.xlu0 %v4865, 16
        %v5198 = vpop.permute.xlu0 %5197
        %5199 = vrot.lane.b32.xlu0 %v4933, 16
        %v5200 = vpop.permute.xlu0 %5199
        %5201 = vrot.lane.b32.xlu0 %v4868, 16
        %v5202 = vpop.permute.xlu0 %5201
        %5203 = vrot.lane.b32.xlu0 %v4934, 16
        %v5204 = vpop.permute.xlu0 %5203
        %5205 = vrot.lane.b32.xlu0 %v4871, 16
        %v5206 = vpop.permute.xlu0 %5205
        %5207 = vrot.lane.b32.xlu0 %v1199, 16
        %v5208 = vpop.permute.xlu0 %5207
        %5209 = vrot.lane.b32.xlu0 %v1101, 16
        %v5210 = vpop.permute.xlu0 %5209
        %v5244 = vrot.slane %v4934, 2
        %v5245 = vrot.slane %v4871, 2
        %v5246 = vsel %vm1442, %v5244, %v5245
        %v5247 = vrot.slane %v4950, 2
        %v5248 = vsel %vm1442, %v5245, %v5247
        %5249 = vrot.lane.b32.xlu0 %v4988, 24
        %v5250 = vpop.permute.xlu0 %5249
        %5251 = vrot.lane.b32.xlu0 %v4990, 24
        %v5252 = vpop.permute.xlu0 %5251
        %5253 = vrot.lane.b32.xlu0 %v4993, 24
        %v5254 = vpop.permute.xlu0 %5253
        %5255 = vrot.lane.b32.xlu0 %v4995, 24
        %v5256 = vpop.permute.xlu0 %5255
        %5257 = vrot.lane.b32.xlu0 %v4998, 24
        %v5258 = vpop.permute.xlu0 %5257
        %5259 = vrot.lane.b32.xlu0 %v5000, 24
        %v5260 = vpop.permute.xlu0 %5259
        %5261 = vrot.lane.b32.xlu0 %v5003, 24
        %v5262 = vpop.permute.xlu0 %5261
        %5263 = vrot.lane.b32.xlu0 %v5005, 24
        %v5264 = vpop.permute.xlu0 %5263
        %5265 = vrot.lane.b32.xlu0 %v5008, 24
        %v5266 = vpop.permute.xlu0 %5265
        %5267 = vrot.lane.b32.xlu0 %v5010, 24
        %v5268 = vpop.permute.xlu0 %5267
        %5269 = vrot.lane.b32.xlu0 %v5013, 24
        %v5270 = vpop.permute.xlu0 %5269
        %5271 = vrot.lane.b32.xlu0 %v5015, 24
        %v5272 = vpop.permute.xlu0 %5271
        %5273 = vrot.lane.b32.xlu0 %v5018, 24
        %v5274 = vpop.permute.xlu0 %5273
        %5275 = vrot.lane.b32.xlu0 %v5020, 24
        %v5276 = vpop.permute.xlu0 %5275
        %5277 = vrot.lane.b32.xlu0 %v5023, 24
        %v5278 = vpop.permute.xlu0 %5277
        %5279 = vrot.lane.b32.xlu0 %v5025, 24
        %v5280 = vpop.permute.xlu0 %5279
        %5281 = vrot.lane.b32.xlu0 %v5028, 24
        %v5282 = vpop.permute.xlu0 %5281
        %5283 = vrot.lane.b32.xlu0 %v5030, 24
        %v5284 = vpop.permute.xlu0 %5283
        %5285 = vrot.lane.b32.xlu0 %v5033, 24
        %v5286 = vpop.permute.xlu0 %5285
        %5287 = vrot.lane.b32.xlu0 %v5035, 24
        %v5288 = vpop.permute.xlu0 %5287
        %5289 = vrot.lane.b32.xlu0 %v5038, 24
        %v5290 = vpop.permute.xlu0 %5289
        %5291 = vrot.lane.b32.xlu0 %v5040, 24
        %v5292 = vpop.permute.xlu0 %5291
        %5293 = vrot.lane.b32.xlu0 %v5043, 24
        %v5294 = vpop.permute.xlu0 %5293
        %5295 = vrot.lane.b32.xlu0 %v5045, 24
        %v5296 = vpop.permute.xlu0 %5295
        %5297 = vrot.lane.b32.xlu0 %v5048, 24
        %v5298 = vpop.permute.xlu0 %5297
        %5299 = vrot.lane.b32.xlu0 %v5050, 24
        %v5300 = vpop.permute.xlu0 %5299
        %5301 = vrot.lane.b32.xlu0 %v5053, 24
        %v5302 = vpop.permute.xlu0 %5301
        %5303 = vrot.lane.b32.xlu0 %v5055, 24
        %v5304 = vpop.permute.xlu0 %5303
        %5305 = vrot.lane.b32.xlu0 %v5246, 24
        %v5306 = vpop.permute.xlu0 %5305
        %5307 = vrot.lane.b32.xlu0 %v5248, 24
        %v5308 = vpop.permute.xlu0 %5307
        %5309 = vrot.lane.b32.xlu0 %v1445, 24
        %v5310 = vpop.permute.xlu0 %5309
        %5311 = vrot.lane.b32.xlu0 %v1447, 24
        %v5312 = vpop.permute.xlu0 %5311
        %v5345 = vsel %vm2239, %v1199, %v1524
        %v5346 = vsel %vm2239, %v1101, %v1526
        %v5347 = vsel %vm2239, %v4919, %v5057
        %v5348 = vsel %vm2239, %v4826, %v5059
        %v5349 = vsel %vm2239, %v4920, %v5061
        %v5350 = vsel %vm2239, %v4829, %v5063
        %v5351 = vsel %vm2239, %v4921, %v5065
        %v5352 = vsel %vm2239, %v4832, %v5067
        %v5353 = vsel %vm2239, %v4922, %v5069
        %v5354 = vsel %vm2239, %v4835, %v5071
        %v5355 = vsel %vm2239, %v4923, %v5073
        %v5356 = vsel %vm2239, %v4838, %v5075
        %v5357 = vsel %vm2239, %v4924, %v5077
        %v5358 = vsel %vm2239, %v4841, %v5079
        %v5359 = vsel %vm2239, %v4925, %v5081
        %v5360 = vsel %vm2239, %v4844, %v5083
        %v5361 = vsel %vm2239, %v4926, %v5085
        %v5362 = vsel %vm2239, %v4847, %v5087
        %v5363 = vsel %vm2239, %v4927, %v5089
        %v5364 = vsel %vm2239, %v4850, %v5091
        %v5365 = vsel %vm2239, %v4928, %v5093
        %v5366 = vsel %vm2239, %v4853, %v5095
        %v5367 = vsel %vm2239, %v4929, %v5097
        %v5368 = vsel %vm2239, %v4856, %v5099
        %v5369 = vsel %vm2239, %v4930, %v5101
        %v5370 = vsel %vm2239, %v4859, %v5103
        %v5371 = vsel %vm2239, %v4931, %v5105
        %v5372 = vsel %vm2239, %v4862, %v5107
        %v5373 = vsel %vm2239, %v4932, %v5109
        %v5374 = vsel %vm2239, %v4865, %v5111
        %v5375 = vsel %vm2239, %v4933, %v5113
        %v5376 = vsel %vm2239, %v4868, %v5115
        %v5377 = vsel %vm2305, %v5345, %v5148
        %v5378 = vsel %vm2305, %v5346, %v5150
        %v5379 = vsel %vm2305, %v5347, %v5152
        %v5380 = vsel %vm2305, %v5348, %v5154
        %v5381 = vsel %vm2305, %v5349, %v5156
        %v5382 = vsel %vm2305, %v5350, %v5158
        %v5383 = vsel %vm2305, %v5351, %v5160
        %v5384 = vsel %vm2305, %v5352, %v5162
        %v5385 = vsel %vm2305, %v5353, %v5164
        %v5386 = vsel %vm2305, %v5354, %v5166
        %v5387 = vsel %vm2305, %v5355, %v5168
        %v5388 = vsel %vm2305, %v5356, %v5170
        %v5389 = vsel %vm2305, %v5357, %v5172
        %v5390 = vsel %vm2305, %v5358, %v5174
        %v5391 = vsel %vm2305, %v5359, %v5176
        %v5392 = vsel %vm2305, %v5360, %v5178
        %v5393 = vsel %vm2305, %v5361, %v5180
        %v5394 = vsel %vm2305, %v5362, %v5182
        %v5395 = vsel %vm2305, %v5363, %v5184
        %v5396 = vsel %vm2305, %v5364, %v5186
        %v5397 = vsel %vm2305, %v5365, %v5188
        %v5398 = vsel %vm2305, %v5366, %v5190
        %v5399 = vsel %vm2305, %v5367, %v5192
        %v5400 = vsel %vm2305, %v5368, %v5194
        %v5401 = vsel %vm2305, %v5369, %v5196
        %v5402 = vsel %vm2305, %v5370, %v5198
        %v5403 = vsel %vm2305, %v5371, %v5200
        %v5404 = vsel %vm2305, %v5372, %v5202
        %v5405 = vsel %vm2305, %v5373, %v5204
        %v5406 = vsel %vm2305, %v5374, %v5206
        %v5407 = vsel %vm2305, %v5375, %v5208
        %v5408 = vsel %vm2305, %v5376, %v5210
        %v5409 = vsel %vm2371, %v5377, %v5250
        %v5410 = vsel %vm2371, %v5378, %v5252
        %v5411 = vsel %vm2371, %v5379, %v5254
        %v5412 = vsel %vm2371, %v5380, %v5256
        %v5413 = vsel %vm2371, %v5381, %v5258
        %v5414 = vsel %vm2371, %v5382, %v5260
        %v5415 = vsel %vm2371, %v5383, %v5262
        %v5416 = vsel %vm2371, %v5384, %v5264
        %v5417 = vsel %vm2371, %v5385, %v5266
        %v5418 = vsel %vm2371, %v5386, %v5268
        %v5419 = vsel %vm2371, %v5387, %v5270
        %v5420 = vsel %vm2371, %v5388, %v5272
        %v5421 = vsel %vm2371, %v5389, %v5274
        %v5422 = vsel %vm2371, %v5390, %v5276
        %v5423 = vsel %vm2371, %v5391, %v5278
        %v5424 = vsel %vm2371, %v5392, %v5280
        %v5425 = vsel %vm2371, %v5393, %v5282
        %v5426 = vsel %vm2371, %v5394, %v5284
        %v5427 = vsel %vm2371, %v5395, %v5286
        %v5428 = vsel %vm2371, %v5396, %v5288
        %v5429 = vsel %vm2371, %v5397, %v5290
        %v5430 = vsel %vm2371, %v5398, %v5292
        %v5431 = vsel %vm2371, %v5399, %v5294
        %v5432 = vsel %vm2371, %v5400, %v5296
        %v5433 = vsel %vm2371, %v5401, %v5298
        %v5434 = vsel %vm2371, %v5402, %v5300
        %v5435 = vsel %vm2371, %v5403, %v5302
        %v5436 = vsel %vm2371, %v5404, %v5304
        %v5437 = vsel %vm2371, %v5405, %v5306
        %v5438 = vsel %vm2371, %v5406, %v5308
        %v5439 = vsel %vm2371, %v5407, %v5310
        %v5440 = vsel %vm2371, %v5408, %v5312
        %v5441 = vld [vmem:[%s7] sm:$0xff]
        %v5442 = vld [vmem:[%s7 + $0x8] sm:$0xff]
        %v5443 = vld [vmem:[%s7 + $0x10] sm:$0xff]
        %v5444 = vld [vmem:[%s7 + $0x18] sm:$0xff]
        %v5445 = vld [vmem:[%s8] sm:$0x1]
        %v5447 = vlaneseq
        %v5448 = vshrl.u32 %v5447, 7
        %v5449 = vsub.s32 0, %v5448
        %v5450 = vrot.slane %v5445, %v5449
        %v5453 = vsel %vm2437, %v5409, 0
        %v5456 = vsel %vm2437, %v5410, 0
        %v5459 = vsel %vm2437, %v5411, 0
        %v5462 = vsel %vm2437, %v5412, 0
        %v5465 = vsel %vm2437, %v5413, 0
        %v5468 = vsel %vm2437, %v5414, 0
        %v5471 = vsel %vm2437, %v5415, 0
        %v5474 = vsel %vm2437, %v5416, 0
        %v5477 = vsel %vm2437, %v5417, 0
        %v5480 = vsel %vm2437, %v5418, 0
        %v5483 = vsel %vm2437, %v5419, 0
        %v5486 = vsel %vm2437, %v5420, 0
        %v5489 = vsel %vm2437, %v5421, 0
        %v5492 = vsel %vm2437, %v5422, 0
        %v5495 = vsel %vm2437, %v5423, 0
        %v5498 = vsel %vm2437, %v5424, 0
        %v5501 = vsel %vm2437, %v5425, 0
        %v5504 = vsel %vm2437, %v5426, 0
        %v5507 = vsel %vm2437, %v5427, 0
        %v5510 = vsel %vm2437, %v5428, 0
        %v5513 = vsel %vm2437, %v5429, 0
        %v5516 = vsel %vm2437, %v5430, 0
        %v5519 = vsel %vm2437, %v5431, 0
        %v5522 = vsel %vm2437, %v5432, 0
        %v5525 = vsel %vm2437, %v5433, 0
        %v5528 = vsel %vm2437, %v5434, 0
        %v5531 = vsel %vm2437, %v5435, 0
        %v5534 = vsel %vm2437, %v5436, 0
        %v5537 = vsel %vm2437, %v5437, 0
        %v5540 = vsel %vm2437, %v5438, 0
        %v5543 = vsel %vm2437, %v5439, 0
        %v5546 = vsel %vm2437, %v5440, 0
        %5548 = vmatprep.subr.mxu0 0.0
        %5549 = vmatpush1.msra.mxu0 %v5441
        %5550 = vmatprep.subr.mxu0 0.0
        %5551 = vmatpush1.msra.mxu0 %v5442
        %5552 = vmatprep.subr.mxu0 0.0
        %5553 = vmatpush1.msra.mxu0 %v5443
        %5554 = vmatprep.subr.mxu0 0.0
        %5555 = vmatpush1.msra.mxu0 %v5444
        %5556 = vmatprep.subr.mxu0 0.0
        %5557 = vmatpush1.msra.mxu0 0.0
        %5558 = vmatprep.subr.mxu0 0.0
        %5559 = vmatpush1.msra.mxu0 0.0
        %5560 = vmatprep.subr.mxu0 0.0
        %5561 = vmatpush1.msra.mxu0 0.0
        %5562 = vmatprep.subr.mxu0 0.0
        %5563 = vmatpush1.msra.mxu0 0.0
        %5564 = vmatprep.subr.mxu0 0.0
        %5565 = vmatpush1.msra.mxu0 0.0
        %5566 = vmatprep.subr.mxu0 0.0
        %5567 = vmatpush1.msra.mxu0 0.0
        %5568 = vmatprep.subr.mxu0 0.0
        %5569 = vmatpush1.msra.mxu0 0.0
        %5570 = vmatprep.subr.mxu0 0.0
        %5571 = vmatpush1.msra.mxu0 0.0
        %5572 = vmatprep.subr.mxu0 0.0
        %5573 = vmatpush1.msra.mxu0 0.0
        %5574 = vmatprep.subr.mxu0 0.0
        %5575 = vmatpush1.msra.mxu0 0.0
        %5576 = vmatprep.subr.mxu0 0.0
        %5577 = vmatpush1.msra.mxu0 0.0
        %5578 = vmatprep.subr.mxu0 0.0
        %5579 = vmatpush1.msra.mxu0 0.0
        %5580 = vmatprep.subr.mxu0 0.0
        %5581 = vmatpush1.msra.mxu0 0.0
        %5582 = vmatprep.subr.mxu0 0.0
        %5583 = vmatpush1.msra.mxu0 0.0
        %5584 = vmatprep.subr.mxu0 0.0
        %5585 = vmatpush1.msra.mxu0 0.0
        %5586 = vmatprep.subr.mxu0 0.0
        %5587 = vmatpush1.msra.mxu0 0.0
        %5588 = vmatprep.subr.mxu0 0.0
        %5589 = vmatpush1.msra.mxu0 0.0
        %5590 = vmatprep.subr.mxu0 0.0
        %5591 = vmatpush1.msra.mxu0 0.0
        %5592 = vmatprep.subr.mxu0 0.0
        %5593 = vmatpush1.msra.mxu0 0.0
        %5594 = vmatprep.subr.mxu0 0.0
        %5595 = vmatpush1.msra.mxu0 0.0
        %5596 = vmatprep.subr.mxu0 0.0
        %5597 = vmatpush1.msra.mxu0 0.0
        %5598 = vmatprep.subr.mxu0 0.0
        %5599 = vmatpush1.msra.mxu0 0.0
        %5600 = vmatprep.subr.mxu0 0.0
        %5601 = vmatpush1.msra.mxu0 0.0
        %5602 = vmatprep.subr.mxu0 0.0
        %5603 = vmatpush1.msra.mxu0 0.0
        %5604 = vmatprep.subr.mxu0 0.0
        %5605 = vmatpush1.msra.mxu0 0.0
        %5606 = vmatprep.subr.mxu0 0.0
        %5607 = vmatpush1.msra.mxu0 0.0
        %5608 = vmatprep.subr.mxu0 0.0
        %5609 = vmatpush1.msra.mxu0 0.0
        %5610 = vmatprep.subr.mxu0 0.0
        %5611 = vmatpush1.msra.mxu0 0.0
        %5612 = vmatprep.mubr.f32.mxu0 0.0
        %5613 = vmatmul.mubr.f32.gmra.mrb[0].mxu0 %v5453
        %v5614 = vpop.f32.mrb[0].mxu0
        %v5615 = vadd.f32 %v5450, %v5614
        %v5616 = vpop.f32.mrb[0].mxu0
        %5617 = vmatprep.mubr.f32.mxu0 0.0
        %5618 = vmatmul.mubr.f32.gmra.mrb[0].mxu0 %v5456
        %v5619 = vpop.f32.mrb[0].mxu0
        %v5620 = vadd.f32 %v5450, %v5619
        %v5621 = vpop.f32.mrb[0].mxu0
        %5622 = vmatprep.mubr.f32.mxu0 0.0
        %5623 = vmatmul.mubr.f32.gmra.mrb[0].mxu0 %v5459
        %v5624 = vpop.f32.mrb[0].mxu0
        %v5625 = vadd.f32 %v5450, %v5624
        %v5626 = vpop.f32.mrb[0].mxu0
        %5627 = vmatprep.mubr.f32.mxu0 0.0
        %5628 = vmatmul.mubr.f32.gmra.mrb[0].mxu0 %v5462
        %v5629 = vpop.f32.mrb[0].mxu0
        %v5630 = vadd.f32 %v5450, %v5629
        %v5631 = vpop.f32.mrb[0].mxu0
        %5632 = vmatprep.mubr.f32.mxu0 0.0
        %5633 = vmatmul.mubr.f32.gmra.mrb[0].mxu0 %v5465
        %v5634 = vpop.f32.mrb[0].mxu0
        %v5635 = vadd.f32 %v5450, %v5634
        %v5636 = vpop.f32.mrb[0].mxu0
        %5637 = vmatprep.mubr.f32.mxu0 0.0
        %5638 = vmatmul.mubr.f32.gmra.mrb[0].mxu0 %v5468
        %v5639 = vpop.f32.mrb[0].mxu0
        %v5640 = vadd.f32 %v5450, %v5639
        %v5641 = vpop.f32.mrb[0].mxu0
        %5642 = vmatprep.mubr.f32.mxu0 0.0
        %5643 = vmatmul.mubr.f32.gmra.mrb[0].mxu0 %v5471
        %v5644 = vpop.f32.mrb[0].mxu0
        %v5645 = vadd.f32 %v5450, %v5644
        %v5646 = vpop.f32.mrb[0].mxu0
        %5647 = vmatprep.mubr.f32.mxu0 0.0
        %5648 = vmatmul.mubr.f32.gmra.mrb[0].mxu0 %v5474
        %v5649 = vpop.f32.mrb[0].mxu0
        %v5650 = vadd.f32 %v5450, %v5649
        %v5651 = vpop.f32.mrb[0].mxu0
        %5652 = vmatprep.mubr.f32.mxu0 0.0
        %5653 = vmatmul.mubr.f32.gmra.mrb[0].mxu0 %v5477
        %v5654 = vpop.f32.mrb[0].mxu0
        %v5655 = vadd.f32 %v5450, %v5654
        %v5656 = vpop.f32.mrb[0].mxu0
        %5657 = vmatprep.mubr.f32.mxu0 0.0
        %5658 = vmatmul.mubr.f32.gmra.mrb[0].mxu0 %v5480
        %v5659 = vpop.f32.mrb[0].mxu0
        %v5660 = vadd.f32 %v5450, %v5659
        %v5661 = vpop.f32.mrb[0].mxu0
        %5662 = vmatprep.mubr.f32.mxu0 0.0
        %5663 = vmatmul.mubr.f32.gmra.mrb[0].mxu0 %v5483
        %v5664 = vpop.f32.mrb[0].mxu0
        %v5665 = vadd.f32 %v5450, %v5664
        %v5666 = vpop.f32.mrb[0].mxu0
        %5667 = vmatprep.mubr.f32.mxu0 0.0
        %5668 = vmatmul.mubr.f32.gmra.mrb[0].mxu0 %v5486
        %v5669 = vpop.f32.mrb[0].mxu0
        %v5670 = vadd.f32 %v5450, %v5669
        %v5671 = vpop.f32.mrb[0].mxu0
        %5672 = vmatprep.mubr.f32.mxu0 0.0
        %5673 = vmatmul.mubr.f32.gmra.mrb[0].mxu0 %v5489
        %v5674 = vpop.f32.mrb[0].mxu0
        %v5675 = vadd.f32 %v5450, %v5674
        %v5676 = vpop.f32.mrb[0].mxu0
        %5677 = vmatprep.mubr.f32.mxu0 0.0
        %5678 = vmatmul.mubr.f32.gmra.mrb[0].mxu0 %v5492
        %v5679 = vpop.f32.mrb[0].mxu0
        %v5680 = vadd.f32 %v5450, %v5679
        %v5681 = vpop.f32.mrb[0].mxu0
        %5682 = vmatprep.mubr.f32.mxu0 0.0
        %5683 = vmatmul.mubr.f32.gmra.mrb[0].mxu0 %v5495
        %v5684 = vpop.f32.mrb[0].mxu0
        %v5685 = vadd.f32 %v5450, %v5684
        %v5686 = vpop.f32.mrb[0].mxu0
        %5687 = vmatprep.mubr.f32.mxu0 0.0
        %5688 = vmatmul.mubr.f32.gmra.mrb[0].mxu0 %v5498
        %v5689 = vpop.f32.mrb[0].mxu0
        %v5690 = vadd.f32 %v5450, %v5689
        %v5691 = vpop.f32.mrb[0].mxu0
        %5692 = vmatprep.mubr.f32.mxu0 0.0
        %5693 = vmatmul.mubr.f32.gmra.mrb[0].mxu0 %v5501
        %v5694 = vpop.f32.mrb[0].mxu0
        %v5695 = vadd.f32 %v5450, %v5694
        %v5696 = vpop.f32.mrb[0].mxu0
        %5697 = vmatprep.mubr.f32.mxu0 0.0
        %5698 = vmatmul.mubr.f32.gmra.mrb[0].mxu0 %v5504
        %v5699 = vpop.f32.mrb[0].mxu0
        %v5700 = vadd.f32 %v5450, %v5699
        %v5701 = vpop.f32.mrb[0].mxu0
        %5702 = vmatprep.mubr.f32.mxu0 0.0
        %5703 = vmatmul.mubr.f32.gmra.mrb[0].mxu0 %v5507
        %v5704 = vpop.f32.mrb[0].mxu0
        %v5705 = vadd.f32 %v5450, %v5704
        %v5706 = vpop.f32.mrb[0].mxu0
        %5707 = vmatprep.mubr.f32.mxu0 0.0
        %5708 = vmatmul.mubr.f32.gmra.mrb[0].mxu0 %v5510
        %v5709 = vpop.f32.mrb[0].mxu0
        %v5710 = vadd.f32 %v5450, %v5709
        %v5711 = vpop.f32.mrb[0].mxu0
        %5712 = vmatprep.mubr.f32.mxu0 0.0
        %5713 = vmatmul.mubr.f32.gmra.mrb[0].mxu0 %v5513
        %v5714 = vpop.f32.mrb[0].mxu0
        %v5715 = vadd.f32 %v5450, %v5714
        %v5716 = vpop.f32.mrb[0].mxu0
        %5717 = vmatprep.mubr.f32.mxu0 0.0
        %5718 = vmatmul.mubr.f32.gmra.mrb[0].mxu0 %v5516
        %v5719 = vpop.f32.mrb[0].mxu0
        %v5720 = vadd.f32 %v5450, %v5719
        %v5721 = vpop.f32.mrb[0].mxu0
        %5722 = vmatprep.mubr.f32.mxu0 0.0
        %5723 = vmatmul.mubr.f32.gmra.mrb[0].mxu0 %v5519
        %v5724 = vpop.f32.mrb[0].mxu0
        %v5725 = vadd.f32 %v5450, %v5724
        %v5726 = vpop.f32.mrb[0].mxu0
        %5727 = vmatprep.mubr.f32.mxu0 0.0
        %5728 = vmatmul.mubr.f32.gmra.mrb[0].mxu0 %v5522
        %v5729 = vpop.f32.mrb[0].mxu0
        %v5730 = vadd.f32 %v5450, %v5729
        %v5731 = vpop.f32.mrb[0].mxu0
        %5732 = vmatprep.mubr.f32.mxu0 0.0
        %5733 = vmatmul.mubr.f32.gmra.mrb[0].mxu0 %v5525
        %v5734 = vpop.f32.mrb[0].mxu0
        %v5735 = vadd.f32 %v5450, %v5734
        %v5736 = vpop.f32.mrb[0].mxu0
        %5737 = vmatprep.mubr.f32.mxu0 0.0
        %5738 = vmatmul.mubr.f32.gmra.mrb[0].mxu0 %v5528
        %v5739 = vpop.f32.mrb[0].mxu0
        %v5740 = vadd.f32 %v5450, %v5739
        %v5741 = vpop.f32.mrb[0].mxu0
        %5742 = vmatprep.mubr.f32.mxu0 0.0
        %5743 = vmatmul.mubr.f32.gmra.mrb[0].mxu0 %v5531
        %v5744 = vpop.f32.mrb[0].mxu0
        %v5745 = vadd.f32 %v5450, %v5744
        %v5746 = vpop.f32.mrb[0].mxu0
        %5747 = vmatprep.mubr.f32.mxu0 0.0
        %5748 = vmatmul.mubr.f32.gmra.mrb[0].mxu0 %v5534
        %v5749 = vpop.f32.mrb[0].mxu0
        %v5750 = vadd.f32 %v5450, %v5749
        %v5751 = vpop.f32.mrb[0].mxu0
        %5752 = vmatprep.mubr.f32.mxu0 0.0
        %5753 = vmatmul.mubr.f32.gmra.mrb[0].mxu0 %v5537
        %v5754 = vpop.f32.mrb[0].mxu0
        %v5755 = vadd.f32 %v5450, %v5754
        %v5756 = vpop.f32.mrb[0].mxu0
        %5757 = vmatprep.mubr.f32.mxu0 0.0
        %5758 = vmatmul.mubr.f32.gmra.mrb[0].mxu0 %v5540
        %v5759 = vpop.f32.mrb[0].mxu0
        %v5760 = vadd.f32 %v5450, %v5759
        %v5761 = vpop.f32.mrb[0].mxu0
        %5762 = vmatprep.mubr.f32.mxu0 0.0
        %5763 = vmatmul.mubr.f32.gmra.mrb[0].mxu0 %v5543
        %v5764 = vpop.f32.mrb[0].mxu0
        %v5765 = vadd.f32 %v5450, %v5764
        %v5766 = vpop.f32.mrb[0].mxu0
        %5767 = vmatprep.mubr.f32.mxu0 0.0
        %5768 = vmatmul.mubr.f32.gmra.mrb[0].mxu0 %v5546
        %v5769 = vpop.f32.mrb[0].mxu0
        %v5770 = vadd.f32 %v5450, %v5769
        %v5771 = vpop.f32.mrb[0].mxu0
        %5772 = vdwg.mxu0
        %v5773 = vmul.f32 %v5615, 0.01
        %v5774 = vmul.f32 %v5620, 0.01
        %v5775 = vmul.f32 %v5625, 0.01
        %v5776 = vmul.f32 %v5630, 0.01
        %v5777 = vmul.f32 %v5635, 0.01
        %v5778 = vmul.f32 %v5640, 0.01
        %v5779 = vmul.f32 %v5645, 0.01
        %v5780 = vmul.f32 %v5650, 0.01
        %v5781 = vmul.f32 %v5655, 0.01
        %v5782 = vmul.f32 %v5660, 0.01
        %v5783 = vmul.f32 %v5665, 0.01
        %v5784 = vmul.f32 %v5670, 0.01
        %v5785 = vmul.f32 %v5675, 0.01
        %v5786 = vmul.f32 %v5680, 0.01
        %v5787 = vmul.f32 %v5685, 0.01
        %v5788 = vmul.f32 %v5690, 0.01
        %v5789 = vmul.f32 %v5695, 0.01
        %v5790 = vmul.f32 %v5700, 0.01
        %v5791 = vmul.f32 %v5705, 0.01
        %v5792 = vmul.f32 %v5710, 0.01
        %v5793 = vmul.f32 %v5715, 0.01
        %v5794 = vmul.f32 %v5720, 0.01
        %v5795 = vmul.f32 %v5725, 0.01
        %v5796 = vmul.f32 %v5730, 0.01
        %v5797 = vmul.f32 %v5735, 0.01
        %v5798 = vmul.f32 %v5740, 0.01
        %v5799 = vmul.f32 %v5745, 0.01
        %v5800 = vmul.f32 %v5750, 0.01
        %v5801 = vmul.f32 %v5755, 0.01
        %v5802 = vmul.f32 %v5760, 0.01
        %v5803 = vmul.f32 %v5765, 0.01
        %v5804 = vmul.f32 %v5770, 0.01
        %v5805 = vmax.f32 %v5615, %v5773
        %v5806 = vmax.f32 %v5620, %v5774
        %v5807 = vmax.f32 %v5625, %v5775
        %v5808 = vmax.f32 %v5630, %v5776
        %v5809 = vmax.f32 %v5635, %v5777
        %v5810 = vmax.f32 %v5640, %v5778
        %v5811 = vmax.f32 %v5645, %v5779
        %v5812 = vmax.f32 %v5650, %v5780
        %v5813 = vmax.f32 %v5655, %v5781
        %v5814 = vmax.f32 %v5660, %v5782
        %v5815 = vmax.f32 %v5665, %v5783
        %v5816 = vmax.f32 %v5670, %v5784
        %v5817 = vmax.f32 %v5675, %v5785
        %v5818 = vmax.f32 %v5680, %v5786
        %v5819 = vmax.f32 %v5685, %v5787
        %v5820 = vmax.f32 %v5690, %v5788
        %v5821 = vmax.f32 %v5695, %v5789
        %v5822 = vmax.f32 %v5700, %v5790
        %v5823 = vmax.f32 %v5705, %v5791
        %v5824 = vmax.f32 %v5710, %v5792
        %v5825 = vmax.f32 %v5715, %v5793
        %v5826 = vmax.f32 %v5720, %v5794
        %v5827 = vmax.f32 %v5725, %v5795
        %v5828 = vmax.f32 %v5730, %v5796
        %v5829 = vmax.f32 %v5735, %v5797
        %v5830 = vmax.f32 %v5740, %v5798
        %v5831 = vmax.f32 %v5745, %v5799
        %v5832 = vmax.f32 %v5750, %v5800
        %v5833 = vmax.f32 %v5755, %v5801
        %v5834 = vmax.f32 %v5760, %v5802
        %v5835 = vmax.f32 %v5765, %v5803
        %v5836 = vmax.f32 %v5770, %v5804
        %v5837 = vld [vmem:[%s15] sm:$0x1]
        %v5839 = vlaneseq
        %v5840 = vshrl.u32 %v5839, 7
        %v5841 = vsub.s32 0, %v5840
        %v5842 = vrot.slane %v5837, %v5841
        %v5844 = vmul.f32 %v5805, %v5842
        %v5845 = vmul.f32 %v5806, %v5842
        %v5846 = vmul.f32 %v5807, %v5842
        %v5847 = vmul.f32 %v5808, %v5842
        %v5848 = vmul.f32 %v5809, %v5842
        %v5849 = vmul.f32 %v5810, %v5842
        %v5850 = vmul.f32 %v5811, %v5842
        %v5851 = vmul.f32 %v5812, %v5842
        %v5852 = vmul.f32 %v5813, %v5842
        %v5853 = vmul.f32 %v5814, %v5842
        %v5854 = vmul.f32 %v5815, %v5842
        %v5855 = vmul.f32 %v5816, %v5842
        %v5856 = vmul.f32 %v5817, %v5842
        %v5857 = vmul.f32 %v5818, %v5842
        %v5858 = vmul.f32 %v5819, %v5842
        %v5859 = vmul.f32 %v5820, %v5842
        %v5860 = vmul.f32 %v5821, %v5842
        %v5861 = vmul.f32 %v5822, %v5842
        %v5862 = vmul.f32 %v5823, %v5842
        %v5863 = vmul.f32 %v5824, %v5842
        %v5864 = vmul.f32 %v5825, %v5842
        %v5865 = vmul.f32 %v5826, %v5842
        %v5866 = vmul.f32 %v5827, %v5842
        %v5867 = vmul.f32 %v5828, %v5842
        %v5868 = vmul.f32 %v5829, %v5842
        %v5869 = vmul.f32 %v5830, %v5842
        %v5870 = vmul.f32 %v5831, %v5842
        %v5871 = vmul.f32 %v5832, %v5842
        %v5872 = vmul.f32 %v5833, %v5842
        %v5873 = vmul.f32 %v5834, %v5842
        %v5874 = vmul.f32 %v5835, %v5842
        %v5875 = vmul.f32 %v5836, %v5842
        %v5876 = vld [vmem:[%s16] sm:$0x1]
        %v5878 = vlaneseq
        %v5879 = vshrl.u32 %v5878, 7
        %v5880 = vsub.s32 0, %v5879
        %v5881 = vrot.slane %v5876, %v5880
        %v5883 = vadd.f32 %v5844, %v5881
        %v5884 = vadd.f32 %v5845, %v5881
        %v5885 = vadd.f32 %v5846, %v5881
        %v5886 = vadd.f32 %v5847, %v5881
        %v5887 = vadd.f32 %v5848, %v5881
        %v5888 = vadd.f32 %v5849, %v5881
        %v5889 = vadd.f32 %v5850, %v5881
        %v5890 = vadd.f32 %v5851, %v5881
        %v5891 = vadd.f32 %v5852, %v5881
        %v5892 = vadd.f32 %v5853, %v5881
        %v5893 = vadd.f32 %v5854, %v5881
        %v5894 = vadd.f32 %v5855, %v5881
        %v5895 = vadd.f32 %v5856, %v5881
        %v5896 = vadd.f32 %v5857, %v5881
        %v5897 = vadd.f32 %v5858, %v5881
        %v5898 = vadd.f32 %v5859, %v5881
        %v5899 = vadd.f32 %v5860, %v5881
        %v5900 = vadd.f32 %v5861, %v5881
        %v5901 = vadd.f32 %v5862, %v5881
        %v5902 = vadd.f32 %v5863, %v5881
        %v5903 = vadd.f32 %v5864, %v5881
        %v5904 = vadd.f32 %v5865, %v5881
        %v5905 = vadd.f32 %v5866, %v5881
        %v5906 = vadd.f32 %v5867, %v5881
        %v5907 = vadd.f32 %v5868, %v5881
        %v5908 = vadd.f32 %v5869, %v5881
        %v5909 = vadd.f32 %v5870, %v5881
        %v5910 = vadd.f32 %v5871, %v5881
        %v5911 = vadd.f32 %v5872, %v5881
        %v5912 = vadd.f32 %v5873, %v5881
        %v5913 = vadd.f32 %v5874, %v5881
        %v5914 = vadd.f32 %v5875, %v5881
        %5915 = vrot.lane.b32.xlu0 %v4760, 8
        %v5916 = vpop.permute.xlu0 %5915
        %5917 = vrot.lane.b32.xlu0 %v4761, 8
        %v5918 = vpop.permute.xlu0 %5917
        %5919 = vrot.lane.b32.xlu0 %v4762, 8
        %v5920 = vpop.permute.xlu0 %5919
        %5921 = vrot.lane.b32.xlu0 %v4763, 8
        %v5922 = vpop.permute.xlu0 %5921
        %5923 = vrot.lane.b32.xlu0 %v4764, 8
        %v5924 = vpop.permute.xlu0 %5923
        %5925 = vrot.lane.b32.xlu0 %v4765, 8
        %v5926 = vpop.permute.xlu0 %5925
        %5927 = vrot.lane.b32.xlu0 %v4766, 8
        %v5928 = vpop.permute.xlu0 %5927
        %5929 = vrot.lane.b32.xlu0 %v4767, 8
        %v5930 = vpop.permute.xlu0 %5929
        %5931 = vrot.lane.b32.xlu0 %v4768, 8
        %v5932 = vpop.permute.xlu0 %5931
        %5933 = vrot.lane.b32.xlu0 %v4769, 8
        %v5934 = vpop.permute.xlu0 %5933
        %5935 = vrot.lane.b32.xlu0 %v4770, 8
        %v5936 = vpop.permute.xlu0 %5935
        %5937 = vrot.lane.b32.xlu0 %v4771, 8
        %v5938 = vpop.permute.xlu0 %5937
        %5939 = vrot.lane.b32.xlu0 %v4772, 8
        %v5940 = vpop.permute.xlu0 %5939
        %5941 = vrot.lane.b32.xlu0 %v4773, 8
        %v5942 = vpop.permute.xlu0 %5941
        %5943 = vrot.lane.b32.xlu0 %v4774, 8
        %v5944 = vpop.permute.xlu0 %5943
        %5945 = vrot.lane.b32.xlu0 %v4775, 8
        %v5946 = vpop.permute.xlu0 %5945
        %5947 = vrot.lane.b32.xlu0 %v4776, 8
        %v5948 = vpop.permute.xlu0 %5947
        %5949 = vrot.lane.b32.xlu0 %v4777, 8
        %v5950 = vpop.permute.xlu0 %5949
        %5951 = vrot.lane.b32.xlu0 %v4778, 8
        %v5952 = vpop.permute.xlu0 %5951
        %5953 = vrot.lane.b32.xlu0 %v4779, 8
        %v5954 = vpop.permute.xlu0 %5953
        %5955 = vrot.lane.b32.xlu0 %v4780, 8
        %v5956 = vpop.permute.xlu0 %5955
        %5957 = vrot.lane.b32.xlu0 %v4781, 8
        %v5958 = vpop.permute.xlu0 %5957
        %5959 = vrot.lane.b32.xlu0 %v4782, 8
        %v5960 = vpop.permute.xlu0 %5959
        %5961 = vrot.lane.b32.xlu0 %v4783, 8
        %v5962 = vpop.permute.xlu0 %5961
        %5963 = vrot.lane.b32.xlu0 %v4784, 8
        %v5964 = vpop.permute.xlu0 %5963
        %5965 = vrot.lane.b32.xlu0 %v4785, 8
        %v5966 = vpop.permute.xlu0 %5965
        %5967 = vrot.lane.b32.xlu0 %v4786, 8
        %v5968 = vpop.permute.xlu0 %5967
        %5969 = vrot.lane.b32.xlu0 %v4787, 8
        %v5970 = vpop.permute.xlu0 %5969
        %5971 = vrot.lane.b32.xlu0 %v4788, 8
        %v5972 = vpop.permute.xlu0 %5971
        %5973 = vrot.lane.b32.xlu0 %v4789, 8
        %v5974 = vpop.permute.xlu0 %5973
        %5975 = vrot.lane.b32.xlu0 %v4790, 8
        %v5976 = vpop.permute.xlu0 %5975
        %5977 = vrot.lane.b32.xlu0 %v4791, 8
        %v5978 = vpop.permute.xlu0 %5977
        %6043 = vrot.lane.b32.xlu0 %v5883, 16
        %v6044 = vpop.permute.xlu0 %6043
        %6045 = vrot.lane.b32.xlu0 %v5884, 16
        %v6046 = vpop.permute.xlu0 %6045
        %6047 = vrot.lane.b32.xlu0 %v5885, 16
        %v6048 = vpop.permute.xlu0 %6047
        %6049 = vrot.lane.b32.xlu0 %v5886, 16
        %v6050 = vpop.permute.xlu0 %6049
        %6051 = vrot.lane.b32.xlu0 %v5887, 16
        %v6052 = vpop.permute.xlu0 %6051
        %6053 = vrot.lane.b32.xlu0 %v5888, 16
        %v6054 = vpop.permute.xlu0 %6053
        %6055 = vrot.lane.b32.xlu0 %v5889, 16
        %v6056 = vpop.permute.xlu0 %6055
        %6057 = vrot.lane.b32.xlu0 %v5890, 16
        %v6058 = vpop.permute.xlu0 %6057
        %6059 = vrot.lane.b32.xlu0 %v5891, 16
        %v6060 = vpop.permute.xlu0 %6059
        %6061 = vrot.lane.b32.xlu0 %v5892, 16
        %v6062 = vpop.permute.xlu0 %6061
        %6063 = vrot.lane.b32.xlu0 %v5893, 16
        %v6064 = vpop.permute.xlu0 %6063
        %6065 = vrot.lane.b32.xlu0 %v5894, 16
        %v6066 = vpop.permute.xlu0 %6065
        %6067 = vrot.lane.b32.xlu0 %v5895, 16
        %v6068 = vpop.permute.xlu0 %6067
        %6069 = vrot.lane.b32.xlu0 %v5896, 16
        %v6070 = vpop.permute.xlu0 %6069
        %6071 = vrot.lane.b32.xlu0 %v5897, 16
        %v6072 = vpop.permute.xlu0 %6071
        %6073 = vrot.lane.b32.xlu0 %v5898, 16
        %v6074 = vpop.permute.xlu0 %6073
        %6075 = vrot.lane.b32.xlu0 %v5899, 16
        %v6076 = vpop.permute.xlu0 %6075
        %6077 = vrot.lane.b32.xlu0 %v5900, 16
        %v6078 = vpop.permute.xlu0 %6077
        %6079 = vrot.lane.b32.xlu0 %v5901, 16
        %v6080 = vpop.permute.xlu0 %6079
        %6081 = vrot.lane.b32.xlu0 %v5902, 16
        %v6082 = vpop.permute.xlu0 %6081
        %6083 = vrot.lane.b32.xlu0 %v5903, 16
        %v6084 = vpop.permute.xlu0 %6083
        %6085 = vrot.lane.b32.xlu0 %v5904, 16
        %v6086 = vpop.permute.xlu0 %6085
        %6087 = vrot.lane.b32.xlu0 %v5905, 16
        %v6088 = vpop.permute.xlu0 %6087
        %6089 = vrot.lane.b32.xlu0 %v5906, 16
        %v6090 = vpop.permute.xlu0 %6089
        %6091 = vrot.lane.b32.xlu0 %v5907, 16
        %v6092 = vpop.permute.xlu0 %6091
        %6093 = vrot.lane.b32.xlu0 %v5908, 16
        %v6094 = vpop.permute.xlu0 %6093
        %6095 = vrot.lane.b32.xlu0 %v5909, 16
        %v6096 = vpop.permute.xlu0 %6095
        %6097 = vrot.lane.b32.xlu0 %v5910, 16
        %v6098 = vpop.permute.xlu0 %6097
        %6099 = vrot.lane.b32.xlu0 %v5911, 16
        %v6100 = vpop.permute.xlu0 %6099
        %6101 = vrot.lane.b32.xlu0 %v5912, 16
        %v6102 = vpop.permute.xlu0 %6101
        %6103 = vrot.lane.b32.xlu0 %v5913, 16
        %v6104 = vpop.permute.xlu0 %6103
        %6105 = vrot.lane.b32.xlu0 %v5914, 16
        %v6106 = vpop.permute.xlu0 %6105
        %v6139 = vsel %vm2239, %v2917, %v5916
        %v6140 = vsel %vm2239, %v2918, %v5918
        %v6141 = vsel %vm2239, %v2919, %v5920
        %v6142 = vsel %vm2239, %v2920, %v5922
        %v6143 = vsel %vm2239, %v2921, %v5924
        %v6144 = vsel %vm2239, %v2922, %v5926
        %v6145 = vsel %vm2239, %v2923, %v5928
        %v6146 = vsel %vm2239, %v2924, %v5930
        %v6147 = vsel %vm2239, %v2925, %v5932
        %v6148 = vsel %vm2239, %v2926, %v5934
        %v6149 = vsel %vm2239, %v2927, %v5936
        %v6150 = vsel %vm2239, %v2928, %v5938
        %v6151 = vsel %vm2239, %v2929, %v5940
        %v6152 = vsel %vm2239, %v2930, %v5942
        %v6153 = vsel %vm2239, %v2931, %v5944
        %v6154 = vsel %vm2239, %v2932, %v5946
        %v6155 = vsel %vm2239, %v2933, %v5948
        %v6156 = vsel %vm2239, %v2934, %v5950
        %v6157 = vsel %vm2239, %v2935, %v5952
        %v6158 = vsel %vm2239, %v2936, %v5954
        %v6159 = vsel %vm2239, %v2937, %v5956
        %v6160 = vsel %vm2239, %v2938, %v5958
        %v6161 = vsel %vm2239, %v2939, %v5960
        %v6162 = vsel %vm2239, %v2940, %v5962
        %v6163 = vsel %vm2239, %v2941, %v5964
        %v6164 = vsel %vm2239, %v2942, %v5966
        %v6165 = vsel %vm2239, %v2943, %v5968
        %v6166 = vsel %vm2239, %v2944, %v5970
        %v6167 = vsel %vm2239, %v2945, %v5972
        %v6168 = vsel %vm2239, %v2946, %v5974
        %v6169 = vsel %vm2239, %v2947, %v5976
        %v6170 = vsel %vm2239, %v2948, %v5978
        %v6171 = vsel %vm2305, %v6139, %v6044
        %v6172 = vsel %vm2305, %v6140, %v6046
        %v6173 = vsel %vm2305, %v6141, %v6048
        %v6174 = vsel %vm2305, %v6142, %v6050
        %v6175 = vsel %vm2305, %v6143, %v6052
        %v6176 = vsel %vm2305, %v6144, %v6054
        %v6177 = vsel %vm2305, %v6145, %v6056
        %v6178 = vsel %vm2305, %v6146, %v6058
        %v6179 = vsel %vm2305, %v6147, %v6060
        %v6180 = vsel %vm2305, %v6148, %v6062
        %v6181 = vsel %vm2305, %v6149, %v6064
        %v6182 = vsel %vm2305, %v6150, %v6066
        %v6183 = vsel %vm2305, %v6151, %v6068
        %v6184 = vsel %vm2305, %v6152, %v6070
        %v6185 = vsel %vm2305, %v6153, %v6072
        %v6186 = vsel %vm2305, %v6154, %v6074
        %v6187 = vsel %vm2305, %v6155, %v6076
        %v6188 = vsel %vm2305, %v6156, %v6078
        %v6189 = vsel %vm2305, %v6157, %v6080
        %v6190 = vsel %vm2305, %v6158, %v6082
        %v6191 = vsel %vm2305, %v6159, %v6084
        %v6192 = vsel %vm2305, %v6160, %v6086
        %v6193 = vsel %vm2305, %v6161, %v6088
        %v6194 = vsel %vm2305, %v6162, %v6090
        %v6195 = vsel %vm2305, %v6163, %v6092
        %v6196 = vsel %vm2305, %v6164, %v6094
        %v6197 = vsel %vm2305, %v6165, %v6096
        %v6198 = vsel %vm2305, %v6166, %v6098
        %v6199 = vsel %vm2305, %v6167, %v6100
        %v6200 = vsel %vm2305, %v6168, %v6102
        %v6201 = vsel %vm2305, %v6169, %v6104
        %v6202 = vsel %vm2305, %v6170, %v6106
        %v6203 = vld [vmem:[%s9] sm:$0xff]
        %v6204 = vld [vmem:[%s9 + $0x8] sm:$0xff]
        %v6205 = vld [vmem:[%s9 + $0x10] sm:$0xff]
        %v6206 = vld [vmem:[%s10] sm:$0x1]
        %v6208 = vlaneseq
        %v6209 = vshrl.u32 %v6208, 7
        %v6210 = vsub.s32 0, %v6209
        %v6211 = vrot.slane %v6206, %v6210
        %v6214 = vsel %vm2371, %v6171, 0
        %v6217 = vsel %vm2371, %v6172, 0
        %v6220 = vsel %vm2371, %v6173, 0
        %v6223 = vsel %vm2371, %v6174, 0
        %v6226 = vsel %vm2371, %v6175, 0
        %v6229 = vsel %vm2371, %v6176, 0
        %v6232 = vsel %vm2371, %v6177, 0
        %v6235 = vsel %vm2371, %v6178, 0
        %v6238 = vsel %vm2371, %v6179, 0
        %v6241 = vsel %vm2371, %v6180, 0
        %v6244 = vsel %vm2371, %v6181, 0
        %v6247 = vsel %vm2371, %v6182, 0
        %v6250 = vsel %vm2371, %v6183, 0
        %v6253 = vsel %vm2371, %v6184, 0
        %v6256 = vsel %vm2371, %v6185, 0
        %v6259 = vsel %vm2371, %v6186, 0
        %v6262 = vsel %vm2371, %v6187, 0
        %v6265 = vsel %vm2371, %v6188, 0
        %v6268 = vsel %vm2371, %v6189, 0
        %v6271 = vsel %vm2371, %v6190, 0
        %v6274 = vsel %vm2371, %v6191, 0
        %v6277 = vsel %vm2371, %v6192, 0
        %v6280 = vsel %vm2371, %v6193, 0
        %v6283 = vsel %vm2371, %v6194, 0
        %v6286 = vsel %vm2371, %v6195, 0
        %v6289 = vsel %vm2371, %v6196, 0
        %v6292 = vsel %vm2371, %v6197, 0
        %v6295 = vsel %vm2371, %v6198, 0
        %v6298 = vsel %vm2371, %v6199, 0
        %v6301 = vsel %vm2371, %v6200, 0
        %v6304 = vsel %vm2371, %v6201, 0
        %v6307 = vsel %vm2371, %v6202, 0
        %6309 = vmatprep.subr.mxu0 0.0
        %6310 = vmatpush1.msra.mxu0 %v6203
        %6311 = vmatprep.subr.mxu0 0.0
        %6312 = vmatpush1.msra.mxu0 %v6204
        %6313 = vmatprep.subr.mxu0 0.0
        %6314 = vmatpush1.msra.mxu0 %v6205
        %6315 = vmatprep.subr.mxu0 0.0
        %6316 = vmatpush1.msra.mxu0 0.0
        %6317 = vmatprep.subr.mxu0 0.0
        %6318 = vmatpush1.msra.mxu0 0.0
        %6319 = vmatprep.subr.mxu0 0.0
        %6320 = vmatpush1.msra.mxu0 0.0
        %6321 = vmatprep.subr.mxu0 0.0
        %6322 = vmatpush1.msra.mxu0 0.0
        %6323 = vmatprep.subr.mxu0 0.0
        %6324 = vmatpush1.msra.mxu0 0.0
        %6325 = vmatprep.subr.mxu0 0.0
        %6326 = vmatpush1.msra.mxu0 0.0
        %6327 = vmatprep.subr.mxu0 0.0
        %6328 = vmatpush1.msra.mxu0 0.0
        %6329 = vmatprep.subr.mxu0 0.0
        %6330 = vmatpush1.msra.mxu0 0.0
        %6331 = vmatprep.subr.mxu0 0.0
        %6332 = vmatpush1.msra.mxu0 0.0
        %6333 = vmatprep.subr.mxu0 0.0
        %6334 = vmatpush1.msra.mxu0 0.0
        %6335 = vmatprep.subr.mxu0 0.0
        %6336 = vmatpush1.msra.mxu0 0.0
        %6337 = vmatprep.subr.mxu0 0.0
        %6338 = vmatpush1.msra.mxu0 0.0
        %6339 = vmatprep.subr.mxu0 0.0
        %6340 = vmatpush1.msra.mxu0 0.0
        %6341 = vmatprep.subr.mxu0 0.0
        %6342 = vmatpush1.msra.mxu0 0.0
        %6343 = vmatprep.subr.mxu0 0.0
        %6344 = vmatpush1.msra.mxu0 0.0
        %6345 = vmatprep.subr.mxu0 0.0
        %6346 = vmatpush1.msra.mxu0 0.0
        %6347 = vmatprep.subr.mxu0 0.0
        %6348 = vmatpush1.msra.mxu0 0.0
        %6349 = vmatprep.subr.mxu0 0.0
        %6350 = vmatpush1.msra.mxu0 0.0
        %6351 = vmatprep.subr.mxu0 0.0
        %6352 = vmatpush1.msra.mxu0 0.0
        %6353 = vmatprep.subr.mxu0 0.0
        %6354 = vmatpush1.msra.mxu0 0.0
        %6355 = vmatprep.subr.mxu0 0.0
        %6356 = vmatpush1.msra.mxu0 0.0
        %6357 = vmatprep.subr.mxu0 0.0
        %6358 = vmatpush1.msra.mxu0 0.0
        %6359 = vmatprep.subr.mxu0 0.0
        %6360 = vmatpush1.msra.mxu0 0.0
        %6361 = vmatprep.subr.mxu0 0.0
        %6362 = vmatpush1.msra.mxu0 0.0
        %6363 = vmatprep.subr.mxu0 0.0
        %6364 = vmatpush1.msra.mxu0 0.0
        %6365 = vmatprep.subr.mxu0 0.0
        %6366 = vmatpush1.msra.mxu0 0.0
        %6367 = vmatprep.subr.mxu0 0.0
        %6368 = vmatpush1.msra.mxu0 0.0
        %6369 = vmatprep.subr.mxu0 0.0
        %6370 = vmatpush1.msra.mxu0 0.0
        %6371 = vmatprep.subr.mxu0 0.0
        %6372 = vmatpush1.msra.mxu0 0.0
        %6373 = vmatprep.mubr.f32.mxu0 0.0
        %6374 = vmatmul.mubr.f32.gmra.mrb[0].mxu0 %v6214
        %v6375 = vpop.f32.mrb[0].mxu0
        %v6376 = vadd.f32 %v6211, %v6375
        %v6377 = vpop.f32.mrb[0].mxu0
        %6378 = vmatprep.mubr.f32.mxu0 0.0
        %6379 = vmatmul.mubr.f32.gmra.mrb[0].mxu0 %v6217
        %v6380 = vpop.f32.mrb[0].mxu0
        %v6381 = vadd.f32 %v6211, %v6380
        %v6382 = vpop.f32.mrb[0].mxu0
        %6383 = vmatprep.mubr.f32.mxu0 0.0
        %6384 = vmatmul.mubr.f32.gmra.mrb[0].mxu0 %v6220
        %v6385 = vpop.f32.mrb[0].mxu0
        %v6386 = vadd.f32 %v6211, %v6385
        %v6387 = vpop.f32.mrb[0].mxu0
        %6388 = vmatprep.mubr.f32.mxu0 0.0
        %6389 = vmatmul.mubr.f32.gmra.mrb[0].mxu0 %v6223
        %v6390 = vpop.f32.mrb[0].mxu0
        %v6391 = vadd.f32 %v6211, %v6390
        %v6392 = vpop.f32.mrb[0].mxu0
        %6393 = vmatprep.mubr.f32.mxu0 0.0
        %6394 = vmatmul.mubr.f32.gmra.mrb[0].mxu0 %v6226
        %v6395 = vpop.f32.mrb[0].mxu0
        %v6396 = vadd.f32 %v6211, %v6395
        %v6397 = vpop.f32.mrb[0].mxu0
        %6398 = vmatprep.mubr.f32.mxu0 0.0
        %6399 = vmatmul.mubr.f32.gmra.mrb[0].mxu0 %v6229
        %v6400 = vpop.f32.mrb[0].mxu0
        %v6401 = vadd.f32 %v6211, %v6400
        %v6402 = vpop.f32.mrb[0].mxu0
        %6403 = vmatprep.mubr.f32.mxu0 0.0
        %6404 = vmatmul.mubr.f32.gmra.mrb[0].mxu0 %v6232
        %v6405 = vpop.f32.mrb[0].mxu0
        %v6406 = vadd.f32 %v6211, %v6405
        %v6407 = vpop.f32.mrb[0].mxu0
        %6408 = vmatprep.mubr.f32.mxu0 0.0
        %6409 = vmatmul.mubr.f32.gmra.mrb[0].mxu0 %v6235
        %v6410 = vpop.f32.mrb[0].mxu0
        %v6411 = vadd.f32 %v6211, %v6410
        %v6412 = vpop.f32.mrb[0].mxu0
        %6413 = vmatprep.mubr.f32.mxu0 0.0
        %6414 = vmatmul.mubr.f32.gmra.mrb[0].mxu0 %v6238
        %v6415 = vpop.f32.mrb[0].mxu0
        %v6416 = vadd.f32 %v6211, %v6415
        %v6417 = vpop.f32.mrb[0].mxu0
        %6418 = vmatprep.mubr.f32.mxu0 0.0
        %6419 = vmatmul.mubr.f32.gmra.mrb[0].mxu0 %v6241
        %v6420 = vpop.f32.mrb[0].mxu0
        %v6421 = vadd.f32 %v6211, %v6420
        %v6422 = vpop.f32.mrb[0].mxu0
        %6423 = vmatprep.mubr.f32.mxu0 0.0
        %6424 = vmatmul.mubr.f32.gmra.mrb[0].mxu0 %v6244
        %v6425 = vpop.f32.mrb[0].mxu0
        %v6426 = vadd.f32 %v6211, %v6425
        %v6427 = vpop.f32.mrb[0].mxu0
        %6428 = vmatprep.mubr.f32.mxu0 0.0
        %6429 = vmatmul.mubr.f32.gmra.mrb[0].mxu0 %v6247
        %v6430 = vpop.f32.mrb[0].mxu0
        %v6431 = vadd.f32 %v6211, %v6430
        %v6432 = vpop.f32.mrb[0].mxu0
        %6433 = vmatprep.mubr.f32.mxu0 0.0
        %6434 = vmatmul.mubr.f32.gmra.mrb[0].mxu0 %v6250
        %v6435 = vpop.f32.mrb[0].mxu0
        %v6436 = vadd.f32 %v6211, %v6435
        %v6437 = vpop.f32.mrb[0].mxu0
        %6438 = vmatprep.mubr.f32.mxu0 0.0
        %6439 = vmatmul.mubr.f32.gmra.mrb[0].mxu0 %v6253
        %v6440 = vpop.f32.mrb[0].mxu0
        %v6441 = vadd.f32 %v6211, %v6440
        %v6442 = vpop.f32.mrb[0].mxu0
        %6443 = vmatprep.mubr.f32.mxu0 0.0
        %6444 = vmatmul.mubr.f32.gmra.mrb[0].mxu0 %v6256
        %v6445 = vpop.f32.mrb[0].mxu0
        %v6446 = vadd.f32 %v6211, %v6445
        %v6447 = vpop.f32.mrb[0].mxu0
        %6448 = vmatprep.mubr.f32.mxu0 0.0
        %6449 = vmatmul.mubr.f32.gmra.mrb[0].mxu0 %v6259
        %v6450 = vpop.f32.mrb[0].mxu0
        %v6451 = vadd.f32 %v6211, %v6450
        %v6452 = vpop.f32.mrb[0].mxu0
        %6453 = vmatprep.mubr.f32.mxu0 0.0
        %6454 = vmatmul.mubr.f32.gmra.mrb[0].mxu0 %v6262
        %v6455 = vpop.f32.mrb[0].mxu0
        %v6456 = vadd.f32 %v6211, %v6455
        %v6457 = vpop.f32.mrb[0].mxu0
        %6458 = vmatprep.mubr.f32.mxu0 0.0
        %6459 = vmatmul.mubr.f32.gmra.mrb[0].mxu0 %v6265
        %v6460 = vpop.f32.mrb[0].mxu0
        %v6461 = vadd.f32 %v6211, %v6460
        %v6462 = vpop.f32.mrb[0].mxu0
        %6463 = vmatprep.mubr.f32.mxu0 0.0
        %6464 = vmatmul.mubr.f32.gmra.mrb[0].mxu0 %v6268
        %v6465 = vpop.f32.mrb[0].mxu0
        %v6466 = vadd.f32 %v6211, %v6465
        %v6467 = vpop.f32.mrb[0].mxu0
        %6468 = vmatprep.mubr.f32.mxu0 0.0
        %6469 = vmatmul.mubr.f32.gmra.mrb[0].mxu0 %v6271
        %v6470 = vpop.f32.mrb[0].mxu0
        %v6471 = vadd.f32 %v6211, %v6470
        %v6472 = vpop.f32.mrb[0].mxu0
        %6473 = vmatprep.mubr.f32.mxu0 0.0
        %6474 = vmatmul.mubr.f32.gmra.mrb[0].mxu0 %v6274
        %v6475 = vpop.f32.mrb[0].mxu0
        %v6476 = vadd.f32 %v6211, %v6475
        %v6477 = vpop.f32.mrb[0].mxu0
        %6478 = vmatprep.mubr.f32.mxu0 0.0
        %6479 = vmatmul.mubr.f32.gmra.mrb[0].mxu0 %v6277
        %v6480 = vpop.f32.mrb[0].mxu0
        %v6481 = vadd.f32 %v6211, %v6480
        %v6482 = vpop.f32.mrb[0].mxu0
        %6483 = vmatprep.mubr.f32.mxu0 0.0
        %6484 = vmatmul.mubr.f32.gmra.mrb[0].mxu0 %v6280
        %v6485 = vpop.f32.mrb[0].mxu0
        %v6486 = vadd.f32 %v6211, %v6485
        %v6487 = vpop.f32.mrb[0].mxu0
        %6488 = vmatprep.mubr.f32.mxu0 0.0
        %6489 = vmatmul.mubr.f32.gmra.mrb[0].mxu0 %v6283
        %v6490 = vpop.f32.mrb[0].mxu0
        %v6491 = vadd.f32 %v6211, %v6490
        %v6492 = vpop.f32.mrb[0].mxu0
        %6493 = vmatprep.mubr.f32.mxu0 0.0
        %6494 = vmatmul.mubr.f32.gmra.mrb[0].mxu0 %v6286
        %v6495 = vpop.f32.mrb[0].mxu0
        %v6496 = vadd.f32 %v6211, %v6495
        %v6497 = vpop.f32.mrb[0].mxu0
        %6498 = vmatprep.mubr.f32.mxu0 0.0
        %6499 = vmatmul.mubr.f32.gmra.mrb[0].mxu0 %v6289
        %v6500 = vpop.f32.mrb[0].mxu0
        %v6501 = vadd.f32 %v6211, %v6500
        %v6502 = vpop.f32.mrb[0].mxu0
        %6503 = vmatprep.mubr.f32.mxu0 0.0
        %6504 = vmatmul.mubr.f32.gmra.mrb[0].mxu0 %v6292
        %v6505 = vpop.f32.mrb[0].mxu0
        %v6506 = vadd.f32 %v6211, %v6505
        %v6507 = vpop.f32.mrb[0].mxu0
        %6508 = vmatprep.mubr.f32.mxu0 0.0
        %6509 = vmatmul.mubr.f32.gmra.mrb[0].mxu0 %v6295
        %v6510 = vpop.f32.mrb[0].mxu0
        %v6511 = vadd.f32 %v6211, %v6510
        %v6512 = vpop.f32.mrb[0].mxu0
        %6513 = vmatprep.mubr.f32.mxu0 0.0
        %6514 = vmatmul.mubr.f32.gmra.mrb[0].mxu0 %v6298
        %v6515 = vpop.f32.mrb[0].mxu0
        %v6516 = vadd.f32 %v6211, %v6515
        %v6517 = vpop.f32.mrb[0].mxu0
        %6518 = vmatprep.mubr.f32.mxu0 0.0
        %6519 = vmatmul.mubr.f32.gmra.mrb[0].mxu0 %v6301
        %v6520 = vpop.f32.mrb[0].mxu0
        %v6521 = vadd.f32 %v6211, %v6520
        %v6522 = vpop.f32.mrb[0].mxu0
        %6523 = vmatprep.mubr.f32.mxu0 0.0
        %6524 = vmatmul.mubr.f32.gmra.mrb[0].mxu0 %v6304
        %v6525 = vpop.f32.mrb[0].mxu0
        %v6526 = vadd.f32 %v6211, %v6525
        %v6527 = vpop.f32.mrb[0].mxu0
        %6528 = vmatprep.mubr.f32.mxu0 0.0
        %6529 = vmatmul.mubr.f32.gmra.mrb[0].mxu0 %v6307
        %v6530 = vpop.f32.mrb[0].mxu0
        %v6531 = vadd.f32 %v6211, %v6530
        %v6532 = vpop.f32.mrb[0].mxu0
        %6533 = vdwg.mxu0
        %v6534 = vmul.f32 %v6376, 0.01
        %v6535 = vmul.f32 %v6381, 0.01
        %v6536 = vmul.f32 %v6386, 0.01
        %v6537 = vmul.f32 %v6391, 0.01
        %v6538 = vmul.f32 %v6396, 0.01
        %v6539 = vmul.f32 %v6401, 0.01
        %v6540 = vmul.f32 %v6406, 0.01
        %v6541 = vmul.f32 %v6411, 0.01
        %v6542 = vmul.f32 %v6416, 0.01
        %v6543 = vmul.f32 %v6421, 0.01
        %v6544 = vmul.f32 %v6426, 0.01
        %v6545 = vmul.f32 %v6431, 0.01
        %v6546 = vmul.f32 %v6436, 0.01
        %v6547 = vmul.f32 %v6441, 0.01
        %v6548 = vmul.f32 %v6446, 0.01
        %v6549 = vmul.f32 %v6451, 0.01
        %v6550 = vmul.f32 %v6456, 0.01
        %v6551 = vmul.f32 %v6461, 0.01
        %v6552 = vmul.f32 %v6466, 0.01
        %v6553 = vmul.f32 %v6471, 0.01
        %v6554 = vmul.f32 %v6476, 0.01
        %v6555 = vmul.f32 %v6481, 0.01
        %v6556 = vmul.f32 %v6486, 0.01
        %v6557 = vmul.f32 %v6491, 0.01
        %v6558 = vmul.f32 %v6496, 0.01
        %v6559 = vmul.f32 %v6501, 0.01
        %v6560 = vmul.f32 %v6506, 0.01
        %v6561 = vmul.f32 %v6511, 0.01
        %v6562 = vmul.f32 %v6516, 0.01
        %v6563 = vmul.f32 %v6521, 0.01
        %v6564 = vmul.f32 %v6526, 0.01
        %v6565 = vmul.f32 %v6531, 0.01
        %v6566 = vmax.f32 %v6376, %v6534
        %v6567 = vmax.f32 %v6381, %v6535
        %v6568 = vmax.f32 %v6386, %v6536
        %v6569 = vmax.f32 %v6391, %v6537
        %v6570 = vmax.f32 %v6396, %v6538
        %v6571 = vmax.f32 %v6401, %v6539
        %v6572 = vmax.f32 %v6406, %v6540
        %v6573 = vmax.f32 %v6411, %v6541
        %v6574 = vmax.f32 %v6416, %v6542
        %v6575 = vmax.f32 %v6421, %v6543
        %v6576 = vmax.f32 %v6426, %v6544
        %v6577 = vmax.f32 %v6431, %v6545
        %v6578 = vmax.f32 %v6436, %v6546
        %v6579 = vmax.f32 %v6441, %v6547
        %v6580 = vmax.f32 %v6446, %v6548
        %v6581 = vmax.f32 %v6451, %v6549
        %v6582 = vmax.f32 %v6456, %v6550
        %v6583 = vmax.f32 %v6461, %v6551
        %v6584 = vmax.f32 %v6466, %v6552
        %v6585 = vmax.f32 %v6471, %v6553
        %v6586 = vmax.f32 %v6476, %v6554
        %v6587 = vmax.f32 %v6481, %v6555
        %v6588 = vmax.f32 %v6486, %v6556
        %v6589 = vmax.f32 %v6491, %v6557
        %v6590 = vmax.f32 %v6496, %v6558
        %v6591 = vmax.f32 %v6501, %v6559
        %v6592 = vmax.f32 %v6506, %v6560
        %v6593 = vmax.f32 %v6511, %v6561
        %v6594 = vmax.f32 %v6516, %v6562
        %v6595 = vmax.f32 %v6521, %v6563
        %v6596 = vmax.f32 %v6526, %v6564
        %v6597 = vmax.f32 %v6531, %v6565
        %v6598 = vld [vmem:[%s17] sm:$0x1]
        %v6600 = vlaneseq
        %v6601 = vshrl.u32 %v6600, 7
        %v6602 = vsub.s32 0, %v6601
        %v6603 = vrot.slane %v6598, %v6602
        %v6605 = vmul.f32 %v6566, %v6603
        %v6606 = vmul.f32 %v6567, %v6603
        %v6607 = vmul.f32 %v6568, %v6603
        %v6608 = vmul.f32 %v6569, %v6603
        %v6609 = vmul.f32 %v6570, %v6603
        %v6610 = vmul.f32 %v6571, %v6603
        %v6611 = vmul.f32 %v6572, %v6603
        %v6612 = vmul.f32 %v6573, %v6603
        %v6613 = vmul.f32 %v6574, %v6603
        %v6614 = vmul.f32 %v6575, %v6603
        %v6615 = vmul.f32 %v6576, %v6603
        %v6616 = vmul.f32 %v6577, %v6603
        %v6617 = vmul.f32 %v6578, %v6603
        %v6618 = vmul.f32 %v6579, %v6603
        %v6619 = vmul.f32 %v6580, %v6603
        %v6620 = vmul.f32 %v6581, %v6603
        %v6621 = vmul.f32 %v6582, %v6603
        %v6622 = vmul.f32 %v6583, %v6603
        %v6623 = vmul.f32 %v6584, %v6603
        %v6624 = vmul.f32 %v6585, %v6603
        %v6625 = vmul.f32 %v6586, %v6603
        %v6626 = vmul.f32 %v6587, %v6603
        %v6627 = vmul.f32 %v6588, %v6603
        %v6628 = vmul.f32 %v6589, %v6603
        %v6629 = vmul.f32 %v6590, %v6603
        %v6630 = vmul.f32 %v6591, %v6603
        %v6631 = vmul.f32 %v6592, %v6603
        %v6632 = vmul.f32 %v6593, %v6603
        %v6633 = vmul.f32 %v6594, %v6603
        %v6634 = vmul.f32 %v6595, %v6603
        %v6635 = vmul.f32 %v6596, %v6603
        %v6636 = vmul.f32 %v6597, %v6603
        %v6637 = vld [vmem:[%s18] sm:$0x1]
        %v6639 = vlaneseq
        %v6640 = vshrl.u32 %v6639, 7
        %v6641 = vsub.s32 0, %v6640
        %v6642 = vrot.slane %v6637, %v6641
        %v6644 = vadd.f32 %v6605, %v6642
        %v6645 = vadd.f32 %v6606, %v6642
        %v6646 = vadd.f32 %v6607, %v6642
        %v6647 = vadd.f32 %v6608, %v6642
        %v6648 = vadd.f32 %v6609, %v6642
        %v6649 = vadd.f32 %v6610, %v6642
        %v6650 = vadd.f32 %v6611, %v6642
        %v6651 = vadd.f32 %v6612, %v6642
        %v6652 = vadd.f32 %v6613, %v6642
        %v6653 = vadd.f32 %v6614, %v6642
        %v6654 = vadd.f32 %v6615, %v6642
        %v6655 = vadd.f32 %v6616, %v6642
        %v6656 = vadd.f32 %v6617, %v6642
        %v6657 = vadd.f32 %v6618, %v6642
        %v6658 = vadd.f32 %v6619, %v6642
        %v6659 = vadd.f32 %v6620, %v6642
        %v6660 = vadd.f32 %v6621, %v6642
        %v6661 = vadd.f32 %v6622, %v6642
        %v6662 = vadd.f32 %v6623, %v6642
        %v6663 = vadd.f32 %v6624, %v6642
        %v6664 = vadd.f32 %v6625, %v6642
        %v6665 = vadd.f32 %v6626, %v6642
        %v6666 = vadd.f32 %v6627, %v6642
        %v6667 = vadd.f32 %v6628, %v6642
        %v6668 = vadd.f32 %v6629, %v6642
        %v6669 = vadd.f32 %v6630, %v6642
        %v6670 = vadd.f32 %v6631, %v6642
        %v6671 = vadd.f32 %v6632, %v6642
        %v6672 = vadd.f32 %v6633, %v6642
        %v6673 = vadd.f32 %v6634, %v6642
        %v6674 = vadd.f32 %v6635, %v6642
        %v6675 = vadd.f32 %v6636, %v6642
        %v6676 = vadd.f32 %v6644, %v1066
        %v6677 = vadd.f32 %v6645, %v1067
        %v6678 = vadd.f32 %v6646, %v1068
        %v6679 = vadd.f32 %v6647, %v1069
        %v6680 = vadd.f32 %v6648, %v1070
        %v6681 = vadd.f32 %v6649, %v1071
        %v6682 = vadd.f32 %v6650, %v1072
        %v6683 = vadd.f32 %v6651, %v1073
        %v6684 = vadd.f32 %v6652, %v1074
        %v6685 = vadd.f32 %v6653, %v1075
        %v6686 = vadd.f32 %v6654, %v1076
        %v6687 = vadd.f32 %v6655, %v1077
        %v6688 = vadd.f32 %v6656, %v1078
        %v6689 = vadd.f32 %v6657, %v1079
        %v6690 = vadd.f32 %v6658, %v1080
        %v6691 = vadd.f32 %v6659, %v1081
        %v6692 = vadd.f32 %v6660, %v1082
        %v6693 = vadd.f32 %v6661, %v1083
        %v6694 = vadd.f32 %v6662, %v1084
        %v6695 = vadd.f32 %v6663, %v1085
        %v6696 = vadd.f32 %v6664, %v1086
        %v6697 = vadd.f32 %v6665, %v1087
        %v6698 = vadd.f32 %v6666, %v1088
        %v6699 = vadd.f32 %v6667, %v1089
        %v6700 = vadd.f32 %v6668, %v1090
        %v6701 = vadd.f32 %v6669, %v1091
        %v6702 = vadd.f32 %v6670, %v1092
        %v6703 = vadd.f32 %v6671, %v1093
        %v6704 = vadd.f32 %v6672, %v1094
        %v6705 = vadd.f32 %v6673, %v1095
        %v6706 = vadd.f32 %v6674, %v1096
        %v6707 = vadd.f32 %v6675, %v1097
        %6708 = vst.msk [vmem:[%s667] sm:$0xff] %vm2239, %v6676
        %6709 = vst.msk [vmem:[%s667 + $0x8] sm:$0xff] %vm2239, %v6677
        %6710 = vst.msk [vmem:[%s667 + $0x10] sm:$0xff] %vm2239, %v6678
        %6711 = vst.msk [vmem:[%s667 + $0x18] sm:$0xff] %vm2239, %v6679
        %6712 = vst.msk [vmem:[%s667 + $0x20] sm:$0xff] %vm2239, %v6680
        %6713 = vst.msk [vmem:[%s667 + $0x28] sm:$0xff] %vm2239, %v6681
        %6714 = vst.msk [vmem:[%s667 + $0x30] sm:$0xff] %vm2239, %v6682
        %6715 = vst.msk [vmem:[%s667 + $0x38] sm:$0xff] %vm2239, %v6683
        %6716 = vst.msk [vmem:[%s667 + $0x40] sm:$0xff] %vm2239, %v6684
        %6717 = vst.msk [vmem:[%s667 + $0x48] sm:$0xff] %vm2239, %v6685
        %6718 = vst.msk [vmem:[%s667 + $0x50] sm:$0xff] %vm2239, %v6686
        %6719 = vst.msk [vmem:[%s667 + $0x58] sm:$0xff] %vm2239, %v6687
        %6720 = vst.msk [vmem:[%s667 + $0x60] sm:$0xff] %vm2239, %v6688
        %6721 = vst.msk [vmem:[%s667 + $0x68] sm:$0xff] %vm2239, %v6689
        %6722 = vst.msk [vmem:[%s667 + $0x70] sm:$0xff] %vm2239, %v6690
        %6723 = vst.msk [vmem:[%s667 + $0x78] sm:$0xff] %vm2239, %v6691
        %6724 = vst.msk [vmem:[%s667 + $0x80] sm:$0xff] %vm2239, %v6692
        %6725 = vst.msk [vmem:[%s667 + $0x88] sm:$0xff] %vm2239, %v6693
        %6726 = vst.msk [vmem:[%s667 + $0x90] sm:$0xff] %vm2239, %v6694
        %6727 = vst.msk [vmem:[%s667 + $0x98] sm:$0xff] %vm2239, %v6695
        %6728 = vst.msk [vmem:[%s667 + $0xa0] sm:$0xff] %vm2239, %v6696
        %6729 = vst.msk [vmem:[%s667 + $0xa8] sm:$0xff] %vm2239, %v6697
        %6730 = vst.msk [vmem:[%s667 + $0xb0] sm:$0xff] %vm2239, %v6698
        %6731 = vst.msk [vmem:[%s667 + $0xb8] sm:$0xff] %vm2239, %v6699
        %6732 = vst.msk [vmem:[%s667 + $0xc0] sm:$0xff] %vm2239, %v6700
        %6733 = vst.msk [vmem:[%s667 + $0xc8] sm:$0xff] %vm2239, %v6701
        %6734 = vst.msk [vmem:[%s667 + $0xd0] sm:$0xff] %vm2239, %v6702
        %6735 = vst.msk [vmem:[%s667 + $0xd8] sm:$0xff] %vm2239, %v6703
        %6736 = vst.msk [vmem:[%s667 + $0xe0] sm:$0xff] %vm2239, %v6704
        %6737 = vst.msk [vmem:[%s667 + $0xe8] sm:$0xff] %vm2239, %v6705
        %6738 = vst.msk [vmem:[%s667 + $0xf0] sm:$0xff] %vm2239, %v6706
        %6739 = vst.msk [vmem:[%s667 + $0xf8] sm:$0xff] %vm2239, %v6707
        %v6740 = vld [vmem:[%s19] sm:$0xff]
        %v6741 = vld [vmem:[%s19 + $0x8] sm:$0xff]
        %v6742 = vld [vmem:[%s19 + $0x10] sm:$0xff]
        %v6743 = vld [vmem:[%s19 + $0x18] sm:$0xff]
        %v6744 = vld [vmem:[%s19 + $0x20] sm:$0xff]
        %v6745 = vld [vmem:[%s19 + $0x28] sm:$0xff]
        %v6746 = vld [vmem:[%s19 + $0x30] sm:$0xff]
        %v6747 = vld [vmem:[%s19 + $0x38] sm:$0xff]
        %v6748 = vld [vmem:[%s19 + $0x40] sm:$0xff]
        %v6749 = vld [vmem:[%s19 + $0x48] sm:$0xff]
        %v6750 = vld [vmem:[%s19 + $0x50] sm:$0xff]
        %v6751 = vld [vmem:[%s19 + $0x58] sm:$0xff]
        %v6752 = vld [vmem:[%s19 + $0x60] sm:$0xff]
        %v6753 = vld [vmem:[%s19 + $0x68] sm:$0xff]
        %v6754 = vld [vmem:[%s19 + $0x70] sm:$0xff]
        %v6755 = vld [vmem:[%s19 + $0x78] sm:$0xff]
        %6756 = vmatprep.subr.mxu0 0.0
        %6757 = vmatpush1.msra.mxu0 %v6676
        %6758 = vmatprep.subr.mxu0 0.0
        %6759 = vmatpush1.msra.mxu0 %v6677
        %6760 = vmatprep.subr.mxu0 0.0
        %6761 = vmatpush1.msra.mxu0 %v6678
        %6762 = vmatprep.subr.mxu0 0.0
        %6763 = vmatpush1.msra.mxu0 %v6679
        %6764 = vmatprep.subr.mxu0 0.0
        %6765 = vmatpush1.msra.mxu0 %v6680
        %6766 = vmatprep.subr.mxu0 0.0
        %6767 = vmatpush1.msra.mxu0 %v6681
        %6768 = vmatprep.subr.mxu0 0.0
        %6769 = vmatpush1.msra.mxu0 %v6682
        %6770 = vmatprep.subr.mxu0 0.0
        %6771 = vmatpush1.msra.mxu0 %v6683
        %6772 = vmatprep.subr.mxu0 0.0
        %6773 = vmatpush1.msra.mxu0 %v6684
        %6774 = vmatprep.subr.mxu0 0.0
        %6775 = vmatpush1.msra.mxu0 %v6685
        %6776 = vmatprep.subr.mxu0 0.0
        %6777 = vmatpush1.msra.mxu0 %v6686
        %6778 = vmatprep.subr.mxu0 0.0
        %6779 = vmatpush1.msra.mxu0 %v6687
        %6780 = vmatprep.subr.mxu0 0.0
        %6781 = vmatpush1.msra.mxu0 %v6688
        %6782 = vmatprep.subr.mxu0 0.0
        %6783 = vmatpush1.msra.mxu0 %v6689
        %6784 = vmatprep.subr.mxu0 0.0
        %6785 = vmatpush1.msra.mxu0 %v6690
        %6786 = vmatprep.subr.mxu0 0.0
        %6787 = vmatpush1.msra.mxu0 %v6691
        %6788 = vmatprep.subr.mxu0 0.0
        %6789 = vmatpush1.msra.mxu0 %v6692
        %6790 = vmatprep.subr.mxu0 0.0
        %6791 = vmatpush1.msra.mxu0 %v6693
        %6792 = vmatprep.subr.mxu0 0.0
        %6793 = vmatpush1.msra.mxu0 %v6694
        %6794 = vmatprep.subr.mxu0 0.0
        %6795 = vmatpush1.msra.mxu0 %v6695
        %6796 = vmatprep.subr.mxu0 0.0
        %6797 = vmatpush1.msra.mxu0 %v6696
        %6798 = vmatprep.subr.mxu0 0.0
        %6799 = vmatpush1.msra.mxu0 %v6697
        %6800 = vmatprep.subr.mxu0 0.0
        %6801 = vmatpush1.msra.mxu0 %v6698
        %6802 = vmatprep.subr.mxu0 0.0
        %6803 = vmatpush1.msra.mxu0 %v6699
        %6804 = vmatprep.subr.mxu0 0.0
        %6805 = vmatpush1.msra.mxu0 %v6700
        %6806 = vmatprep.subr.mxu0 0.0
        %6807 = vmatpush1.msra.mxu0 %v6701
        %6808 = vmatprep.subr.mxu0 0.0
        %6809 = vmatpush1.msra.mxu0 %v6702
        %6810 = vmatprep.subr.mxu0 0.0
        %6811 = vmatpush1.msra.mxu0 %v6703
        %6812 = vmatprep.subr.mxu0 0.0
        %6813 = vmatpush1.msra.mxu0 %v6704
        %6814 = vmatprep.subr.mxu0 0.0
        %6815 = vmatpush1.msra.mxu0 %v6705
        %6816 = vmatprep.subr.mxu0 0.0
        %6817 = vmatpush1.msra.mxu0 %v6706
        %6818 = vmatprep.subr.mxu0 0.0
        %6819 = vmatpush1.msra.mxu0 %v6707
        %6820 = vmatprep.mubr.f32.mxu0 %v6741
        %6821 = vmatmul.mubr.f32.gmra.mrb[0].mxu0 %v6740
        %v6822 = vpop.f32.mrb[0].mxu0
        %v6823 = vadd.f32 0.0, %v6822
        %v6824 = vpop.f32.mrb[0].mxu0
        %6825 = vmatprep.mubr.f32.mxu0 %v6743
        %6826 = vmatmul.mubr.f32.gmra.mrb[0].mxu0 %v6742
        %v6827 = vpop.f32.mrb[0].mxu0
        %v6828 = vadd.f32 0.0, %v6827
        %v6829 = vpop.f32.mrb[0].mxu0
        %6830 = vmatprep.mubr.f32.mxu0 %v6745
        %6831 = vmatmul.mubr.f32.gmra.mrb[0].mxu0 %v6744
        %v6832 = vpop.f32.mrb[0].mxu0
        %v6833 = vadd.f32 0.0, %v6832
        %v6834 = vpop.f32.mrb[0].mxu0
        %6835 = vmatprep.mubr.f32.mxu0 %v6747
        %6836 = vmatmul.mubr.f32.gmra.mrb[0].mxu0 %v6746
        %v6837 = vpop.f32.mrb[0].mxu0
        %v6838 = vadd.f32 0.0, %v6837
        %v6839 = vpop.f32.mrb[0].mxu0
        %6840 = vmatprep.mubr.f32.mxu0 %v6749
        %6841 = vmatmul.mubr.f32.gmra.mrb[0].mxu0 %v6748
        %v6842 = vpop.f32.mrb[0].mxu0
        %v6843 = vadd.f32 0.0, %v6842
        %v6844 = vpop.f32.mrb[0].mxu0
        %6845 = vmatprep.mubr.f32.mxu0 %v6751
        %6846 = vmatmul.mubr.f32.gmra.mrb[0].mxu0 %v6750
        %v6847 = vpop.f32.mrb[0].mxu0
        %v6848 = vadd.f32 0.0, %v6847
        %v6849 = vpop.f32.mrb[0].mxu0
        %6850 = vmatprep.mubr.f32.mxu0 %v6753
        %6851 = vmatmul.mubr.f32.gmra.mrb[0].mxu0 %v6752
        %v6852 = vpop.f32.mrb[0].mxu0
        %v6853 = vadd.f32 0.0, %v6852
        %v6854 = vpop.f32.mrb[0].mxu0
        %6855 = vmatprep.mubr.f32.mxu0 %v6755
        %6856 = vmatmul.mubr.f32.gmra.mrb[0].mxu0 %v6754
        %v6857 = vpop.f32.mrb[0].mxu0
        %v6858 = vadd.f32 0.0, %v6857
        %v6859 = vpop.f32.mrb[0].mxu0
        %6860 = vdwg.mxu0
        %6861 = vst.msk [vmem:[%s650] sm:$0xff] %vm2239, %v6823
        %6862 = vst.msk [vmem:[%s650 + $0x8] sm:$0xff] %vm2239, %v6828
        %6863 = vst.msk [vmem:[%s650 + $0x10] sm:$0xff] %vm2239, %v6833
        %6864 = vst.msk [vmem:[%s650 + $0x18] sm:$0xff] %vm2239, %v6838
        %6865 = vst.msk [vmem:[%s650 + $0x20] sm:$0xff] %vm2239, %v6843
        %6866 = vst.msk [vmem:[%s650 + $0x28] sm:$0xff] %vm2239, %v6848
        %6867 = vst.msk [vmem:[%s650 + $0x30] sm:$0xff] %vm2239, %v6853
        %6868 = vst.msk [vmem:[%s650 + $0x38] sm:$0xff] %vm2239, %v6858
        %s6869 = sand.u32 %s469, 1
        %s6870 = scalar_lea.sflag [#allocation3], %s6869
        %s6871 = sand.u32 %s469, 1
        %s6872 = smul.addr %s6871, 64
        %s6873 = scalar_lea.vmem [#allocation2], %s6872
        %p6874 = scmp.lt.s32.totalorder %s36, 1
        %s6875 = scalar_select %p6874, %s36, 1
        %s6876 = smul.addr %s6875, 32
        %s6877 = smul.addr %s6876, 8
        %s6878 = scalar_lea.vmem %s21, %s6877
        // Predicated region
        $region101: #{tpu_custom_call.1} parent=99 // pred_check
          %p6879 = pneg %p479
        $region102: #{tpu_custom_call.1} parent=99 // pred_check_branch
          %6881 = sbr.rel (%p6879) target = $region104
        $region103: #{tpu_custom_call.1} parent=99 // pred_region
          %s6883 = ssub.s32 1024, 1024
          %6884 = vsyncadd %s6870, %s6883
          %s6885 = smul.addr %s36, 8
          %s6886 = smul.addr %s6885, 128
          %s6887 = scalar_lea.hbm %s20, %s6886
          %s6888 = sshll.u32 %s6873, 4
          %s6889 = int_to_ptr.vmem [resolvable:$true] %s6888
          %6894 = dma.vmem_to_hbm [thread:$0]  %s6889, 1024, %s6887, %s6870, 128, 128, 8
        $region104: #{tpu_custom_call.1} parent=99 // pred_fallthru
          _
        // Predicated region
        $region105: #{tpu_custom_call.1} parent=99 // pred_check
          %p6895 = pneg %p505
        $region106: #{tpu_custom_call.1} parent=99 // pred_check_branch
          %6897 = sbr.rel (%p6895) target = $region108
        $region107: #{tpu_custom_call.1} parent=99 // pred_region
          _
        $region108: #{tpu_custom_call.1} parent=99 // pred_fallthru
          _
      $region100: #{tpu_custom_call.1} parent=5 // pred_fallthru
        _
      %p6898 = scmp.le.s32.totalorder 2, %s31
      // Predicated region
      $region109: #{tpu_custom_call.1} parent=5 // pred_check
        %p6899 = pneg %p6898
      $region110: #{tpu_custom_call.1} parent=5 // pred_check_branch
        %6901 = sbr.rel (%p6899) target = $region112
      $region111: #{tpu_custom_call.1} parent=5 // pred_region
        %s6902 = ssub.s32 %s31, 2
        // Predicated region
        $region113: #{tpu_custom_call.1} parent=111 // pred_check
          %p6903 = pneg %p485
        $region114: #{tpu_custom_call.1} parent=111 // pred_check_branch
          %6905 = sbr.rel (%p6903) target = $region116
        $region115: #{tpu_custom_call.1} parent=111 // pred_region
          %s6906 = sand.u32 %s470, 1
          %s6907 = scalar_lea.sflag [#allocation3], %s6906
          %s6908 = sand.u32 %s470, 1
          %s6909 = smul.addr %s6908, 64
          %s6910 = scalar_lea.vmem [#allocation2], %s6909
          %6911 = dma.done %s6907, 1024
        $region116: #{tpu_custom_call.1} parent=111 // pred_fallthru
          _
        // Predicated region
        $region117: #{tpu_custom_call.1} parent=111 // pred_check
          %p6912 = pneg %p511
        $region118: #{tpu_custom_call.1} parent=111 // pred_check_branch
          %6914 = sbr.rel (%p6912) target = $region120
        $region119: #{tpu_custom_call.1} parent=111 // pred_region
          %p6915 = scmp.lt.s32.totalorder %s37, 1
          %s6916 = scalar_select %p6915, %s37, 1
          %s6917 = smul.addr %s6916, 32
          %s6918 = smul.addr %s6917, 8
          %s6919 = scalar_lea.vmem %s21, %s6918
        $region120: #{tpu_custom_call.1} parent=111 // pred_fallthru
          _
      $region112: #{tpu_custom_call.1} parent=5 // pred_fallthru
        _
    $region6: #{tpu_custom_call.1} parent=1 // loop_footer
      %s35 = sadd.s32 1, %s31
    $region7: #{tpu_custom_call.1} parent=1 // loop_footer_branch
      %30 = sbr.rel target = $region3
    $region8: #{tpu_custom_call.1} parent=1 // loop_exit
      _
    %6920 = vsyncpa [#allocation3], 1
    %s6921 = scalar_lea.sflag [#allocation3], 1
    %6922 = vsyncpa %s6921, 1

</llo_original>
